<compile_context>
chip_gen: v7x
topology: tpu7x:2x2x1
jax: 0.10.0
libtpu: 0.0.40
codegen_flags: <defaults>
</compile_context>

<pallas_src>
import functools
import math

import jax
import jax.numpy as jnp
from jax.experimental import pallas as pl
from jax.experimental.pallas import tpu as pltpu

VOCAB = 26
LN_EPS = 1e-5


def _encoder_kernel(
    num_heads, seq_len,
    tok_ref,    # [bt, 1]  int32 token ids (this sequence block)
    emb_ref,    # [VOCAB, E] f32 embedding table (row 0 == 0 : padding_idx)
    wqkv_ref,   # [3, E, E]  bf16 q/k/v projections for this layer, stored [in, out]
    wo_ref,     # [E, E]     bf16 attention output projection, stored [in, out]
    w1_ref,     # [E, FF]    bf16 linear1, stored [in, out]
    b1_ref,     # [1, FF]    f32
    w2_ref,     # [FF, E]    bf16 linear2, stored [in, out]
    vec_ref,    # [9, E]  f32 rows: bq, bk, bv, b_o, b2, ln1_g, ln1_b, ln2_g, ln2_b
    wfc_ref,    # [E, E]  bf16
    bfc_ref,    # [1, E]  f32
    o_ref,      # [bt, E] f32
    h_ref,      # [bt, E] f32 VMEM scratch: activation carried across layer axis
):
    layer = pl.program_id(1)
    bt = tok_ref.shape[0]
    vocab, e_dim = emb_ref.shape
    n_seq = bt // seq_len
    head_dim = e_dim // num_heads
    scale = 1.0 / math.sqrt(head_dim)
    inv_e = 1.0 / e_dim

    def layer_norm(x, gamma, beta):
        # single pass: sum and sum-of-squares, biased variance (matches PyTorch LN)
        s1 = jnp.sum(x, axis=-1, keepdims=True)
        s2 = jnp.sum(x * x, axis=-1, keepdims=True)
        mean = s1 * inv_e
        var = s2 * inv_e - mean * mean
        return (x - mean) * jax.lax.rsqrt(var + LN_EPS) * gamma + beta

    # ---- layer 0: embedding lookup via one-hot @ table (MXU, no dynamic gather) ----
    @pl.when(layer == 0)
    def _():
        tok = tok_ref[...]                                              # [bt, 1]
        vocab_iota = jax.lax.broadcasted_iota(jnp.int32, (bt, vocab), 1)
        onehot = (tok == vocab_iota).astype(jnp.float32)                # [bt, VOCAB]
        h_ref[...] = jnp.dot(onehot, emb_ref[...],
                             preferred_element_type=jnp.float32)        # [bt, E]

    h = h_ref[...]                                                      # f32 [bt, E]
    vec = vec_ref[...]                                                  # f32 [9, E]
    bq, bk, bv = vec[0:1], vec[1:2], vec[2:3]
    b_o, b2 = vec[3:4], vec[4:5]
    ln1_g, ln1_b = vec[5:6], vec[6:7]
    ln2_g, ln2_b = vec[7:8], vec[8:9]

    # ---- multi-head self-attention ----
    hb = h.astype(jnp.bfloat16)
    # fold 1/sqrt(head_dim) into q once (saves per-head VPU passes on the scores)
    q = (jnp.dot(hb, wqkv_ref[0], preferred_element_type=jnp.float32) + bq) * scale
    k = jnp.dot(hb, wqkv_ref[1], preferred_element_type=jnp.float32) + bk
    v = jnp.dot(hb, wqkv_ref[2], preferred_element_type=jnp.float32) + bv

    q3 = q.reshape(n_seq, seq_len, e_dim)
    k3 = k.reshape(n_seq, seq_len, e_dim)
    v3 = v.reshape(n_seq, seq_len, e_dim)

    heads = []
    for hh in range(num_heads):
        lo, hi = hh * head_dim, (hh + 1) * head_dim
        s = jnp.einsum("ntd,nsd->nts", q3[:, :, lo:hi], k3[:, :, lo:hi],
                       preferred_element_type=jnp.float32)              # [n_seq, T, T]
        s = s - jnp.max(s, axis=-1, keepdims=True)
        p = jnp.exp(s)
        p = p * pl.reciprocal(jnp.sum(p, axis=-1, keepdims=True), approx=True)
        heads.append(jnp.einsum("nts,nsd->ntd", p, v3[:, :, lo:hi],
                                preferred_element_type=jnp.float32))    # [n_seq, T, hd]
    # concat heads once, then a SINGLE [bt,E]@[E,E] output projection
    attn = jnp.concatenate(heads, axis=-1).reshape(bt, e_dim)
    attn = jnp.dot(attn.astype(jnp.bfloat16), wo_ref[...],
                   preferred_element_type=jnp.float32) + b_o

    # residual + post-LayerNorm (dropout == identity in eval mode)
    h = layer_norm(h + attn, ln1_g, ln1_b)

    # ---- feed-forward ----
    f = jnp.dot(h.astype(jnp.bfloat16), w1_ref[...],
                preferred_element_type=jnp.float32) + b1_ref[...]
    f = jnp.maximum(f, 0.0)
    f = jnp.dot(f.astype(jnp.bfloat16), w2_ref[...],
                preferred_element_type=jnp.float32) + b2
    h = layer_norm(h + f, ln2_g, ln2_b)

    h_ref[...] = h

    # ---- final fc at the last layer iteration ----
    @pl.when(layer == pl.num_programs(1) - 1)
    def _():
        out = jnp.dot(h.astype(jnp.bfloat16), wfc_ref[...],
                      preferred_element_type=jnp.float32) + bfc_ref[...]
        o_ref[...] = out.astype(o_ref.dtype)


def _vmem_limit_bytes(e_dim, ffn_dim, bt, vocab):
    """Budget from actual buffer sizes (per-layer weights double-buffered +
    resident tensors + generous intermediate margin), capped at 48 MiB."""
    bf, f4 = 2, 4
    per_layer_w = (3 * e_dim * e_dim + e_dim * e_dim
                   + e_dim * ffn_dim + ffn_dim * e_dim) * bf \
                  + (ffn_dim + 9 * e_dim) * f4
    weights_db = 2 * per_layer_w                              # double-buffered stream
    resident = (vocab * e_dim * f4 + e_dim * e_dim * bf + e_dim * f4
                + bt * 4 + 2 * bt * e_dim * f4)               # emb, fc, tok, h, out
    interm = bt * ffn_dim * f4 * 4 + bt * e_dim * f4 * 16 + bt * bt * f4 * 4
    needed = weights_db + resident + interm
    return int(min(max(2 * needed + (4 << 20), 8 << 20), 48 << 20))


def protein_transformer_forward(tokens, params, *, num_heads):
    """tokens: [B, num_segments, seq_len] int; returns [B, num_segments, seq_len, E]."""
    b, s, t = tokens.shape
    num_layers = params["w_qkv"].shape[0]
    e_dim = params["emb"].shape[1]
    ffn_dim = params["w1"].shape[2]
    n_seq = b * s
    ntok = n_seq * t

    # Split whole sequences across (up to) 2 token blocks -> "parallel" grid axis
    # so megacore chips (v7x) can run the two halves on separate TensorCores.
    num_blocks = 2 if (n_seq % 2 == 0 and n_seq >= 2) else 1
    bt = (n_seq // num_blocks) * t
    if num_blocks > 1 and bt % 8 != 0:      # keep the sublane dim well-formed
        num_blocks, bt = 1, ntok

    tok2d = tokens.reshape(ntok, 1).astype(jnp.int32)
    kernel = functools.partial(_encoder_kernel, num_heads, t)

    in_specs = [
        pl.BlockSpec((bt, 1), lambda sb, l: (sb, 0)),                       # tokens
        pl.BlockSpec((VOCAB, e_dim), lambda sb, l: (0, 0)),                 # emb
        pl.BlockSpec((None, 3, e_dim, e_dim), lambda sb, l: (l, 0, 0, 0)),  # w_qkv
        pl.BlockSpec((None, e_dim, e_dim), lambda sb, l: (l, 0, 0)),        # w_o
        pl.BlockSpec((None, e_dim, ffn_dim), lambda sb, l: (l, 0, 0)),      # w1
        pl.BlockSpec((None, 1, ffn_dim), lambda sb, l: (l, 0, 0)),          # b1
        pl.BlockSpec((None, ffn_dim, e_dim), lambda sb, l: (l, 0, 0)),      # w2
        pl.BlockSpec((None, 9, e_dim), lambda sb, l: (l, 0, 0)),            # vecs
        pl.BlockSpec((e_dim, e_dim), lambda sb, l: (0, 0)),                 # w_fc
        pl.BlockSpec((1, e_dim), lambda sb, l: (0, 0)),                     # b_fc
    ]
    out_specs = pl.BlockSpec((bt, e_dim), lambda sb, l: (sb, 0))

    out = pl.pallas_call(
        kernel,
        out_shape=jax.ShapeDtypeStruct((ntok, e_dim), jnp.float32),
        grid_spec=pltpu.PrefetchScalarGridSpec(
            num_scalar_prefetch=0,
            grid=(num_blocks, num_layers),
            in_specs=in_specs,
            out_specs=out_specs,
            scratch_shapes=[pltpu.VMEM((bt, e_dim), jnp.float32)],
        ),
        compiler_params=pltpu.CompilerParams(
            dimension_semantics=("parallel", "arbitrary"),
            vmem_limit_bytes=_vmem_limit_bytes(e_dim, ffn_dim, bt, VOCAB),
        ),
    )(tok2d, params["emb"], params["w_qkv"], params["w_o"],
      params["w1"], params["b1"], params["w2"], params["vecs"],
      params["w_fc"], params["b_fc"])
    return out.reshape(b, s, t, e_dim)


def init_params(key, embedding_dim, num_heads, num_layers, ffn_dim):
    """Deterministic PyTorch-style init. Linear weights stored pre-transposed
    [fan_in, fan_out]; heavy matrices kept in bf16 (halves DMA bytes / VMEM),
    small vectors (biases, LN params, embedding) kept in f32."""
    e, l_num, ff = embedding_dim, num_layers, ffn_dim
    assert e % num_heads == 0
    keys = jax.random.split(key, 6 * l_num + 3)

    def uniform(k, shape, fan_in):
        bound = 1.0 / math.sqrt(float(fan_in))
        return jax.random.uniform(k, shape, jnp.float32, -bound, bound)

    # nn.Embedding(26, E, padding_idx=0): N(0,1) init, row 0 zeroed.
    emb = jax.random.normal(keys[0], (VOCAB, e), jnp.float32).at[0].set(0.0)

    w_qkv, w_o, w1, b1, w2, vecs = [], [], [], [], [], []
    for i in range(l_num):
        k = keys[1 + 6 * i: 1 + 6 * (i + 1)]
        w_qkv.append(uniform(k[0], (3, e, e), e).astype(jnp.bfloat16))   # in_proj [in,out]
        w_o.append(uniform(k[1], (e, e), e).astype(jnp.bfloat16))        # out_proj.weight.T
        w1.append(uniform(k[2], (e, ff), e).astype(jnp.bfloat16))        # linear1.weight.T
        b1.append(uniform(k[3], (1, ff), e))                             # linear1.bias
        w2.append(uniform(k[4], (ff, e), ff).astype(jnp.bfloat16))       # linear2.weight.T
        # rows: bq, bk, bv, b_o, b2, ln1_g, ln1_b, ln2_g, ln2_b
        v = jnp.zeros((9, e), jnp.float32)
        v = v.at[0:5].set(uniform(k[5], (5, e), e))   # biases (nonzero to exercise paths)
        v = v.at[5].set(1.0).at[7].set(1.0)           # LayerNorm gammas; betas stay 0
        vecs.append(v)

    w_fc = uniform(keys[-2], (e, e), e).astype(jnp.bfloat16)
    b_fc = uniform(keys[-1], (1, e), e)

    return {
        "emb": emb,
        "w_qkv": jnp.stack(w_qkv), "w_o": jnp.stack(w_o),
        "w1": jnp.stack(w1), "b1": jnp.stack(b1), "w2": jnp.stack(w2),
        "vecs": jnp.stack(vecs),
        "w_fc": w_fc, "b_fc": b_fc,
    }


# ----------------------------- pure-JAX reference -----------------------------
def _ln_ref(h, g, b):
    m = jnp.mean(h, axis=-1, keepdims=True)
    var = jnp.mean((h - m) ** 2, axis=-1, keepdims=True)
    return (h - m) / jnp.sqrt(var + LN_EPS) * g + b


def _reference_forward(tokens, params, *, num_heads):
    f32 = lambda a: a.astype(jnp.float32)
    b, s, t = tokens.shape
    e = params["emb"].shape[1]
    l_num = params["w_qkv"].shape[0]
    hd = e // num_heads
    n = b * s

    x = params["emb"][tokens.astype(jnp.int32)].reshape(n, t, e)
    for i in range(l_num):
        wqkv = f32(params["w_qkv"][i])
        vec = params["vecs"][i]
        q = x @ wqkv[0] + vec[0]
        k = x @ wqkv[1] + vec[1]
        v = x @ wqkv[2] + vec[2]

        def split(a):
            return a.reshape(n, t, num_heads, hd).transpose(0, 2, 1, 3)

        qh, kh, vh = split(q), split(k), split(v)
        sc = jnp.einsum("nhtd,nhsd->nhts", qh, kh) / math.sqrt(hd)
        p = jax.nn.softmax(sc, axis=-1)
        a = jnp.einsum("nhts,nhsd->nhtd", p, vh)
        a = a.transpose(0, 2, 1, 3).reshape(n, t, e)
        a = a @ f32(params["w_o"][i]) + vec[3]
        x = _ln_ref(x + a, vec[5], vec[6])

        f = jax.nn.relu(x @ f32(params["w1"][i]) + params["b1"][i])
        f = f @ f32(params["w2"][i]) + vec[4]
        x = _ln_ref(x + f, vec[7], vec[8])

    y = x @ f32(params["w_fc"]) + params["b_fc"]
    return y.reshape(b, s, t, e)


if __name__ == "__main__":
    key = jax.random.PRNGKey(0)
    k_tok, k_par = jax.random.split(key)

    # Small shapes consistent with the module's forward.
    batch, num_segments, seq_len = 2, 2, 8
    embedding_dim, num_heads, num_layers = 32, 4, 2
    ffn_dim = 2048  # PyTorch TransformerEncoderLayer default (ctor arg never forwarded)

    tokens = jax.random.randint(k_tok, (batch, num_segments, seq_len), 0, VOCAB,
                                dtype=jnp.int32)
    params = init_params(k_par, embedding_dim, num_heads, num_layers, ffn_dim)

    out = protein_transformer_forward(tokens, params, num_heads=num_heads)
    out = jax.block_until_ready(out)

    with jax.default_matmul_precision("highest"):
        ref = _reference_forward(tokens, params, num_heads=num_heads)
    ref = jax.block_until_ready(ref)

    assert out.shape == (batch, num_segments, seq_len, embedding_dim)
    max_err = float(jnp.max(jnp.abs(out - ref)))
    # bf16 activation inputs to the MXU (f32 accumulation) + approx reciprocal
    # -> slightly looser tolerance than a pure-f32 kernel.
    assert jnp.allclose(out, ref, atol=1e-2, rtol=1e-2), f"max abs err = {max_err}"
    print("KERNEL_OK")
</pallas_src>

<mosaic_0001>
module attributes {stable_mosaic.version = 11 : i64} {
  func.func @_encoder_kernel(%arg0: i32, %arg1: i32, %arg2: memref<16x1xi32, #tpu.memory_space<vmem>>, %arg3: memref<26x32xf32, #tpu.memory_space<vmem>>, %arg4: memref<1x3x32x32xbf16, #tpu.memory_space<vmem>>, %arg5: memref<1x32x32xbf16, #tpu.memory_space<vmem>>, %arg6: memref<1x32x2048xbf16, #tpu.memory_space<vmem>>, %arg7: memref<1x1x2048xf32, #tpu.memory_space<vmem>>, %arg8: memref<1x2048x32xbf16, #tpu.memory_space<vmem>>, %arg9: memref<1x9x32xf32, #tpu.memory_space<vmem>>, %arg10: memref<32x32xbf16, #tpu.memory_space<vmem>>, %arg11: memref<1x32xf32, #tpu.memory_space<vmem>>, %arg12: memref<16x32xf32, #tpu.memory_space<vmem>>, %arg13: memref<16x32xf32, #tpu.memory_space<vmem>>) attributes {dimension_semantics = [#tpu.dimension_semantics<parallel>, #tpu.dimension_semantics<arbitrary>], iteration_bounds = array<i64: 2, 2>, scalar_prefetch = 0 : i64, scratch_operands = 1 : i64, tpu.core_type = #tpu.core_type<tc>, window_params = [{transform_indices = @transform_0, window_bounds = array<i64: 16, 1>}, {pipeline_mode = #tpu.pipeline_mode<synchronous>, transform_indices = @transform_1, window_bounds = array<i64: 26, 32>}, {transform_indices = @transform_2, window_bounds = array<i64: 1, 3, 32, 32>}, {transform_indices = @transform_3, window_bounds = array<i64: 1, 32, 32>}, {transform_indices = @transform_4, window_bounds = array<i64: 1, 32, 2048>}, {transform_indices = @transform_5, window_bounds = array<i64: 1, 1, 2048>}, {transform_indices = @transform_6, window_bounds = array<i64: 1, 2048, 32>}, {transform_indices = @transform_7, window_bounds = array<i64: 1, 9, 32>}, {pipeline_mode = #tpu.pipeline_mode<synchronous>, transform_indices = @transform_8, window_bounds = array<i64: 32, 32>}, {pipeline_mode = #tpu.pipeline_mode<synchronous>, transform_indices = @transform_9, window_bounds = array<i64: 1, 32>}, {transform_indices = @transform_10, window_bounds = array<i64: 16, 32>}]} {
    %c0_i32 = arith.constant 0 : i32
    %0 = arith.cmpi eq, %arg1, %c0_i32 : i32
    %1 = arith.extui %0 : i1 to i32
    %c0_i32_0 = arith.constant 0 : i32
    %2 = arith.cmpi ne, %1, %c0_i32_0 : i32
    scf.if %2 {
      %c0_63 = arith.constant 0 : index
      %c0_64 = arith.constant 0 : index
      %170 = vector.load %arg2[%c0_63, %c0_64] : memref<16x1xi32, #tpu.memory_space<vmem>>, vector<16x1xi32>
      %171 = tpu.iota {dimensions = array<i32: 1>} : vector<16x26xi32>
      %172 = vector.broadcast %170 : vector<16x1xi32> to vector<16x26xi32>
      %173 = arith.cmpi eq, %172, %171 : vector<16x26xi32>
      %174 = arith.extui %173 : vector<16x26xi1> to vector<16x26xi32>
      %175 = arith.sitofp %174 : vector<16x26xi32> to vector<16x26xf32>
      %c0_65 = arith.constant 0 : index
      %c0_66 = arith.constant 0 : index
      %176 = vector.load %arg3[%c0_65, %c0_66] : memref<26x32xf32, #tpu.memory_space<vmem>>, vector<26x32xf32>
      %cst_67 = arith.constant dense<0.000000e+00> : vector<16x32xf32>
      %177 = tpu.matmul %175, %176, %cst_67 {dimension_numbers = #tpu.dot_dimension_numbers<[1], [0], [0], [1], [0, 0, 1, 1], [], []>} : vector<16x26xf32>, vector<26x32xf32>, vector<16x32xf32> -> vector<16x32xf32>
      %c0_68 = arith.constant 0 : index
      %c0_69 = arith.constant 0 : index
      %178 = vector.load %arg13[%c0_68, %c0_69] : memref<16x32xf32, #tpu.memory_space<vmem>>, vector<16x32xf32>
      tpu.vector_store %arg13[%c0_68, %c0_69], %177 {strides = array<i32>} : memref<16x32xf32, #tpu.memory_space<vmem>>, vector<16x32xf32>,
    } else {
    }
    %c0 = arith.constant 0 : index
    %c0_1 = arith.constant 0 : index
    %3 = vector.load %arg13[%c0, %c0_1] : memref<16x32xf32, #tpu.memory_space<vmem>>, vector<16x32xf32>
    %c0_2 = arith.constant 0 : index
    %c0_3 = arith.constant 0 : index
    %c0_4 = arith.constant 0 : index
    %4 = vector.load %arg9[%c0_2, %c0_3, %c0_4] : memref<1x9x32xf32, #tpu.memory_space<vmem>>, vector<1x9x32xf32>
    %5 = vector.shape_cast %4 : vector<1x9x32xf32> to vector<9x32xf32>
    %6 = vector.extract_strided_slice %5 {offsets = [0, 0], sizes = [1, 32], strides = [1, 1]} : vector<9x32xf32> to vector<1x32xf32>
    %7 = vector.extract_strided_slice %5 {offsets = [1, 0], sizes = [1, 32], strides = [1, 1]} : vector<9x32xf32> to vector<1x32xf32>
    %8 = vector.extract_strided_slice %5 {offsets = [2, 0], sizes = [1, 32], strides = [1, 1]} : vector<9x32xf32> to vector<1x32xf32>
    %9 = vector.extract_strided_slice %5 {offsets = [3, 0], sizes = [1, 32], strides = [1, 1]} : vector<9x32xf32> to vector<1x32xf32>
    %10 = vector.extract_strided_slice %5 {offsets = [4, 0], sizes = [1, 32], strides = [1, 1]} : vector<9x32xf32> to vector<1x32xf32>
    %11 = vector.extract_strided_slice %5 {offsets = [5, 0], sizes = [1, 32], strides = [1, 1]} : vector<9x32xf32> to vector<1x32xf32>
    %12 = vector.extract_strided_slice %5 {offsets = [6, 0], sizes = [1, 32], strides = [1, 1]} : vector<9x32xf32> to vector<1x32xf32>
    %13 = vector.extract_strided_slice %5 {offsets = [7, 0], sizes = [1, 32], strides = [1, 1]} : vector<9x32xf32> to vector<1x32xf32>
    %14 = vector.extract_strided_slice %5 {offsets = [8, 0], sizes = [1, 32], strides = [1, 1]} : vector<9x32xf32> to vector<1x32xf32>
    %15 = arith.truncf %3 : vector<16x32xf32> to vector<16x32xbf16>
    %c0_5 = arith.constant 0 : index
    %c0_6 = arith.constant 0 : index
    %c0_7 = arith.constant 0 : index
    %c0_8 = arith.constant 0 : index
    %16 = vector.load %arg4[%c0_5, %c0_6, %c0_7, %c0_8] : memref<1x3x32x32xbf16, #tpu.memory_space<vmem>>, vector<1x1x32x32xbf16>
    %17 = vector.shape_cast %16 : vector<1x1x32x32xbf16> to vector<32x32xbf16>
    %cst = arith.constant dense<0.000000e+00> : vector<16x32xf32>
    %18 = tpu.matmul %15, %17, %cst {dimension_numbers = #tpu.dot_dimension_numbers<[1], [0], [0], [1], [0, 0, 1, 1], [], []>} : vector<16x32xbf16>, vector<32x32xbf16>, vector<16x32xf32> -> vector<16x32xf32>
    %19 = vector.broadcast %6 : vector<1x32xf32> to vector<16x32xf32>
    %20 = arith.addf %18, %19 : vector<16x32xf32>
    %cst_9 = arith.constant 0.353553385 : f32
    %21 = vector.broadcast %cst_9 : f32 to vector<16x32xf32>
    %22 = arith.mulf %20, %21 : vector<16x32xf32>
    %c0_10 = arith.constant 0 : index
    %c1 = arith.constant 1 : index
    %c0_11 = arith.constant 0 : index
    %c0_12 = arith.constant 0 : index
    %23 = vector.load %arg4[%c0_10, %c1, %c0_11, %c0_12] : memref<1x3x32x32xbf16, #tpu.memory_space<vmem>>, vector<1x1x32x32xbf16>
    %24 = vector.shape_cast %23 : vector<1x1x32x32xbf16> to vector<32x32xbf16>
    %cst_13 = arith.constant dense<0.000000e+00> : vector<16x32xf32>
    %25 = tpu.matmul %15, %24, %cst_13 {dimension_numbers = #tpu.dot_dimension_numbers<[1], [0], [0], [1], [0, 0, 1, 1], [], []>} : vector<16x32xbf16>, vector<32x32xbf16>, vector<16x32xf32> -> vector<16x32xf32>
    %26 = vector.broadcast %7 : vector<1x32xf32> to vector<16x32xf32>
    %27 = arith.addf %25, %26 : vector<16x32xf32>
    %c0_14 = arith.constant 0 : index
    %c2 = arith.constant 2 : index
    %c0_15 = arith.constant 0 : index
    %c0_16 = arith.constant 0 : index
    %28 = vector.load %arg4[%c0_14, %c2, %c0_15, %c0_16] : memref<1x3x32x32xbf16, #tpu.memory_space<vmem>>, vector<1x1x32x32xbf16>
    %29 = vector.shape_cast %28 : vector<1x1x32x32xbf16> to vector<32x32xbf16>
    %cst_17 = arith.constant dense<0.000000e+00> : vector<16x32xf32>
    %30 = tpu.matmul %15, %29, %cst_17 {dimension_numbers = #tpu.dot_dimension_numbers<[1], [0], [0], [1], [0, 0, 1, 1], [], []>} : vector<16x32xbf16>, vector<32x32xbf16>, vector<16x32xf32> -> vector<16x32xf32>
    %31 = vector.broadcast %8 : vector<1x32xf32> to vector<16x32xf32>
    %32 = arith.addf %30, %31 : vector<16x32xf32>
    %33 = vector.shape_cast %22 : vector<16x32xf32> to vector<2x8x32xf32>
    %34 = vector.shape_cast %27 : vector<16x32xf32> to vector<2x8x32xf32>
    %35 = vector.shape_cast %32 : vector<16x32xf32> to vector<2x8x32xf32>
    %36 = vector.extract_strided_slice %33 {offsets = [0, 0, 0], sizes = [2, 8, 8], strides = [1, 1, 1]} : vector<2x8x32xf32> to vector<2x8x8xf32>
    %37 = vector.extract_strided_slice %34 {offsets = [0, 0, 0], sizes = [2, 8, 8], strides = [1, 1, 1]} : vector<2x8x32xf32> to vector<2x8x8xf32>
    "tpu.trace_start"() <{level = 10 : i32, message = "ntd,nsd->nts"}> : () -> ()
    %cst_18 = arith.constant dense<0.000000e+00> : vector<2x8x8xf32>
    %38 = tpu.matmul %36, %37, %cst_18 {dimension_numbers = #tpu.dot_dimension_numbers<[2], [2], [1], [1], [0, 0, 0, 1, 1, 1], [0], [0]>} : vector<2x8x8xf32>, vector<2x8x8xf32>, vector<2x8x8xf32> -> vector<2x8x8xf32>
    "tpu.trace_stop"() : () -> ()
    %cst_19 = arith.constant dense<0xFF800000> : vector<2x8xf32>
    %39 = vector.multi_reduction <maximumf>, %38, %cst_19 [2] : vector<2x8x8xf32> to vector<2x8xf32>
    %40 = vector.shape_cast %39 : vector<2x8xf32> to vector<2x8x1xf32>
    %41 = vector.broadcast %40 : vector<2x8x1xf32> to vector<2x8x8xf32>
    %42 = arith.subf %38, %41 : vector<2x8x8xf32>
    %43 = math.exp %42 : vector<2x8x8xf32>
    %cst_20 = arith.constant dense<0.000000e+00> : vector<2x8xf32>
    %44 = vector.multi_reduction <add>, %43, %cst_20 [2] : vector<2x8x8xf32> to vector<2x8xf32>
    %45 = vector.shape_cast %44 : vector<2x8xf32> to vector<2x8x1xf32>
    %46 = tpu.reciprocal %45 {approx = true} : vector<2x8x1xf32> -> vector<2x8x1xf32>
    %47 = vector.broadcast %46 : vector<2x8x1xf32> to vector<2x8x8xf32>
    %48 = arith.mulf %43, %47 : vector<2x8x8xf32>
    %49 = vector.extract_strided_slice %35 {offsets = [0, 0, 0], sizes = [2, 8, 8], strides = [1, 1, 1]} : vector<2x8x32xf32> to vector<2x8x8xf32>
    "tpu.trace_start"() <{level = 10 : i32, message = "nts,nsd->ntd"}> : () -> ()
    %cst_21 = arith.constant dense<0.000000e+00> : vector<2x8x8xf32>
    %50 = tpu.matmul %48, %49, %cst_21 {dimension_numbers = #tpu.dot_dimension_numbers<[2], [1], [1], [2], [0, 0, 0, 1, 1, 2], [0], [0]>} : vector<2x8x8xf32>, vector<2x8x8xf32>, vector<2x8x8xf32> -> vector<2x8x8xf32>
    "tpu.trace_stop"() : () -> ()
    %51 = vector.extract_strided_slice %33 {offsets = [0, 0, 8], sizes = [2, 8, 8], strides = [1, 1, 1]} : vector<2x8x32xf32> to vector<2x8x8xf32>
    %52 = vector.extract_strided_slice %34 {offsets = [0, 0, 8], sizes = [2, 8, 8], strides = [1, 1, 1]} : vector<2x8x32xf32> to vector<2x8x8xf32>
    "tpu.trace_start"() <{level = 10 : i32, message = "ntd,nsd->nts"}> : () -> ()
    %cst_22 = arith.constant dense<0.000000e+00> : vector<2x8x8xf32>
    %53 = tpu.matmul %51, %52, %cst_22 {dimension_numbers = #tpu.dot_dimension_numbers<[2], [2], [1], [1], [0, 0, 0, 1, 1, 1], [0], [0]>} : vector<2x8x8xf32>, vector<2x8x8xf32>, vector<2x8x8xf32> -> vector<2x8x8xf32>
    "tpu.trace_stop"() : () -> ()
    %cst_23 = arith.constant dense<0xFF800000> : vector<2x8xf32>
    %54 = vector.multi_reduction <maximumf>, %53, %cst_23 [2] : vector<2x8x8xf32> to vector<2x8xf32>
    %55 = vector.shape_cast %54 : vector<2x8xf32> to vector<2x8x1xf32>
    %56 = vector.broadcast %55 : vector<2x8x1xf32> to vector<2x8x8xf32>
    %57 = arith.subf %53, %56 : vector<2x8x8xf32>
    %58 = math.exp %57 : vector<2x8x8xf32>
    %cst_24 = arith.constant dense<0.000000e+00> : vector<2x8xf32>
    %59 = vector.multi_reduction <add>, %58, %cst_24 [2] : vector<2x8x8xf32> to vector<2x8xf32>
    %60 = vector.shape_cast %59 : vector<2x8xf32> to vector<2x8x1xf32>
    %61 = tpu.reciprocal %60 {approx = true} : vector<2x8x1xf32> -> vector<2x8x1xf32>
    %62 = vector.broadcast %61 : vector<2x8x1xf32> to vector<2x8x8xf32>
    %63 = arith.mulf %58, %62 : vector<2x8x8xf32>
    %64 = vector.extract_strided_slice %35 {offsets = [0, 0, 8], sizes = [2, 8, 8], strides = [1, 1, 1]} : vector<2x8x32xf32> to vector<2x8x8xf32>
    "tpu.trace_start"() <{level = 10 : i32, message = "nts,nsd->ntd"}> : () -> ()
    %cst_25 = arith.constant dense<0.000000e+00> : vector<2x8x8xf32>
    %65 = tpu.matmul %63, %64, %cst_25 {dimension_numbers = #tpu.dot_dimension_numbers<[2], [1], [1], [2], [0, 0, 0, 1, 1, 2], [0], [0]>} : vector<2x8x8xf32>, vector<2x8x8xf32>, vector<2x8x8xf32> -> vector<2x8x8xf32>
    "tpu.trace_stop"() : () -> ()
    %66 = vector.extract_strided_slice %33 {offsets = [0, 0, 16], sizes = [2, 8, 8], strides = [1, 1, 1]} : vector<2x8x32xf32> to vector<2x8x8xf32>
    %67 = vector.extract_strided_slice %34 {offsets = [0, 0, 16], sizes = [2, 8, 8], strides = [1, 1, 1]} : vector<2x8x32xf32> to vector<2x8x8xf32>
    "tpu.trace_start"() <{level = 10 : i32, message = "ntd,nsd->nts"}> : () -> ()
    %cst_26 = arith.constant dense<0.000000e+00> : vector<2x8x8xf32>
    %68 = tpu.matmul %66, %67, %cst_26 {dimension_numbers = #tpu.dot_dimension_numbers<[2], [2], [1], [1], [0, 0, 0, 1, 1, 1], [0], [0]>} : vector<2x8x8xf32>, vector<2x8x8xf32>, vector<2x8x8xf32> -> vector<2x8x8xf32>
    "tpu.trace_stop"() : () -> ()
    %cst_27 = arith.constant dense<0xFF800000> : vector<2x8xf32>
    %69 = vector.multi_reduction <maximumf>, %68, %cst_27 [2] : vector<2x8x8xf32> to vector<2x8xf32>
    %70 = vector.shape_cast %69 : vector<2x8xf32> to vector<2x8x1xf32>
    %71 = vector.broadcast %70 : vector<2x8x1xf32> to vector<2x8x8xf32>
    %72 = arith.subf %68, %71 : vector<2x8x8xf32>
    %73 = math.exp %72 : vector<2x8x8xf32>
    %cst_28 = arith.constant dense<0.000000e+00> : vector<2x8xf32>
    %74 = vector.multi_reduction <add>, %73, %cst_28 [2] : vector<2x8x8xf32> to vector<2x8xf32>
    %75 = vector.shape_cast %74 : vector<2x8xf32> to vector<2x8x1xf32>
    %76 = tpu.reciprocal %75 {approx = true} : vector<2x8x1xf32> -> vector<2x8x1xf32>
    %77 = vector.broadcast %76 : vector<2x8x1xf32> to vector<2x8x8xf32>
    %78 = arith.mulf %73, %77 : vector<2x8x8xf32>
    %79 = vector.extract_strided_slice %35 {offsets = [0, 0, 16], sizes = [2, 8, 8], strides = [1, 1, 1]} : vector<2x8x32xf32> to vector<2x8x8xf32>
    "tpu.trace_start"() <{level = 10 : i32, message = "nts,nsd->ntd"}> : () -> ()
    %cst_29 = arith.constant dense<0.000000e+00> : vector<2x8x8xf32>
    %80 = tpu.matmul %78, %79, %cst_29 {dimension_numbers = #tpu.dot_dimension_numbers<[2], [1], [1], [2], [0, 0, 0, 1, 1, 2], [0], [0]>} : vector<2x8x8xf32>, vector<2x8x8xf32>, vector<2x8x8xf32> -> vector<2x8x8xf32>
    "tpu.trace_stop"() : () -> ()
    %81 = vector.extract_strided_slice %33 {offsets = [0, 0, 24], sizes = [2, 8, 8], strides = [1, 1, 1]} : vector<2x8x32xf32> to vector<2x8x8xf32>
    %82 = vector.extract_strided_slice %34 {offsets = [0, 0, 24], sizes = [2, 8, 8], strides = [1, 1, 1]} : vector<2x8x32xf32> to vector<2x8x8xf32>
    "tpu.trace_start"() <{level = 10 : i32, message = "ntd,nsd->nts"}> : () -> ()
    %cst_30 = arith.constant dense<0.000000e+00> : vector<2x8x8xf32>
    %83 = tpu.matmul %81, %82, %cst_30 {dimension_numbers = #tpu.dot_dimension_numbers<[2], [2], [1], [1], [0, 0, 0, 1, 1, 1], [0], [0]>} : vector<2x8x8xf32>, vector<2x8x8xf32>, vector<2x8x8xf32> -> vector<2x8x8xf32>
    "tpu.trace_stop"() : () -> ()
    %cst_31 = arith.constant dense<0xFF800000> : vector<2x8xf32>
    %84 = vector.multi_reduction <maximumf>, %83, %cst_31 [2] : vector<2x8x8xf32> to vector<2x8xf32>
    %85 = vector.shape_cast %84 : vector<2x8xf32> to vector<2x8x1xf32>
    %86 = vector.broadcast %85 : vector<2x8x1xf32> to vector<2x8x8xf32>
    %87 = arith.subf %83, %86 : vector<2x8x8xf32>
    %88 = math.exp %87 : vector<2x8x8xf32>
    %cst_32 = arith.constant dense<0.000000e+00> : vector<2x8xf32>
    %89 = vector.multi_reduction <add>, %88, %cst_32 [2] : vector<2x8x8xf32> to vector<2x8xf32>
    %90 = vector.shape_cast %89 : vector<2x8xf32> to vector<2x8x1xf32>
    %91 = tpu.reciprocal %90 {approx = true} : vector<2x8x1xf32> -> vector<2x8x1xf32>
    %92 = vector.broadcast %91 : vector<2x8x1xf32> to vector<2x8x8xf32>
    %93 = arith.mulf %88, %92 : vector<2x8x8xf32>
    %94 = vector.extract_strided_slice %35 {offsets = [0, 0, 24], sizes = [2, 8, 8], strides = [1, 1, 1]} : vector<2x8x32xf32> to vector<2x8x8xf32>
    "tpu.trace_start"() <{level = 10 : i32, message = "nts,nsd->ntd"}> : () -> ()
    %cst_33 = arith.constant dense<0.000000e+00> : vector<2x8x8xf32>
    %95 = tpu.matmul %93, %94, %cst_33 {dimension_numbers = #tpu.dot_dimension_numbers<[2], [1], [1], [2], [0, 0, 0, 1, 1, 2], [0], [0]>} : vector<2x8x8xf32>, vector<2x8x8xf32>, vector<2x8x8xf32> -> vector<2x8x8xf32>
    "tpu.trace_stop"() : () -> ()
    %96 = tpu.concatenate %50, %65, %80, %95 in 2 : vector<2x8x8xf32>, vector<2x8x8xf32>, vector<2x8x8xf32>, vector<2x8x8xf32> -> vector<2x8x32xf32>
    %97 = vector.shape_cast %96 : vector<2x8x32xf32> to vector<16x32xf32>
    %98 = arith.truncf %97 : vector<16x32xf32> to vector<16x32xbf16>
    %c0_34 = arith.constant 0 : index
    %c0_35 = arith.constant 0 : index
    %c0_36 = arith.constant 0 : index
    %99 = vector.load %arg5[%c0_34, %c0_35, %c0_36] : memref<1x32x32xbf16, #tpu.memory_space<vmem>>, vector<1x32x32xbf16>
    %100 = vector.shape_cast %99 : vector<1x32x32xbf16> to vector<32x32xbf16>
    %cst_37 = arith.constant dense<0.000000e+00> : vector<16x32xf32>
    %101 = tpu.matmul %98, %100, %cst_37 {dimension_numbers = #tpu.dot_dimension_numbers<[1], [0], [0], [1], [0, 0, 1, 1], [], []>} : vector<16x32xbf16>, vector<32x32xbf16>, vector<16x32xf32> -> vector<16x32xf32>
    %102 = vector.broadcast %9 : vector<1x32xf32> to vector<16x32xf32>
    %103 = arith.addf %101, %102 : vector<16x32xf32>
    %104 = arith.addf %3, %103 : vector<16x32xf32>
    %cst_38 = arith.constant dense<0.000000e+00> : vector<16xf32>
    %105 = vector.multi_reduction <add>, %104, %cst_38 [1] : vector<16x32xf32> to vector<16xf32>
    %106 = vector.shape_cast %105 : vector<16xf32> to vector<16x1xf32>
    %107 = arith.mulf %104, %104 : vector<16x32xf32>
    %cst_39 = arith.constant dense<0.000000e+00> : vector<16xf32>
    %108 = vector.multi_reduction <add>, %107, %cst_39 [1] : vector<16x32xf32> to vector<16xf32>
    %109 = vector.shape_cast %108 : vector<16xf32> to vector<16x1xf32>
    %cst_40 = arith.constant 3.125000e-02 : f32
    %110 = vector.broadcast %cst_40 : f32 to vector<16x1xf32>
    %111 = arith.mulf %106, %110 : vector<16x1xf32>
    %cst_41 = arith.constant 3.125000e-02 : f32
    %112 = vector.broadcast %cst_41 : f32 to vector<16x1xf32>
    %113 = arith.mulf %109, %112 : vector<16x1xf32>
    %114 = arith.mulf %111, %111 : vector<16x1xf32>
    %115 = arith.subf %113, %114 : vector<16x1xf32>
    %116 = vector.broadcast %111 : vector<16x1xf32> to vector<16x32xf32>
    %117 = arith.subf %104, %116 : vector<16x32xf32>
    %cst_42 = arith.constant 9.99999974E-6 : f32
    %118 = vector.broadcast %cst_42 : f32 to vector<16x1xf32>
    %119 = arith.addf %115, %118 : vector<16x1xf32>
    %120 = math.rsqrt %119 : vector<16x1xf32>
    %121 = vector.broadcast %120 : vector<16x1xf32> to vector<16x32xf32>
    %122 = arith.mulf %117, %121 : vector<16x32xf32>
    %123 = vector.broadcast %11 : vector<1x32xf32> to vector<16x32xf32>
    %124 = arith.mulf %122, %123 : vector<16x32xf32>
    %125 = vector.broadcast %12 : vector<1x32xf32> to vector<16x32xf32>
    %126 = arith.addf %124, %125 : vector<16x32xf32>
    %127 = arith.truncf %126 : vector<16x32xf32> to vector<16x32xbf16>
    %c0_43 = arith.constant 0 : index
    %c0_44 = arith.constant 0 : index
    %c0_45 = arith.constant 0 : index
    %128 = vector.load %arg6[%c0_43, %c0_44, %c0_45] : memref<1x32x2048xbf16, #tpu.memory_space<vmem>>, vector<1x32x2048xbf16>
    %129 = vector.shape_cast %128 : vector<1x32x2048xbf16> to vector<32x2048xbf16>
    %cst_46 = arith.constant dense<0.000000e+00> : vector<16x2048xf32>
    %130 = tpu.matmul %127, %129, %cst_46 {dimension_numbers = #tpu.dot_dimension_numbers<[1], [0], [0], [1], [0, 0, 1, 1], [], []>} : vector<16x32xbf16>, vector<32x2048xbf16>, vector<16x2048xf32> -> vector<16x2048xf32>
    %c0_47 = arith.constant 0 : index
    %c0_48 = arith.constant 0 : index
    %c0_49 = arith.constant 0 : index
    %131 = vector.load %arg7[%c0_47, %c0_48, %c0_49] : memref<1x1x2048xf32, #tpu.memory_space<vmem>>, vector<1x1x2048xf32>
    %132 = vector.shape_cast %131 : vector<1x1x2048xf32> to vector<1x2048xf32>
    %133 = vector.broadcast %132 : vector<1x2048xf32> to vector<16x2048xf32>
    %134 = arith.addf %130, %133 : vector<16x2048xf32>
    %cst_50 = arith.constant 0.000000e+00 : f32
    %135 = vector.broadcast %cst_50 : f32 to vector<16x2048xf32>
    %136 = arith.maximumf %134, %135 : vector<16x2048xf32>
    %137 = arith.truncf %136 : vector<16x2048xf32> to vector<16x2048xbf16>
    %c0_51 = arith.constant 0 : index
    %c0_52 = arith.constant 0 : index
    %c0_53 = arith.constant 0 : index
    %138 = vector.load %arg8[%c0_51, %c0_52, %c0_53] : memref<1x2048x32xbf16, #tpu.memory_space<vmem>>, vector<1x2048x32xbf16>
    %139 = vector.shape_cast %138 : vector<1x2048x32xbf16> to vector<2048x32xbf16>
    %cst_54 = arith.constant dense<0.000000e+00> : vector<16x32xf32>
    %140 = tpu.matmul %137, %139, %cst_54 {dimension_numbers = #tpu.dot_dimension_numbers<[1], [0], [0], [1], [0, 0, 1, 1], [], []>} : vector<16x2048xbf16>, vector<2048x32xbf16>, vector<16x32xf32> -> vector<16x32xf32>
    %141 = vector.broadcast %10 : vector<1x32xf32> to vector<16x32xf32>
    %142 = arith.addf %140, %141 : vector<16x32xf32>
    %143 = arith.addf %126, %142 : vector<16x32xf32>
    %cst_55 = arith.constant dense<0.000000e+00> : vector<16xf32>
    %144 = vector.multi_reduction <add>, %143, %cst_55 [1] : vector<16x32xf32> to vector<16xf32>
    %145 = vector.shape_cast %144 : vector<16xf32> to vector<16x1xf32>
    %146 = arith.mulf %143, %143 : vector<16x32xf32>
    %cst_56 = arith.constant dense<0.000000e+00> : vector<16xf32>
    %147 = vector.multi_reduction <add>, %146, %cst_56 [1] : vector<16x32xf32> to vector<16xf32>
    %148 = vector.shape_cast %147 : vector<16xf32> to vector<16x1xf32>
    %cst_57 = arith.constant 3.125000e-02 : f32
    %149 = vector.broadcast %cst_57 : f32 to vector<16x1xf32>
    %150 = arith.mulf %145, %149 : vector<16x1xf32>
    %cst_58 = arith.constant 3.125000e-02 : f32
    %151 = vector.broadcast %cst_58 : f32 to vector<16x1xf32>
    %152 = arith.mulf %148, %151 : vector<16x1xf32>
    %153 = arith.mulf %150, %150 : vector<16x1xf32>
    %154 = arith.subf %152, %153 : vector<16x1xf32>
    %155 = vector.broadcast %150 : vector<16x1xf32> to vector<16x32xf32>
    %156 = arith.subf %143, %155 : vector<16x32xf32>
    %cst_59 = arith.constant 9.99999974E-6 : f32
    %157 = vector.broadcast %cst_59 : f32 to vector<16x1xf32>
    %158 = arith.addf %154, %157 : vector<16x1xf32>
    %159 = math.rsqrt %158 : vector<16x1xf32>
    %160 = vector.broadcast %159 : vector<16x1xf32> to vector<16x32xf32>
    %161 = arith.mulf %156, %160 : vector<16x32xf32>
    %162 = vector.broadcast %13 : vector<1x32xf32> to vector<16x32xf32>
    %163 = arith.mulf %161, %162 : vector<16x32xf32>
    %164 = vector.broadcast %14 : vector<1x32xf32> to vector<16x32xf32>
    %165 = arith.addf %163, %164 : vector<16x32xf32>
    %c0_60 = arith.constant 0 : index
    %c0_61 = arith.constant 0 : index
    %166 = vector.load %arg13[%c0_60, %c0_61] : memref<16x32xf32, #tpu.memory_space<vmem>>, vector<16x32xf32>
    tpu.vector_store %arg13[%c0_60, %c0_61], %165 {strides = array<i32>} : memref<16x32xf32, #tpu.memory_space<vmem>>, vector<16x32xf32>,
    %c1_i32 = arith.constant 1 : i32
    %167 = arith.cmpi eq, %arg1, %c1_i32 : i32
    %168 = arith.extui %167 : i1 to i32
    %c0_i32_62 = arith.constant 0 : i32
    %169 = arith.cmpi ne, %168, %c0_i32_62 : i32
    scf.if %169 {
      %170 = arith.truncf %165 : vector<16x32xf32> to vector<16x32xbf16>
      %c0_63 = arith.constant 0 : index
      %c0_64 = arith.constant 0 : index
      %171 = vector.load %arg10[%c0_63, %c0_64] : memref<32x32xbf16, #tpu.memory_space<vmem>>, vector<32x32xbf16>
      %cst_65 = arith.constant dense<0.000000e+00> : vector<16x32xf32>
      %172 = tpu.matmul %170, %171, %cst_65 {dimension_numbers = #tpu.dot_dimension_numbers<[1], [0], [0], [1], [0, 0, 1, 1], [], []>} : vector<16x32xbf16>, vector<32x32xbf16>, vector<16x32xf32> -> vector<16x32xf32>
      %c0_66 = arith.constant 0 : index
      %c0_67 = arith.constant 0 : index
      %173 = vector.load %arg11[%c0_66, %c0_67] : memref<1x32xf32, #tpu.memory_space<vmem>>, vector<1x32xf32>
      %174 = vector.broadcast %173 : vector<1x32xf32> to vector<16x32xf32>
      %175 = arith.addf %172, %174 : vector<16x32xf32>
      %c0_68 = arith.constant 0 : index
      %c0_69 = arith.constant 0 : index
      %176 = vector.load %arg12[%c0_68, %c0_69] : memref<16x32xf32, #tpu.memory_space<vmem>>, vector<16x32xf32>
      tpu.vector_store %arg12[%c0_68, %c0_69], %175 {strides = array<i32>} : memref<16x32xf32, #tpu.memory_space<vmem>>, vector<16x32xf32>,
    } else {
    }
    return
  }
  func.func @transform_0(%arg0: i32, %arg1: i32) -> (i32, i32) {
    %c0_i32 = arith.constant 0 : i32
    %c0_i32_0 = arith.constant 0 : i32
    return %arg0, %c0_i32 : i32, i32
  }
  func.func @transform_1(%arg0: i32, %arg1: i32) -> (i32, i32) {
    %c0_i32 = arith.constant 0 : i32
    %c0_i32_0 = arith.constant 0 : i32
    %c0_i32_1 = arith.constant 0 : i32
    return %c0_i32, %c0_i32_0 : i32, i32
  }
  func.func @transform_2(%arg0: i32, %arg1: i32) -> (i32, i32, i32, i32) {
    %c0_i32 = arith.constant 0 : i32
    %c0_i32_0 = arith.constant 0 : i32
    %c0_i32_1 = arith.constant 0 : i32
    %c0_i32_2 = arith.constant 0 : i32
    return %arg1, %c0_i32, %c0_i32_0, %c0_i32_1 : i32, i32, i32, i32
  }
  func.func @transform_3(%arg0: i32, %arg1: i32) -> (i32, i32, i32) {
    %c0_i32 = arith.constant 0 : i32
    %c0_i32_0 = arith.constant 0 : i32
    %c0_i32_1 = arith.constant 0 : i32
    return %arg1, %c0_i32, %c0_i32_0 : i32, i32, i32
  }
  func.func @transform_4(%arg0: i32, %arg1: i32) -> (i32, i32, i32) {
    %c0_i32 = arith.constant 0 : i32
    %c0_i32_0 = arith.constant 0 : i32
    %c0_i32_1 = arith.constant 0 : i32
    return %arg1, %c0_i32, %c0_i32_0 : i32, i32, i32
  }
  func.func @transform_5(%arg0: i32, %arg1: i32) -> (i32, i32, i32) {
    %c0_i32 = arith.constant 0 : i32
    %c0_i32_0 = arith.constant 0 : i32
    %c0_i32_1 = arith.constant 0 : i32
    return %arg1, %c0_i32, %c0_i32_0 : i32, i32, i32
  }
  func.func @transform_6(%arg0: i32, %arg1: i32) -> (i32, i32, i32) {
    %c0_i32 = arith.constant 0 : i32
    %c0_i32_0 = arith.constant 0 : i32
    %c0_i32_1 = arith.constant 0 : i32
    return %arg1, %c0_i32, %c0_i32_0 : i32, i32, i32
  }
  func.func @transform_7(%arg0: i32, %arg1: i32) -> (i32, i32, i32) {
    %c0_i32 = arith.constant 0 : i32
    %c0_i32_0 = arith.constant 0 : i32
    %c0_i32_1 = arith.constant 0 : i32
    return %arg1, %c0_i32, %c0_i32_0 : i32, i32, i32
  }
  func.func @transform_8(%arg0: i32, %arg1: i32) -> (i32, i32) {
    %c0_i32 = arith.constant 0 : i32
    %c0_i32_0 = arith.constant 0 : i32
    %c0_i32_1 = arith.constant 0 : i32
    return %c0_i32, %c0_i32_0 : i32, i32
  }
  func.func @transform_9(%arg0: i32, %arg1: i32) -> (i32, i32) {
    %c0_i32 = arith.constant 0 : i32
    %c0_i32_0 = arith.constant 0 : i32
    %c0_i32_1 = arith.constant 0 : i32
    return %c0_i32, %c0_i32_0 : i32, i32
  }
  func.func @transform_10(%arg0: i32, %arg1: i32) -> (i32, i32) {
    %c0_i32 = arith.constant 0 : i32
    %c0_i32_0 = arith.constant 0 : i32
    return %arg0, %c0_i32 : i32, i32
  }
}

</mosaic_0001>

<llo_original>
// kernel: tpu_custom_call.1
$region0: #{tpu_custom_call.1}
  #allocation0 [shape = 'u32[]', space=smem, size = 0x4, offset = 0x4, fixed_abs, tag = 'smem constant byte address 0x4 - core index']
  #allocation1 [shape = 'u32[144,128]{1,0:T(1,128)}', space=vmem, size = 0x12000, scoped, tag = 'internal scratch']
  #allocation2 [shape = 'f32[16,32]{1,0:T(8,128)}', space=vmem, size = 0x2000, scoped, tag = 'scratch operand']
  %s0 = inlined_call_operand.vmem [shape: s32[32,1], index: 0, kind: input, shape index: {}]
  %s1 = inlined_call_operand.vmem [shape: f32[26,32], index: 1, kind: input, shape index: {}]
  %s2 = inlined_call_operand.vmem [shape: bf16[2,3,32,32], index: 2, kind: input, shape index: {}]
  %s3 = inlined_call_operand.vmem [shape: bf16[2,32,32], index: 3, kind: input, shape index: {}]
  %s4 = inlined_call_operand.vmem [shape: bf16[2,32,2048], index: 4, kind: input, shape index: {}]
  %s5 = inlined_call_operand.vmem [shape: f32[2,1,2048], index: 5, kind: input, shape index: {}]
  %s6 = inlined_call_operand.vmem [shape: bf16[2,2048,32], index: 6, kind: input, shape index: {}]
  %s7 = inlined_call_operand.vmem [shape: f32[2,9,32], index: 7, kind: input, shape index: {}]
  %s8 = inlined_call_operand.vmem [shape: bf16[32,32], index: 8, kind: input, shape index: {}]
  %s9 = inlined_call_operand.vmem [shape: f32[1,32], index: 9, kind: input, shape index: {}]
  %s10 = inlined_call_operand.hbm [shape: f32[32,32], index: 10, kind: output, shape index: {}]
  %s11 = sld [smem:[#allocation0]]
  $region81: #{tpu_custom_call.1} parent=0
    _
  %s13 = ssub.s32 1, %s11
  %s14 = scalar_select 0, %s13, %s11
  $region1: #{tpu_custom_call.1} parent=0
    #allocation3 [shape = 'u8[16384]{0}', space=vmem, size = 0x4000, scoped, tag = 'output window, operand 0']
    #allocation4 [shape = 's32[2]{0}', space=sflag, size = 0x8, scoped, tag = 'scoped memory for tpu_custom_call.1']
    %15 = vsyncpa [#allocation4], 0
    %s16 = scalar_lea.sflag [#allocation4], 1
    %17 = vsyncpa %s16, 0
    loop: start=0, step=1, limit=6
    $region2: #{tpu_custom_call.1} parent=1 // loop_pre_header
      _
    $region3: #{tpu_custom_call.1} parent=1 // loop_header
      %s19 = sphi 0, %s23
      %p20 = scmp.ge.s32.totalorder %s19, 6
      %s26 = sphi 0, %s38
      %s27 = sphi 0, %s34
      %s28 = sphi 0, %s26
      %s29 = sphi 0, %s27
      %s30 = sphi 0, %s28
      %s31 = sphi 0, %s29
      %s41 = sphi 0, %s43
      %s44 = sphi 0, %s41
      %s45 = sphi 0, %s44
      %s61 = sphi 0, %s45
      %s65 = sphi 0, %s65
      %s67 = sphi 0, %s65
      %s68 = sphi 0, %s67
      %s82 = sphi 0, %s68
      %s88 = sphi 0, %s90
      %s91 = sphi 0, %s88
      %s92 = sphi 0, %s91
      %s108 = sphi 0, %s92
      %s114 = sphi 0, %s116
      %s117 = sphi 0, %s114
      %s118 = sphi 0, %s117
      %s134 = sphi 0, %s118
      %s140 = sphi 0, %s142
      %s143 = sphi 0, %s140
      %s144 = sphi 0, %s143
      %s160 = sphi 0, %s144
      %s166 = sphi 0, %s168
      %s169 = sphi 0, %s166
      %s170 = sphi 0, %s169
      %s186 = sphi 0, %s170
      %s192 = sphi 0, %s194
      %s195 = sphi 0, %s192
      %s196 = sphi 0, %s195
      %s212 = sphi 0, %s196
      %s218 = sphi 0, %s220
      %s221 = sphi 0, %s218
      %s222 = sphi 0, %s221
      %s238 = sphi 0, %s222
      %s242 = sphi 0, %s242
      %s244 = sphi 0, %s242
      %s245 = sphi 0, %s244
      %s259 = sphi 0, %s245
      %s263 = sphi 0, %s263
      %s265 = sphi 0, %s263
      %s266 = sphi 0, %s265
      %s280 = sphi 0, %s266
      %s286 = sphi 0, %s288
      %s289 = sphi 0, %s286
      %s290 = sphi 0, %s289
      %s306 = sphi 0, %s290
    $region4: #{tpu_custom_call.1} parent=1 // loop_header_branch
      %22 = sbr.rel (%p20) target = $region8
    $region5: #{tpu_custom_call.1} parent=1 // loop_body
      %s24 = ssub.s32 %s19, 1
      %s25 = ssub.s32 %s19, 2
      %s32 = sadd.s32 1, %s27
      %p33 = scmp.ge.s32.totalorder %s32, 2
      %s34 = scalar_select %p33, 0, %s32
      %s35 = sadd.s32 1, %s26
      %s36 = scalar_select %p33, %s35, %s26
      %p37 = scmp.ge.s32.totalorder %s36, 2
      %s38 = scalar_select %p37, 0, %s36
      %s39 = ssub.s32 %s26, %s38
      %p40 = scmp.eq.s32.totalorder %s39, 0
      %s42 = sadd.s32 %s41, 1
      %s43 = scalar_select %p40, %s41, %s42
      %p46 = pneg %p40
      %p47 = scmp.eq.s32.totalorder %s19, 3
      %p48 = por %p46, %p47
      %p49 = scmp.ne.s32.totalorder %s41, %s44
      %p50 = scmp.eq.s32.totalorder %s19, 0
      %p51 = por %p49, %p50
      %p52 = scmp.ne.s32.totalorder %s41, %s44
      %p53 = scmp.eq.s32.totalorder %s24, 3
      %p54 = por %p52, %p53
      %p55 = scmp.ne.s32.totalorder %s44, %s45
      %p56 = scmp.eq.s32.totalorder %s24, 0
      %p57 = por %p55, %p56
      %p58 = scmp.ne.s32.totalorder %s44, %s45
      %p59 = scmp.eq.s32.totalorder %s25, 3
      %p60 = por %p58, %p59
      %p62 = scmp.ne.s32.totalorder %s45, %s61
      %p63 = scmp.eq.s32.totalorder %s25, 0
      %p64 = por %p62, %p63
      %s66 = sadd.s32 %s65, 1
      %p69 = scmp.eq.s32.totalorder %s19, 3
      %p70 = scmp.ne.s32.totalorder %s65, %s67
      %p71 = scmp.eq.s32.totalorder %s19, 0
      %p72 = por %p70, %p71
      %p73 = scmp.ne.s32.totalorder %s65, %s67
      %p74 = scmp.eq.s32.totalorder %s24, 3
      %p75 = por %p73, %p74
      %p76 = scmp.ne.s32.totalorder %s67, %s68
      %p77 = scmp.eq.s32.totalorder %s24, 0
      %p78 = por %p76, %p77
      %p79 = scmp.ne.s32.totalorder %s67, %s68
      %p80 = scmp.eq.s32.totalorder %s25, 3
      %p81 = por %p79, %p80
      %p83 = scmp.ne.s32.totalorder %s68, %s82
      %p84 = scmp.eq.s32.totalorder %s25, 0
      %p85 = por %p83, %p84
      %s86 = ssub.s32 %s27, %s34
      %p87 = scmp.eq.s32.totalorder %s86, 0
      %s89 = sadd.s32 %s88, 1
      %s90 = scalar_select %p87, %s88, %s89
      %p93 = pneg %p87
      %p94 = scmp.eq.s32.totalorder %s19, 3
      %p95 = por %p93, %p94
      %p96 = scmp.ne.s32.totalorder %s88, %s91
      %p97 = scmp.eq.s32.totalorder %s19, 0
      %p98 = por %p96, %p97
      %p99 = scmp.ne.s32.totalorder %s88, %s91
      %p100 = scmp.eq.s32.totalorder %s24, 3
      %p101 = por %p99, %p100
      %p102 = scmp.ne.s32.totalorder %s91, %s92
      %p103 = scmp.eq.s32.totalorder %s24, 0
      %p104 = por %p102, %p103
      %p105 = scmp.ne.s32.totalorder %s91, %s92
      %p106 = scmp.eq.s32.totalorder %s25, 3
      %p107 = por %p105, %p106
      %p109 = scmp.ne.s32.totalorder %s92, %s108
      %p110 = scmp.eq.s32.totalorder %s25, 0
      %p111 = por %p109, %p110
      %s112 = ssub.s32 %s27, %s34
      %p113 = scmp.eq.s32.totalorder %s112, 0
      %s115 = sadd.s32 %s114, 1
      %s116 = scalar_select %p113, %s114, %s115
      %p119 = pneg %p113
      %p120 = scmp.eq.s32.totalorder %s19, 3
      %p121 = por %p119, %p120
      %p122 = scmp.ne.s32.totalorder %s114, %s117
      %p123 = scmp.eq.s32.totalorder %s19, 0
      %p124 = por %p122, %p123
      %p125 = scmp.ne.s32.totalorder %s114, %s117
      %p126 = scmp.eq.s32.totalorder %s24, 3
      %p127 = por %p125, %p126
      %p128 = scmp.ne.s32.totalorder %s117, %s118
      %p129 = scmp.eq.s32.totalorder %s24, 0
      %p130 = por %p128, %p129
      %p131 = scmp.ne.s32.totalorder %s117, %s118
      %p132 = scmp.eq.s32.totalorder %s25, 3
      %p133 = por %p131, %p132
      %p135 = scmp.ne.s32.totalorder %s118, %s134
      %p136 = scmp.eq.s32.totalorder %s25, 0
      %p137 = por %p135, %p136
      %s138 = ssub.s32 %s27, %s34
      %p139 = scmp.eq.s32.totalorder %s138, 0
      %s141 = sadd.s32 %s140, 1
      %s142 = scalar_select %p139, %s140, %s141
      %p145 = pneg %p139
      %p146 = scmp.eq.s32.totalorder %s19, 3
      %p147 = por %p145, %p146
      %p148 = scmp.ne.s32.totalorder %s140, %s143
      %p149 = scmp.eq.s32.totalorder %s19, 0
      %p150 = por %p148, %p149
      %p151 = scmp.ne.s32.totalorder %s140, %s143
      %p152 = scmp.eq.s32.totalorder %s24, 3
      %p153 = por %p151, %p152
      %p154 = scmp.ne.s32.totalorder %s143, %s144
      %p155 = scmp.eq.s32.totalorder %s24, 0
      %p156 = por %p154, %p155
      %p157 = scmp.ne.s32.totalorder %s143, %s144
      %p158 = scmp.eq.s32.totalorder %s25, 3
      %p159 = por %p157, %p158
      %p161 = scmp.ne.s32.totalorder %s144, %s160
      %p162 = scmp.eq.s32.totalorder %s25, 0
      %p163 = por %p161, %p162
      %s164 = ssub.s32 %s27, %s34
      %p165 = scmp.eq.s32.totalorder %s164, 0
      %s167 = sadd.s32 %s166, 1
      %s168 = scalar_select %p165, %s166, %s167
      %p171 = pneg %p165
      %p172 = scmp.eq.s32.totalorder %s19, 3
      %p173 = por %p171, %p172
      %p174 = scmp.ne.s32.totalorder %s166, %s169
      %p175 = scmp.eq.s32.totalorder %s19, 0
      %p176 = por %p174, %p175
      %p177 = scmp.ne.s32.totalorder %s166, %s169
      %p178 = scmp.eq.s32.totalorder %s24, 3
      %p179 = por %p177, %p178
      %p180 = scmp.ne.s32.totalorder %s169, %s170
      %p181 = scmp.eq.s32.totalorder %s24, 0
      %p182 = por %p180, %p181
      %p183 = scmp.ne.s32.totalorder %s169, %s170
      %p184 = scmp.eq.s32.totalorder %s25, 3
      %p185 = por %p183, %p184
      %p187 = scmp.ne.s32.totalorder %s170, %s186
      %p188 = scmp.eq.s32.totalorder %s25, 0
      %p189 = por %p187, %p188
      %s190 = ssub.s32 %s27, %s34
      %p191 = scmp.eq.s32.totalorder %s190, 0
      %s193 = sadd.s32 %s192, 1
      %s194 = scalar_select %p191, %s192, %s193
      %p197 = pneg %p191
      %p198 = scmp.eq.s32.totalorder %s19, 3
      %p199 = por %p197, %p198
      %p200 = scmp.ne.s32.totalorder %s192, %s195
      %p201 = scmp.eq.s32.totalorder %s19, 0
      %p202 = por %p200, %p201
      %p203 = scmp.ne.s32.totalorder %s192, %s195
      %p204 = scmp.eq.s32.totalorder %s24, 3
      %p205 = por %p203, %p204
      %p206 = scmp.ne.s32.totalorder %s195, %s196
      %p207 = scmp.eq.s32.totalorder %s24, 0
      %p208 = por %p206, %p207
      %p209 = scmp.ne.s32.totalorder %s195, %s196
      %p210 = scmp.eq.s32.totalorder %s25, 3
      %p211 = por %p209, %p210
      %p213 = scmp.ne.s32.totalorder %s196, %s212
      %p214 = scmp.eq.s32.totalorder %s25, 0
      %p215 = por %p213, %p214
      %s216 = ssub.s32 %s27, %s34
      %p217 = scmp.eq.s32.totalorder %s216, 0
      %s219 = sadd.s32 %s218, 1
      %s220 = scalar_select %p217, %s218, %s219
      %p223 = pneg %p217
      %p224 = scmp.eq.s32.totalorder %s19, 3
      %p225 = por %p223, %p224
      %p226 = scmp.ne.s32.totalorder %s218, %s221
      %p227 = scmp.eq.s32.totalorder %s19, 0
      %p228 = por %p226, %p227
      %p229 = scmp.ne.s32.totalorder %s218, %s221
      %p230 = scmp.eq.s32.totalorder %s24, 3
      %p231 = por %p229, %p230
      %p232 = scmp.ne.s32.totalorder %s221, %s222
      %p233 = scmp.eq.s32.totalorder %s24, 0
      %p234 = por %p232, %p233
      %p235 = scmp.ne.s32.totalorder %s221, %s222
      %p236 = scmp.eq.s32.totalorder %s25, 3
      %p237 = por %p235, %p236
      %p239 = scmp.ne.s32.totalorder %s222, %s238
      %p240 = scmp.eq.s32.totalorder %s25, 0
      %p241 = por %p239, %p240
      %s243 = sadd.s32 %s242, 1
      %p246 = scmp.eq.s32.totalorder %s19, 3
      %p247 = scmp.ne.s32.totalorder %s242, %s244
      %p248 = scmp.eq.s32.totalorder %s19, 0
      %p249 = por %p247, %p248
      %p250 = scmp.ne.s32.totalorder %s242, %s244
      %p251 = scmp.eq.s32.totalorder %s24, 3
      %p252 = por %p250, %p251
      %p253 = scmp.ne.s32.totalorder %s244, %s245
      %p254 = scmp.eq.s32.totalorder %s24, 0
      %p255 = por %p253, %p254
      %p256 = scmp.ne.s32.totalorder %s244, %s245
      %p257 = scmp.eq.s32.totalorder %s25, 3
      %p258 = por %p256, %p257
      %p260 = scmp.ne.s32.totalorder %s245, %s259
      %p261 = scmp.eq.s32.totalorder %s25, 0
      %p262 = por %p260, %p261
      %s264 = sadd.s32 %s263, 1
      %p267 = scmp.eq.s32.totalorder %s19, 3
      %p268 = scmp.ne.s32.totalorder %s263, %s265
      %p269 = scmp.eq.s32.totalorder %s19, 0
      %p270 = por %p268, %p269
      %p271 = scmp.ne.s32.totalorder %s263, %s265
      %p272 = scmp.eq.s32.totalorder %s24, 3
      %p273 = por %p271, %p272
      %p274 = scmp.ne.s32.totalorder %s265, %s266
      %p275 = scmp.eq.s32.totalorder %s24, 0
      %p276 = por %p274, %p275
      %p277 = scmp.ne.s32.totalorder %s265, %s266
      %p278 = scmp.eq.s32.totalorder %s25, 3
      %p279 = por %p277, %p278
      %p281 = scmp.ne.s32.totalorder %s266, %s280
      %p282 = scmp.eq.s32.totalorder %s25, 0
      %p283 = por %p281, %p282
      %s284 = ssub.s32 %s26, %s38
      %p285 = scmp.eq.s32.totalorder %s284, 0
      %s287 = sadd.s32 %s286, 1
      %s288 = scalar_select %p285, %s286, %s287
      %p291 = pneg %p285
      %p292 = scmp.eq.s32.totalorder %s19, 3
      %p293 = por %p291, %p292
      %p294 = scmp.ne.s32.totalorder %s286, %s289
      %p295 = scmp.eq.s32.totalorder %s19, 0
      %p296 = por %p294, %p295
      %p297 = scmp.ne.s32.totalorder %s286, %s289
      %p298 = scmp.eq.s32.totalorder %s24, 3
      %p299 = por %p297, %p298
      %p300 = scmp.ne.s32.totalorder %s289, %s290
      %p301 = scmp.eq.s32.totalorder %s24, 0
      %p302 = por %p300, %p301
      %p303 = scmp.ne.s32.totalorder %s289, %s290
      %p304 = scmp.eq.s32.totalorder %s25, 3
      %p305 = por %p303, %p304
      %p307 = scmp.ne.s32.totalorder %s290, %s306
      %p308 = scmp.eq.s32.totalorder %s25, 0
      %p309 = por %p307, %p308
      %p310 = scmp.le.s32.totalorder 1, %s19
      %p311 = scmp.lt.s32.totalorder %s19, 5
      %p312 = pnand %p310, %p311
      %p313 = pneg %p312
      // Predicated region
      $region9: #{tpu_custom_call.1} parent=5 // pred_check
        _
      $region10: #{tpu_custom_call.1} parent=5 // pred_check_branch
        %315 = sbr.rel (%p312) target = $region12
      $region11: #{tpu_custom_call.1} parent=5 // pred_region
        %s316 = ssub.s32 %s19, 1
        // Predicated region
        $region13: #{tpu_custom_call.1} parent=11 // pred_check
          %p317 = pneg %p78
        $region14: #{tpu_custom_call.1} parent=11 // pred_check_branch
          %319 = sbr.rel (%p317) target = $region16
        $region15: #{tpu_custom_call.1} parent=11 // pred_region
          _
        $region16: #{tpu_custom_call.1} parent=11 // pred_fallthru
          _
        // Predicated region
        $region17: #{tpu_custom_call.1} parent=11 // pred_check
          %p320 = pneg %p255
        $region18: #{tpu_custom_call.1} parent=11 // pred_check_branch
          %322 = sbr.rel (%p320) target = $region20
        $region19: #{tpu_custom_call.1} parent=11 // pred_region
          _
        $region20: #{tpu_custom_call.1} parent=11 // pred_fallthru
          _
        // Predicated region
        $region21: #{tpu_custom_call.1} parent=11 // pred_check
          %p323 = pneg %p276
        $region22: #{tpu_custom_call.1} parent=11 // pred_check_branch
          %325 = sbr.rel (%p323) target = $region24
        $region23: #{tpu_custom_call.1} parent=11 // pred_region
          _
        $region24: #{tpu_custom_call.1} parent=11 // pred_fallthru
          _
      $region12: #{tpu_custom_call.1} parent=5 // pred_fallthru
        _
      %p326 = scmp.lt.s32.totalorder %s19, 4
      // Predicated region
      $region25: #{tpu_custom_call.1} parent=5 // pred_check
        %p327 = pneg %p326
      $region26: #{tpu_custom_call.1} parent=5 // pred_check_branch
        %329 = sbr.rel (%p327) target = $region28
      $region27: #{tpu_custom_call.1} parent=5 // pred_region
        // Predicated region
        $region29: #{tpu_custom_call.1} parent=27 // pred_check
          %p330 = pneg %p51
        $region30: #{tpu_custom_call.1} parent=27 // pred_check_branch
          %332 = sbr.rel (%p330) target = $region32
        $region31: #{tpu_custom_call.1} parent=27 // pred_region
          %s333 = smul.u32 2, %s26
          %p334 = scmp.lt.s32.totalorder %s333, 3
          %s335 = scalar_select %p334, %s333, 3
          %s336 = smul.addr %s335, 8
          %s337 = scalar_lea.vmem %s0, %s336
          %s338 = smul.u32 2, %s26
        $region32: #{tpu_custom_call.1} parent=27 // pred_fallthru
          _
        // Predicated region
        $region33: #{tpu_custom_call.1} parent=27 // pred_check
          %p339 = pneg %p98
        $region34: #{tpu_custom_call.1} parent=27 // pred_check_branch
          %341 = sbr.rel (%p339) target = $region36
        $region35: #{tpu_custom_call.1} parent=27 // pred_region
          %p342 = scmp.lt.s32.totalorder %s27, 1
          %s343 = scalar_select %p342, %s27, 1
          %s344 = smul.addr %s343, 12
          %s345 = smul.addr %s344, 4
          %s346 = scalar_lea.vmem %s2, %s345
        $region36: #{tpu_custom_call.1} parent=27 // pred_fallthru
          _
        // Predicated region
        $region37: #{tpu_custom_call.1} parent=27 // pred_check
          %p347 = pneg %p124
        $region38: #{tpu_custom_call.1} parent=27 // pred_check_branch
          %349 = sbr.rel (%p347) target = $region40
        $region39: #{tpu_custom_call.1} parent=27 // pred_region
          %p350 = scmp.lt.s32.totalorder %s27, 1
          %s351 = scalar_select %p350, %s27, 1
          %s352 = smul.addr %s351, 4
          %s353 = smul.addr %s352, 4
          %s354 = scalar_lea.vmem %s3, %s353
        $region40: #{tpu_custom_call.1} parent=27 // pred_fallthru
          _
        // Predicated region
        $region41: #{tpu_custom_call.1} parent=27 // pred_check
          %p355 = pneg %p150
        $region42: #{tpu_custom_call.1} parent=27 // pred_check_branch
          %357 = sbr.rel (%p355) target = $region44
        $region43: #{tpu_custom_call.1} parent=27 // pred_region
          %p358 = scmp.lt.s32.totalorder %s27, 1
          %s359 = scalar_select %p358, %s27, 1
          %s360 = smul.addr %s359, 64
          %s361 = smul.addr %s360, 4
          %s362 = scalar_lea.vmem %s4, %s361
        $region44: #{tpu_custom_call.1} parent=27 // pred_fallthru
          _
        // Predicated region
        $region45: #{tpu_custom_call.1} parent=27 // pred_check
          %p363 = pneg %p176
        $region46: #{tpu_custom_call.1} parent=27 // pred_check_branch
          %365 = sbr.rel (%p363) target = $region48
        $region47: #{tpu_custom_call.1} parent=27 // pred_region
          %p366 = scmp.lt.s32.totalorder %s27, 1
          %s367 = scalar_select %p366, %s27, 1
          %s368 = smul.addr %s367, 16
          %s369 = scalar_lea.vmem %s5, %s368
        $region48: #{tpu_custom_call.1} parent=27 // pred_fallthru
          _
        // Predicated region
        $region49: #{tpu_custom_call.1} parent=27 // pred_check
          %p370 = pneg %p202
        $region50: #{tpu_custom_call.1} parent=27 // pred_check_branch
          %372 = sbr.rel (%p370) target = $region52
        $region51: #{tpu_custom_call.1} parent=27 // pred_region
          %p373 = scmp.lt.s32.totalorder %s27, 1
          %s374 = scalar_select %p373, %s27, 1
          %s375 = smul.addr %s374, 256
          %s376 = smul.addr %s375, 4
          %s377 = scalar_lea.vmem %s6, %s376
        $region52: #{tpu_custom_call.1} parent=27 // pred_fallthru
          _
        // Predicated region
        $region53: #{tpu_custom_call.1} parent=27 // pred_check
          %p378 = pneg %p228
        $region54: #{tpu_custom_call.1} parent=27 // pred_check_branch
          %380 = sbr.rel (%p378) target = $region56
        $region55: #{tpu_custom_call.1} parent=27 // pred_region
          %p381 = scmp.lt.s32.totalorder %s27, 1
          %s382 = scalar_select %p381, %s27, 1
          %s383 = smul.addr %s382, 2
          %s384 = smul.addr %s383, 8
          %s385 = scalar_lea.vmem %s7, %s384
        $region56: #{tpu_custom_call.1} parent=27 // pred_fallthru
          _
      $region28: #{tpu_custom_call.1} parent=5 // pred_fallthru
        _
      %p386 = scmp.le.s32.totalorder 1, %s19
      %p387 = scmp.lt.s32.totalorder %s19, 5
      %p388 = pnand %p386, %p387
      %p389 = pneg %p388
      // Predicated region
      $region57: #{tpu_custom_call.1} parent=5 // pred_check
        _
      $region58: #{tpu_custom_call.1} parent=5 // pred_check_branch
        %391 = sbr.rel (%p388) target = $region60
      $region59: #{tpu_custom_call.1} parent=5 // pred_region
        %s392 = ssub.s32 %s19, 1
        %s393 = smul.u32 2, %s28
        %p394 = scmp.lt.s32.totalorder %s393, 3
        %s395 = scalar_select %p394, %s393, 3
        %s396 = smul.addr %s395, 8
        %s397 = scalar_lea.vmem %s0, %s396
        %p398 = pneg %p57
        %p399 = pneg %p54
        %p400 = pneg %p78
        %p401 = pneg %p75
        %p402 = scmp.lt.s32.totalorder %s29, 1
        %s403 = scalar_select %p402, %s29, 1
        %s404 = smul.addr %s403, 12
        %s405 = smul.addr %s404, 4
        %s406 = scalar_lea.vmem %s2, %s405
        %p407 = pneg %p104
        %p408 = pneg %p101
        %p409 = scmp.lt.s32.totalorder %s29, 1
        %s410 = scalar_select %p409, %s29, 1
        %s411 = smul.addr %s410, 4
        %s412 = smul.addr %s411, 4
        %s413 = scalar_lea.vmem %s3, %s412
        %p414 = pneg %p130
        %p415 = pneg %p127
        %p416 = scmp.lt.s32.totalorder %s29, 1
        %s417 = scalar_select %p416, %s29, 1
        %s418 = smul.addr %s417, 64
        %s419 = smul.addr %s418, 4
        %s420 = scalar_lea.vmem %s4, %s419
        %p421 = pneg %p156
        %p422 = pneg %p153
        %p423 = scmp.lt.s32.totalorder %s29, 1
        %s424 = scalar_select %p423, %s29, 1
        %s425 = smul.addr %s424, 16
        %s426 = scalar_lea.vmem %s5, %s425
        %p427 = pneg %p182
        %p428 = pneg %p179
        %p429 = scmp.lt.s32.totalorder %s29, 1
        %s430 = scalar_select %p429, %s29, 1
        %s431 = smul.addr %s430, 256
        %s432 = smul.addr %s431, 4
        %s433 = scalar_lea.vmem %s6, %s432
        %p434 = pneg %p208
        %p435 = pneg %p205
        %p436 = scmp.lt.s32.totalorder %s29, 1
        %s437 = scalar_select %p436, %s29, 1
        %s438 = smul.addr %s437, 2
        %s439 = smul.addr %s438, 8
        %s440 = scalar_lea.vmem %s7, %s439
        %p441 = pneg %p234
        %p442 = pneg %p231
        %p443 = pneg %p255
        %p444 = pneg %p252
        %p445 = pneg %p276
        %p446 = pneg %p273
        %p447 = pneg %p302
        %p448 = pneg %p299
        %s449 = sand.u32 %s289, 1
        %s450 = scalar_lea.sflag [#allocation4], %s449
        %s451 = sand.u32 %s289, 1
        %s452 = smul.addr %s451, 16
        %s453 = scalar_lea.vmem [#allocation3], %s452
        %s454 = smul.u32 2, %s28
        %p455 = scmp.lt.s32.totalorder %s454, 3
        %s456 = scalar_select %p455, %s454, 3
        %s457 = smul.addr %s456, 8
        %s458 = scalar_lea.vmem %s0, %s457
        %s459 = smul.u32 2, %s28
        %p460 = scmp.lt.s32.totalorder %s29, 1
        %s461 = scalar_select %p460, %s29, 1
        %s462 = smul.addr %s461, 12
        %s463 = smul.addr %s462, 4
        %s464 = scalar_lea.vmem %s2, %s463
        %p465 = scmp.lt.s32.totalorder %s29, 1
        %s466 = scalar_select %p465, %s29, 1
        %s467 = smul.addr %s466, 4
        %s468 = smul.addr %s467, 4
        %s469 = scalar_lea.vmem %s3, %s468
        %p470 = scmp.lt.s32.totalorder %s29, 1
        %s471 = scalar_select %p470, %s29, 1
        %s472 = smul.addr %s471, 64
        %s473 = smul.addr %s472, 4
        %s474 = scalar_lea.vmem %s4, %s473
        %p475 = scmp.lt.s32.totalorder %s29, 1
        %s476 = scalar_select %p475, %s29, 1
        %s477 = smul.addr %s476, 16
        %s478 = scalar_lea.vmem %s5, %s477
        %p479 = scmp.lt.s32.totalorder %s29, 1
        %s480 = scalar_select %p479, %s29, 1
        %s481 = smul.addr %s480, 256
        %s482 = smul.addr %s481, 4
        %s483 = scalar_lea.vmem %s6, %s482
        %p484 = scmp.lt.s32.totalorder %s29, 1
        %s485 = scalar_select %p484, %s29, 1
        %s486 = smul.addr %s485, 2
        %s487 = smul.addr %s486, 8
        %s488 = scalar_lea.vmem %s7, %s487
        %s489 = smul.u32 2, %s28
        %p491 = scmp.eq.s32.totalorder %s29, 0
        // Predicated region
        $region61: #{tpu_custom_call.1} parent=59 // pred_check
          %p492 = pneg %p491
        $region62: #{tpu_custom_call.1} parent=59 // pred_check_branch
          %494 = sbr.rel (%p492) target = $region64
        $region63: #{tpu_custom_call.1} parent=59 // pred_region
          %v495 = vld [vmem:[%s458] sm:$0xff]
          %v496 = vld [vmem:[%s458 + $0x8] sm:$0xff]
          %v497 = vlaneseq
          %v498 = vand.u32 %v497, 127
          %499 = vset.pattern.permute.xlu0 0
          %500 = vperm.xlu0 %499, %v495
          %v501 = vpop.permute.xlu0 %500
          %502 = vset.pattern.permute.xlu0 0
          %503 = vperm.xlu0 %502, %v496
          %v504 = vpop.permute.xlu0 %503
          %vm505 = vcmp.eq.s32.totalorder %v501, %v498
          %vm506 = vcmp.eq.s32.totalorder %v504, %v498
          %v507 = vsel %vm505, 1, 0
          %v508 = vsel %vm506, 1, 0
          %v509 = vcvt.s32.f32 %v507
          %v510 = vcvt.s32.f32 %v508
          %v511 = vld [vmem:[%s1] sm:$0xff]
          %v512 = vld [vmem:[%s1 + $0x8] sm:$0xff]
          %v513 = vld [vmem:[%s1 + $0x10] sm:$0xff]
          %v514 = vld [vmem:[%s1 + $0x18] sm:$0x3]
          %vm515 = vcmask 211968
          %v517 = vsel %vm515, %v509, 0
          %v520 = vsel %vm515, %v510, 0
          %vm522 = vcmask 1041408
          %v524 = vsel %vm522, %v514, 0
          %526 = vmatprep.subr.mxu0 0.0
          %527 = vmatpush1.msra.mxu0 %v511
          %528 = vmatprep.subr.mxu0 0.0
          %529 = vmatpush1.msra.mxu0 %v512
          %530 = vmatprep.subr.mxu0 0.0
          %531 = vmatpush1.msra.mxu0 %v513
          %532 = vmatprep.subr.mxu0 0.0
          %533 = vmatpush1.msra.mxu0 %v524
          %534 = vmatprep.subr.mxu0 0.0
          %535 = vmatpush1.msra.mxu0 0.0
          %536 = vmatprep.subr.mxu0 0.0
          %537 = vmatpush1.msra.mxu0 0.0
          %538 = vmatprep.subr.mxu0 0.0
          %539 = vmatpush1.msra.mxu0 0.0
          %540 = vmatprep.subr.mxu0 0.0
          %541 = vmatpush1.msra.mxu0 0.0
          %542 = vmatprep.subr.mxu0 0.0
          %543 = vmatpush1.msra.mxu0 0.0
          %544 = vmatprep.subr.mxu0 0.0
          %545 = vmatpush1.msra.mxu0 0.0
          %546 = vmatprep.subr.mxu0 0.0
          %547 = vmatpush1.msra.mxu0 0.0
          %548 = vmatprep.subr.mxu0 0.0
          %549 = vmatpush1.msra.mxu0 0.0
          %550 = vmatprep.subr.mxu0 0.0
          %551 = vmatpush1.msra.mxu0 0.0
          %552 = vmatprep.subr.mxu0 0.0
          %553 = vmatpush1.msra.mxu0 0.0
          %554 = vmatprep.subr.mxu0 0.0
          %555 = vmatpush1.msra.mxu0 0.0
          %556 = vmatprep.subr.mxu0 0.0
          %557 = vmatpush1.msra.mxu0 0.0
          %558 = vmatprep.subr.mxu0 0.0
          %559 = vmatpush1.msra.mxu0 0.0
          %560 = vmatprep.subr.mxu0 0.0
          %561 = vmatpush1.msra.mxu0 0.0
          %562 = vmatprep.subr.mxu0 0.0
          %563 = vmatpush1.msra.mxu0 0.0
          %564 = vmatprep.subr.mxu0 0.0
          %565 = vmatpush1.msra.mxu0 0.0
          %566 = vmatprep.subr.mxu0 0.0
          %567 = vmatpush1.msra.mxu0 0.0
          %568 = vmatprep.subr.mxu0 0.0
          %569 = vmatpush1.msra.mxu0 0.0
          %570 = vmatprep.subr.mxu0 0.0
          %571 = vmatpush1.msra.mxu0 0.0
          %572 = vmatprep.subr.mxu0 0.0
          %573 = vmatpush1.msra.mxu0 0.0
          %574 = vmatprep.subr.mxu0 0.0
          %575 = vmatpush1.msra.mxu0 0.0
          %576 = vmatprep.subr.mxu0 0.0
          %577 = vmatpush1.msra.mxu0 0.0
          %578 = vmatprep.subr.mxu0 0.0
          %579 = vmatpush1.msra.mxu0 0.0
          %580 = vmatprep.subr.mxu0 0.0
          %581 = vmatpush1.msra.mxu0 0.0
          %582 = vmatprep.subr.mxu0 0.0
          %583 = vmatpush1.msra.mxu0 0.0
          %584 = vmatprep.subr.mxu0 0.0
          %585 = vmatpush1.msra.mxu0 0.0
          %586 = vmatprep.subr.mxu0 0.0
          %587 = vmatpush1.msra.mxu0 0.0
          %588 = vmatprep.subr.mxu0 0.0
          %589 = vmatpush1.msra.mxu0 0.0
          %590 = vmatprep.mubr.f32.mxu0 0.0
          %591 = vmatmul.mubr.f32.gmra.mrb[0].mxu0 %v517
          %v592 = vpop.f32.mrb[0].mxu0
          %v593 = vadd.f32 0.0, %v592
          %v594 = vpop.f32.mrb[0].mxu0
          %595 = vmatprep.mubr.f32.mxu0 0.0
          %596 = vmatmul.mubr.f32.gmra.mrb[0].mxu0 %v520
          %v597 = vpop.f32.mrb[0].mxu0
          %v598 = vadd.f32 0.0, %v597
          %v599 = vpop.f32.mrb[0].mxu0
          %600 = vdwg.mxu0
          %vm601 = vcmask 261120
          %602 = vst.msk [vmem:[#allocation2] sm:$0xff] %vm601, %v593
          %603 = vst.msk [vmem:[#allocation2 + $0x8] sm:$0xff] %vm601, %v598
        $region64: #{tpu_custom_call.1} parent=59 // pred_fallthru
          _
        %v604 = vld [vmem:[#allocation2] sm:$0xff]
        %v605 = vld [vmem:[#allocation2 + $0x8] sm:$0xff]
        %v606 = vld [vmem:[%s488] sm:$0xff]
        %v607 = vld [vmem:[%s488 + $0x8] sm:$0x1]
        %v608 = vpack.c.bf16 %v605, %v604
        %v609 = vld [vmem:[%s464] sm:$0xf]
        %v610 = vld [vmem:[%s464 + $0x4] sm:$0xf]
        %v611 = vld [vmem:[%s464 + $0x8] sm:$0xf]
        %v612 = vld [vmem:[%s464 + $0xc] sm:$0xf]
        %v613 = vlaneseq
        %v614 = vshrl.u32 %v613, 7
        %v615 = vsub.s32 0, %v614
        %v616 = vrot.slane %v606, %v615
        %v621 = vunpack.c.l.b16 %v609
        %v622 = vunpack.c.l.b16 %v610
        %v623 = vunpack.c.l.b16 %v611
        %v624 = vunpack.c.l.b16 %v612
        %v625 = vpack.c.b16 %v622, %v621
        %v626 = vpack.c.b16 %v624, %v623
        %vm629 = vcmask 261120
        %v631 = vsel %vm629, %v608, 0
        %633 = vmatprep.subr.bf16.mxu0 0
        %634 = vmatpush1.bf16.msra.mxu0 %v625
        %635 = vmatprep.subr.bf16.mxu0 0
        %636 = vmatpush1.bf16.msra.mxu0 %v626
        %637 = vmatprep.subr.bf16.mxu0 0
        %638 = vmatpush1.bf16.msra.mxu0 0
        %639 = vmatprep.subr.bf16.mxu0 0
        %640 = vmatpush1.bf16.msra.mxu0 0
        %641 = vmatprep.subr.bf16.mxu0 0
        %642 = vmatpush1.bf16.msra.mxu0 0
        %643 = vmatprep.subr.bf16.mxu0 0
        %644 = vmatpush1.bf16.msra.mxu0 0
        %645 = vmatprep.subr.bf16.mxu0 0
        %646 = vmatpush1.bf16.msra.mxu0 0
        %647 = vmatprep.subr.bf16.mxu0 0
        %648 = vmatpush1.bf16.msra.mxu0 0
        %649 = vmatprep.subr.bf16.mxu0 0
        %650 = vmatpush1.bf16.msra.mxu0 0
        %651 = vmatprep.subr.bf16.mxu0 0
        %652 = vmatpush1.bf16.msra.mxu0 0
        %653 = vmatprep.subr.bf16.mxu0 0
        %654 = vmatpush1.bf16.msra.mxu0 0
        %655 = vmatprep.subr.bf16.mxu0 0
        %656 = vmatpush1.bf16.msra.mxu0 0
        %657 = vmatprep.subr.bf16.mxu0 0
        %658 = vmatpush1.bf16.msra.mxu0 0
        %659 = vmatprep.subr.bf16.mxu0 0
        %660 = vmatpush1.bf16.msra.mxu0 0
        %661 = vmatprep.subr.bf16.mxu0 0
        %662 = vmatpush1.bf16.msra.mxu0 0
        %663 = vmatprep.subr.bf16.mxu0 0
        %664 = vmatpush1.bf16.msra.mxu0 0
        %665 = vmatprep.mubr.bf16.mxu0 0
        %666 = vmatmul.mubr.bf16.gmra.mrb[0].mxu0 %v631
        %v667 = vpop.f32.mrb[0].mxu0
        %v668 = vadd.f32 %v616, %v667
        %v669 = vpop.f32.mrb[0].mxu0
        %v670 = vpop.f32.mrb[0].mxu0
        %v671 = vadd.f32 %v616, %v670
        %v672 = vpop.f32.mrb[0].mxu0
        %673 = vdwg.mxu0
        %v674 = vmul.f32 %v668, 0.35355338
        %v675 = vmul.f32 %v671, 0.35355338
        %s676 = scalar_lea.vmem %s464, 16
        %v677 = vld [vmem:[%s676] sm:$0xf]
        %v678 = vld [vmem:[%s676 + $0x4] sm:$0xf]
        %v679 = vld [vmem:[%s676 + $0x8] sm:$0xf]
        %v680 = vld [vmem:[%s676 + $0xc] sm:$0xf]
        %v681 = vlaneseq
        %v682 = vshrl.u32 %v681, 7
        %v683 = vsub.s32 1, %v682
        %v684 = vrot.slane %v606, %v683
        %v689 = vunpack.c.l.b16 %v677
        %v690 = vunpack.c.l.b16 %v678
        %v691 = vunpack.c.l.b16 %v679
        %v692 = vunpack.c.l.b16 %v680
        %v693 = vpack.c.b16 %v690, %v689
        %v694 = vpack.c.b16 %v692, %v691
        %697 = vmatprep.subr.bf16.mxu0 0
        %698 = vmatpush1.bf16.msra.mxu0 %v693
        %699 = vmatprep.subr.bf16.mxu0 0
        %700 = vmatpush1.bf16.msra.mxu0 %v694
        %701 = vmatprep.subr.bf16.mxu0 0
        %702 = vmatpush1.bf16.msra.mxu0 0
        %703 = vmatprep.subr.bf16.mxu0 0
        %704 = vmatpush1.bf16.msra.mxu0 0
        %705 = vmatprep.subr.bf16.mxu0 0
        %706 = vmatpush1.bf16.msra.mxu0 0
        %707 = vmatprep.subr.bf16.mxu0 0
        %708 = vmatpush1.bf16.msra.mxu0 0
        %709 = vmatprep.subr.bf16.mxu0 0
        %710 = vmatpush1.bf16.msra.mxu0 0
        %711 = vmatprep.subr.bf16.mxu0 0
        %712 = vmatpush1.bf16.msra.mxu0 0
        %713 = vmatprep.subr.bf16.mxu0 0
        %714 = vmatpush1.bf16.msra.mxu0 0
        %715 = vmatprep.subr.bf16.mxu0 0
        %716 = vmatpush1.bf16.msra.mxu0 0
        %717 = vmatprep.subr.bf16.mxu0 0
        %718 = vmatpush1.bf16.msra.mxu0 0
        %719 = vmatprep.subr.bf16.mxu0 0
        %720 = vmatpush1.bf16.msra.mxu0 0
        %721 = vmatprep.subr.bf16.mxu0 0
        %722 = vmatpush1.bf16.msra.mxu0 0
        %723 = vmatprep.subr.bf16.mxu0 0
        %724 = vmatpush1.bf16.msra.mxu0 0
        %725 = vmatprep.subr.bf16.mxu0 0
        %726 = vmatpush1.bf16.msra.mxu0 0
        %727 = vmatprep.subr.bf16.mxu0 0
        %728 = vmatpush1.bf16.msra.mxu0 0
        %729 = vmatprep.mubr.bf16.mxu0 0
        %730 = vmatmul.mubr.bf16.gmra.mrb[0].mxu0 %v631
        %v731 = vpop.f32.mrb[0].mxu0
        %v732 = vadd.f32 %v684, %v731
        %v733 = vpop.f32.mrb[0].mxu0
        %v734 = vpop.f32.mrb[0].mxu0
        %v735 = vadd.f32 %v684, %v734
        %v736 = vpop.f32.mrb[0].mxu0
        %737 = vdwg.mxu0
        %s738 = scalar_lea.vmem %s464, 32
        %v739 = vld [vmem:[%s738] sm:$0xf]
        %v740 = vld [vmem:[%s738 + $0x4] sm:$0xf]
        %v741 = vld [vmem:[%s738 + $0x8] sm:$0xf]
        %v742 = vld [vmem:[%s738 + $0xc] sm:$0xf]
        %v743 = vlaneseq
        %v744 = vshrl.u32 %v743, 7
        %v745 = vsub.s32 2, %v744
        %v746 = vrot.slane %v606, %v745
        %v751 = vunpack.c.l.b16 %v739
        %v752 = vunpack.c.l.b16 %v740
        %v753 = vunpack.c.l.b16 %v741
        %v754 = vunpack.c.l.b16 %v742
        %v755 = vpack.c.b16 %v752, %v751
        %v756 = vpack.c.b16 %v754, %v753
        %759 = vmatprep.subr.bf16.mxu0 0
        %760 = vmatpush1.bf16.msra.mxu0 %v755
        %761 = vmatprep.subr.bf16.mxu0 0
        %762 = vmatpush1.bf16.msra.mxu0 %v756
        %763 = vmatprep.subr.bf16.mxu0 0
        %764 = vmatpush1.bf16.msra.mxu0 0
        %765 = vmatprep.subr.bf16.mxu0 0
        %766 = vmatpush1.bf16.msra.mxu0 0
        %767 = vmatprep.subr.bf16.mxu0 0
        %768 = vmatpush1.bf16.msra.mxu0 0
        %769 = vmatprep.subr.bf16.mxu0 0
        %770 = vmatpush1.bf16.msra.mxu0 0
        %771 = vmatprep.subr.bf16.mxu0 0
        %772 = vmatpush1.bf16.msra.mxu0 0
        %773 = vmatprep.subr.bf16.mxu0 0
        %774 = vmatpush1.bf16.msra.mxu0 0
        %775 = vmatprep.subr.bf16.mxu0 0
        %776 = vmatpush1.bf16.msra.mxu0 0
        %777 = vmatprep.subr.bf16.mxu0 0
        %778 = vmatpush1.bf16.msra.mxu0 0
        %779 = vmatprep.subr.bf16.mxu0 0
        %780 = vmatpush1.bf16.msra.mxu0 0
        %781 = vmatprep.subr.bf16.mxu0 0
        %782 = vmatpush1.bf16.msra.mxu0 0
        %783 = vmatprep.subr.bf16.mxu0 0
        %784 = vmatpush1.bf16.msra.mxu0 0
        %785 = vmatprep.subr.bf16.mxu0 0
        %786 = vmatpush1.bf16.msra.mxu0 0
        %787 = vmatprep.subr.bf16.mxu0 0
        %788 = vmatpush1.bf16.msra.mxu0 0
        %789 = vmatprep.subr.bf16.mxu0 0
        %790 = vmatpush1.bf16.msra.mxu0 0
        %791 = vmatprep.mubr.bf16.mxu0 0
        %792 = vmatmul.mubr.bf16.gmra.mrb[0].mxu0 %v631
        %v793 = vpop.f32.mrb[0].mxu0
        %v794 = vadd.f32 %v746, %v793
        %v795 = vpop.f32.mrb[0].mxu0
        %v796 = vpop.f32.mrb[0].mxu0
        %v797 = vadd.f32 %v746, %v796
        %v798 = vpop.f32.mrb[0].mxu0
        %799 = vdwg.mxu0
        %vm800 = vcmask 64512
        %v802 = vsel %vm800, %v674, 0
        %v805 = vsel %vm800, %v732, 0
        %807 = vmatprep.subr.mxu0 0.0
        %808 = vmatpush1.xpose.msra.mxu0 %v805
        %809 = vmatprep.subr.mxu0 0.0
        %810 = vmatpush1.xpose.msra.mxu0 0.0
        %811 = vmatprep.subr.mxu0 0.0
        %812 = vmatpush1.xpose.msra.mxu0 0.0
        %813 = vmatprep.subr.mxu0 0.0
        %814 = vmatpush1.xpose.msra.mxu0 0.0
        %815 = vmatprep.subr.mxu0 0.0
        %816 = vmatpush1.xpose.msra.mxu0 0.0
        %817 = vmatprep.subr.mxu0 0.0
        %818 = vmatpush1.xpose.msra.mxu0 0.0
        %819 = vmatprep.subr.mxu0 0.0
        %820 = vmatpush1.xpose.msra.mxu0 0.0
        %821 = vmatprep.subr.mxu0 0.0
        %822 = vmatpush1.xpose.msra.mxu0 0.0
        %823 = vmatprep.subr.mxu0 0.0
        %824 = vmatpush1.xpose.msra.mxu0 0.0
        %825 = vmatprep.subr.mxu0 0.0
        %826 = vmatpush1.xpose.msra.mxu0 0.0
        %827 = vmatprep.subr.mxu0 0.0
        %828 = vmatpush1.xpose.msra.mxu0 0.0
        %829 = vmatprep.subr.mxu0 0.0
        %830 = vmatpush1.xpose.msra.mxu0 0.0
        %831 = vmatprep.subr.mxu0 0.0
        %832 = vmatpush1.xpose.msra.mxu0 0.0
        %833 = vmatprep.subr.mxu0 0.0
        %834 = vmatpush1.xpose.msra.mxu0 0.0
        %835 = vmatprep.subr.mxu0 0.0
        %836 = vmatpush1.xpose.msra.mxu0 0.0
        %837 = vmatprep.subr.mxu0 0.0
        %838 = vmatpush1.xpose.msra.mxu0 0.0
        %839 = vmatprep.subr.mxu0 0.0
        %840 = vmatpush1.xpose.msra.mxu0 0.0
        %841 = vmatprep.subr.mxu0 0.0
        %842 = vmatpush1.xpose.msra.mxu0 0.0
        %843 = vmatprep.subr.mxu0 0.0
        %844 = vmatpush1.xpose.msra.mxu0 0.0
        %845 = vmatprep.subr.mxu0 0.0
        %846 = vmatpush1.xpose.msra.mxu0 0.0
        %847 = vmatprep.subr.mxu0 0.0
        %848 = vmatpush1.xpose.msra.mxu0 0.0
        %849 = vmatprep.subr.mxu0 0.0
        %850 = vmatpush1.xpose.msra.mxu0 0.0
        %851 = vmatprep.subr.mxu0 0.0
        %852 = vmatpush1.xpose.msra.mxu0 0.0
        %853 = vmatprep.subr.mxu0 0.0
        %854 = vmatpush1.xpose.msra.mxu0 0.0
        %855 = vmatprep.subr.mxu0 0.0
        %856 = vmatpush1.xpose.msra.mxu0 0.0
        %857 = vmatprep.subr.mxu0 0.0
        %858 = vmatpush1.xpose.msra.mxu0 0.0
        %859 = vmatprep.subr.mxu0 0.0
        %860 = vmatpush1.xpose.msra.mxu0 0.0
        %861 = vmatprep.subr.mxu0 0.0
        %862 = vmatpush1.xpose.msra.mxu0 0.0
        %863 = vmatprep.subr.mxu0 0.0
        %864 = vmatpush1.xpose.msra.mxu0 0.0
        %865 = vmatprep.subr.mxu0 0.0
        %866 = vmatpush1.xpose.msra.mxu0 0.0
        %867 = vmatprep.subr.mxu0 0.0
        %868 = vmatpush1.xpose.msra.mxu0 0.0
        %869 = vmatprep.subr.mxu0 0.0
        %870 = vmatpush1.xpose.msra.mxu0 0.0
        %871 = vmatprep.mubr.f32.mxu0 0.0
        %872 = vmatmul.mubr.f32.gmra.mrb[0].mxu0 %v802
        %v873 = vpop.f32.mrb[0].mxu0
        %v874 = vadd.f32 0.0, %v873
        %v875 = vpop.f32.mrb[0].mxu0
        %876 = vdwg.mxu0
        %v878 = vsel %vm800, %v675, 0
        %v881 = vsel %vm800, %v735, 0
        %883 = vmatprep.subr.mxu0 0.0
        %884 = vmatpush1.xpose.msra.mxu0 %v881
        %885 = vmatprep.subr.mxu0 0.0
        %886 = vmatpush1.xpose.msra.mxu0 0.0
        %887 = vmatprep.subr.mxu0 0.0
        %888 = vmatpush1.xpose.msra.mxu0 0.0
        %889 = vmatprep.subr.mxu0 0.0
        %890 = vmatpush1.xpose.msra.mxu0 0.0
        %891 = vmatprep.subr.mxu0 0.0
        %892 = vmatpush1.xpose.msra.mxu0 0.0
        %893 = vmatprep.subr.mxu0 0.0
        %894 = vmatpush1.xpose.msra.mxu0 0.0
        %895 = vmatprep.subr.mxu0 0.0
        %896 = vmatpush1.xpose.msra.mxu0 0.0
        %897 = vmatprep.subr.mxu0 0.0
        %898 = vmatpush1.xpose.msra.mxu0 0.0
        %899 = vmatprep.subr.mxu0 0.0
        %900 = vmatpush1.xpose.msra.mxu0 0.0
        %901 = vmatprep.subr.mxu0 0.0
        %902 = vmatpush1.xpose.msra.mxu0 0.0
        %903 = vmatprep.subr.mxu0 0.0
        %904 = vmatpush1.xpose.msra.mxu0 0.0
        %905 = vmatprep.subr.mxu0 0.0
        %906 = vmatpush1.xpose.msra.mxu0 0.0
        %907 = vmatprep.subr.mxu0 0.0
        %908 = vmatpush1.xpose.msra.mxu0 0.0
        %909 = vmatprep.subr.mxu0 0.0
        %910 = vmatpush1.xpose.msra.mxu0 0.0
        %911 = vmatprep.subr.mxu0 0.0
        %912 = vmatpush1.xpose.msra.mxu0 0.0
        %913 = vmatprep.subr.mxu0 0.0
        %914 = vmatpush1.xpose.msra.mxu0 0.0
        %915 = vmatprep.subr.mxu0 0.0
        %916 = vmatpush1.xpose.msra.mxu0 0.0
        %917 = vmatprep.subr.mxu0 0.0
        %918 = vmatpush1.xpose.msra.mxu0 0.0
        %919 = vmatprep.subr.mxu0 0.0
        %920 = vmatpush1.xpose.msra.mxu0 0.0
        %921 = vmatprep.subr.mxu0 0.0
        %922 = vmatpush1.xpose.msra.mxu0 0.0
        %923 = vmatprep.subr.mxu0 0.0
        %924 = vmatpush1.xpose.msra.mxu0 0.0
        %925 = vmatprep.subr.mxu0 0.0
        %926 = vmatpush1.xpose.msra.mxu0 0.0
        %927 = vmatprep.subr.mxu0 0.0
        %928 = vmatpush1.xpose.msra.mxu0 0.0
        %929 = vmatprep.subr.mxu0 0.0
        %930 = vmatpush1.xpose.msra.mxu0 0.0
        %931 = vmatprep.subr.mxu0 0.0
        %932 = vmatpush1.xpose.msra.mxu0 0.0
        %933 = vmatprep.subr.mxu0 0.0
        %934 = vmatpush1.xpose.msra.mxu0 0.0
        %935 = vmatprep.subr.mxu0 0.0
        %936 = vmatpush1.xpose.msra.mxu0 0.0
        %937 = vmatprep.subr.mxu0 0.0
        %938 = vmatpush1.xpose.msra.mxu0 0.0
        %939 = vmatprep.subr.mxu0 0.0
        %940 = vmatpush1.xpose.msra.mxu0 0.0
        %941 = vmatprep.subr.mxu0 0.0
        %942 = vmatpush1.xpose.msra.mxu0 0.0
        %943 = vmatprep.subr.mxu0 0.0
        %944 = vmatpush1.xpose.msra.mxu0 0.0
        %945 = vmatprep.subr.mxu0 0.0
        %946 = vmatpush1.xpose.msra.mxu0 0.0
        %947 = vmatprep.mubr.f32.mxu0 0.0
        %948 = vmatmul.mubr.f32.gmra.mrb[0].mxu0 %v878
        %v949 = vpop.f32.mrb[0].mxu0
        %v950 = vadd.f32 0.0, %v949
        %v951 = vpop.f32.mrb[0].mxu0
        %952 = vdwg.mxu0
        %v953 = vsel %vm800, %v874, -inf
        %954 = vmax.xlane.f32.xlu0 %v953
        %v955 = vpop.xlane.xlu0 %954
        %v956 = vsel %vm800, %v950, -inf
        %957 = vmax.xlane.f32.xlu0 %v956
        %v958 = vpop.xlane.xlu0 %957
        %v959 = vsub.f32 %v874, %v955
        %v960 = vsub.f32 %v950, %v958
        %v961 = vmul.f32 %v959, 1.442695
        %v962 = vpow.pop %v961
        %v963 = vmul.f32 %v960, 1.442695
        %v964 = vpow.pop %v963
        %v965 = vsel %vm800, %v962, 0.0
        %966 = vadd.xlane.f32.xlu0 %v965
        %v967 = vpop.xlane.xlu0 %966
        %v968 = vsel %vm800, %v964, 0.0
        %969 = vadd.xlane.f32.xlu0 %v968
        %v970 = vpop.xlane.xlu0 %969
        %v971 = vrcp.pop %v967
        %v972 = vrcp.pop %v970
        %v973 = vmul.f32 %v962, %v971
        %v974 = vmul.f32 %v964, %v972
        %v976 = vsel %vm800, %v973, 0
        %978 = vmatprep.subr.mxu0 0.0
        %979 = vmatpush1.msra.mxu0 %v794
        %980 = vmatprep.subr.mxu0 0.0
        %981 = vmatpush1.msra.mxu0 0.0
        %982 = vmatprep.subr.mxu0 0.0
        %983 = vmatpush1.msra.mxu0 0.0
        %984 = vmatprep.subr.mxu0 0.0
        %985 = vmatpush1.msra.mxu0 0.0
        %986 = vmatprep.subr.mxu0 0.0
        %987 = vmatpush1.msra.mxu0 0.0
        %988 = vmatprep.subr.mxu0 0.0
        %989 = vmatpush1.msra.mxu0 0.0
        %990 = vmatprep.subr.mxu0 0.0
        %991 = vmatpush1.msra.mxu0 0.0
        %992 = vmatprep.subr.mxu0 0.0
        %993 = vmatpush1.msra.mxu0 0.0
        %994 = vmatprep.subr.mxu0 0.0
        %995 = vmatpush1.msra.mxu0 0.0
        %996 = vmatprep.subr.mxu0 0.0
        %997 = vmatpush1.msra.mxu0 0.0
        %998 = vmatprep.subr.mxu0 0.0
        %999 = vmatpush1.msra.mxu0 0.0
        %1000 = vmatprep.subr.mxu0 0.0
        %1001 = vmatpush1.msra.mxu0 0.0
        %1002 = vmatprep.subr.mxu0 0.0
        %1003 = vmatpush1.msra.mxu0 0.0
        %1004 = vmatprep.subr.mxu0 0.0
        %1005 = vmatpush1.msra.mxu0 0.0
        %1006 = vmatprep.subr.mxu0 0.0
        %1007 = vmatpush1.msra.mxu0 0.0
        %1008 = vmatprep.subr.mxu0 0.0
        %1009 = vmatpush1.msra.mxu0 0.0
        %1010 = vmatprep.subr.mxu0 0.0
        %1011 = vmatpush1.msra.mxu0 0.0
        %1012 = vmatprep.subr.mxu0 0.0
        %1013 = vmatpush1.msra.mxu0 0.0
        %1014 = vmatprep.subr.mxu0 0.0
        %1015 = vmatpush1.msra.mxu0 0.0
        %1016 = vmatprep.subr.mxu0 0.0
        %1017 = vmatpush1.msra.mxu0 0.0
        %1018 = vmatprep.subr.mxu0 0.0
        %1019 = vmatpush1.msra.mxu0 0.0
        %1020 = vmatprep.subr.mxu0 0.0
        %1021 = vmatpush1.msra.mxu0 0.0
        %1022 = vmatprep.subr.mxu0 0.0
        %1023 = vmatpush1.msra.mxu0 0.0
        %1024 = vmatprep.subr.mxu0 0.0
        %1025 = vmatpush1.msra.mxu0 0.0
        %1026 = vmatprep.subr.mxu0 0.0
        %1027 = vmatpush1.msra.mxu0 0.0
        %1028 = vmatprep.subr.mxu0 0.0
        %1029 = vmatpush1.msra.mxu0 0.0
        %1030 = vmatprep.subr.mxu0 0.0
        %1031 = vmatpush1.msra.mxu0 0.0
        %1032 = vmatprep.subr.mxu0 0.0
        %1033 = vmatpush1.msra.mxu0 0.0
        %1034 = vmatprep.subr.mxu0 0.0
        %1035 = vmatpush1.msra.mxu0 0.0
        %1036 = vmatprep.subr.mxu0 0.0
        %1037 = vmatpush1.msra.mxu0 0.0
        %1038 = vmatprep.subr.mxu0 0.0
        %1039 = vmatpush1.msra.mxu0 0.0
        %1040 = vmatprep.subr.mxu0 0.0
        %1041 = vmatpush1.msra.mxu0 0.0
        %1042 = vmatprep.mubr.f32.mxu0 0.0
        %1043 = vmatmul.mubr.f32.gmra.mrb[0].mxu0 %v976
        %v1044 = vpop.f32.mrb[0].mxu0
        %v1045 = vadd.f32 0.0, %v1044
        %v1046 = vpop.f32.mrb[0].mxu0
        %1047 = vdwg.mxu0
        %v1049 = vsel %vm800, %v974, 0
        %1051 = vmatprep.subr.mxu0 0.0
        %1052 = vmatpush1.msra.mxu0 %v797
        %1053 = vmatprep.subr.mxu0 0.0
        %1054 = vmatpush1.msra.mxu0 0.0
        %1055 = vmatprep.subr.mxu0 0.0
        %1056 = vmatpush1.msra.mxu0 0.0
        %1057 = vmatprep.subr.mxu0 0.0
        %1058 = vmatpush1.msra.mxu0 0.0
        %1059 = vmatprep.subr.mxu0 0.0
        %1060 = vmatpush1.msra.mxu0 0.0
        %1061 = vmatprep.subr.mxu0 0.0
        %1062 = vmatpush1.msra.mxu0 0.0
        %1063 = vmatprep.subr.mxu0 0.0
        %1064 = vmatpush1.msra.mxu0 0.0
        %1065 = vmatprep.subr.mxu0 0.0
        %1066 = vmatpush1.msra.mxu0 0.0
        %1067 = vmatprep.subr.mxu0 0.0
        %1068 = vmatpush1.msra.mxu0 0.0
        %1069 = vmatprep.subr.mxu0 0.0
        %1070 = vmatpush1.msra.mxu0 0.0
        %1071 = vmatprep.subr.mxu0 0.0
        %1072 = vmatpush1.msra.mxu0 0.0
        %1073 = vmatprep.subr.mxu0 0.0
        %1074 = vmatpush1.msra.mxu0 0.0
        %1075 = vmatprep.subr.mxu0 0.0
        %1076 = vmatpush1.msra.mxu0 0.0
        %1077 = vmatprep.subr.mxu0 0.0
        %1078 = vmatpush1.msra.mxu0 0.0
        %1079 = vmatprep.subr.mxu0 0.0
        %1080 = vmatpush1.msra.mxu0 0.0
        %1081 = vmatprep.subr.mxu0 0.0
        %1082 = vmatpush1.msra.mxu0 0.0
        %1083 = vmatprep.subr.mxu0 0.0
        %1084 = vmatpush1.msra.mxu0 0.0
        %1085 = vmatprep.subr.mxu0 0.0
        %1086 = vmatpush1.msra.mxu0 0.0
        %1087 = vmatprep.subr.mxu0 0.0
        %1088 = vmatpush1.msra.mxu0 0.0
        %1089 = vmatprep.subr.mxu0 0.0
        %1090 = vmatpush1.msra.mxu0 0.0
        %1091 = vmatprep.subr.mxu0 0.0
        %1092 = vmatpush1.msra.mxu0 0.0
        %1093 = vmatprep.subr.mxu0 0.0
        %1094 = vmatpush1.msra.mxu0 0.0
        %1095 = vmatprep.subr.mxu0 0.0
        %1096 = vmatpush1.msra.mxu0 0.0
        %1097 = vmatprep.subr.mxu0 0.0
        %1098 = vmatpush1.msra.mxu0 0.0
        %1099 = vmatprep.subr.mxu0 0.0
        %1100 = vmatpush1.msra.mxu0 0.0
        %1101 = vmatprep.subr.mxu0 0.0
        %1102 = vmatpush1.msra.mxu0 0.0
        %1103 = vmatprep.subr.mxu0 0.0
        %1104 = vmatpush1.msra.mxu0 0.0
        %1105 = vmatprep.subr.mxu0 0.0
        %1106 = vmatpush1.msra.mxu0 0.0
        %1107 = vmatprep.subr.mxu0 0.0
        %1108 = vmatpush1.msra.mxu0 0.0
        %1109 = vmatprep.subr.mxu0 0.0
        %1110 = vmatpush1.msra.mxu0 0.0
        %1111 = vmatprep.subr.mxu0 0.0
        %1112 = vmatpush1.msra.mxu0 0.0
        %1113 = vmatprep.subr.mxu0 0.0
        %1114 = vmatpush1.msra.mxu0 0.0
        %1115 = vmatprep.mubr.f32.mxu0 0.0
        %1116 = vmatmul.mubr.f32.gmra.mrb[0].mxu0 %v1049
        %v1117 = vpop.f32.mrb[0].mxu0
        %v1118 = vadd.f32 0.0, %v1117
        %v1119 = vpop.f32.mrb[0].mxu0
        %1120 = vdwg.mxu0
        %1121 = vrot.lane.b32.xlu0 %v674, 120
        %v1122 = vpop.permute.xlu0 %1121
        %1123 = vrot.lane.b32.xlu0 %v732, 120
        %v1124 = vpop.permute.xlu0 %1123
        %v1125 = vsel %vm800, %v1122, 0
        %v1127 = vsel %vm800, %v1124, 0
        %1129 = vmatprep.subr.mxu0 0.0
        %1130 = vmatpush1.xpose.msra.mxu0 %v1127
        %1131 = vmatprep.subr.mxu0 0.0
        %1132 = vmatpush1.xpose.msra.mxu0 0.0
        %1133 = vmatprep.subr.mxu0 0.0
        %1134 = vmatpush1.xpose.msra.mxu0 0.0
        %1135 = vmatprep.subr.mxu0 0.0
        %1136 = vmatpush1.xpose.msra.mxu0 0.0
        %1137 = vmatprep.subr.mxu0 0.0
        %1138 = vmatpush1.xpose.msra.mxu0 0.0
        %1139 = vmatprep.subr.mxu0 0.0
        %1140 = vmatpush1.xpose.msra.mxu0 0.0
        %1141 = vmatprep.subr.mxu0 0.0
        %1142 = vmatpush1.xpose.msra.mxu0 0.0
        %1143 = vmatprep.subr.mxu0 0.0
        %1144 = vmatpush1.xpose.msra.mxu0 0.0
        %1145 = vmatprep.subr.mxu0 0.0
        %1146 = vmatpush1.xpose.msra.mxu0 0.0
        %1147 = vmatprep.subr.mxu0 0.0
        %1148 = vmatpush1.xpose.msra.mxu0 0.0
        %1149 = vmatprep.subr.mxu0 0.0
        %1150 = vmatpush1.xpose.msra.mxu0 0.0
        %1151 = vmatprep.subr.mxu0 0.0
        %1152 = vmatpush1.xpose.msra.mxu0 0.0
        %1153 = vmatprep.subr.mxu0 0.0
        %1154 = vmatpush1.xpose.msra.mxu0 0.0
        %1155 = vmatprep.subr.mxu0 0.0
        %1156 = vmatpush1.xpose.msra.mxu0 0.0
        %1157 = vmatprep.subr.mxu0 0.0
        %1158 = vmatpush1.xpose.msra.mxu0 0.0
        %1159 = vmatprep.subr.mxu0 0.0
        %1160 = vmatpush1.xpose.msra.mxu0 0.0
        %1161 = vmatprep.subr.mxu0 0.0
        %1162 = vmatpush1.xpose.msra.mxu0 0.0
        %1163 = vmatprep.subr.mxu0 0.0
        %1164 = vmatpush1.xpose.msra.mxu0 0.0
        %1165 = vmatprep.subr.mxu0 0.0
        %1166 = vmatpush1.xpose.msra.mxu0 0.0
        %1167 = vmatprep.subr.mxu0 0.0
        %1168 = vmatpush1.xpose.msra.mxu0 0.0
        %1169 = vmatprep.subr.mxu0 0.0
        %1170 = vmatpush1.xpose.msra.mxu0 0.0
        %1171 = vmatprep.subr.mxu0 0.0
        %1172 = vmatpush1.xpose.msra.mxu0 0.0
        %1173 = vmatprep.subr.mxu0 0.0
        %1174 = vmatpush1.xpose.msra.mxu0 0.0
        %1175 = vmatprep.subr.mxu0 0.0
        %1176 = vmatpush1.xpose.msra.mxu0 0.0
        %1177 = vmatprep.subr.mxu0 0.0
        %1178 = vmatpush1.xpose.msra.mxu0 0.0
        %1179 = vmatprep.subr.mxu0 0.0
        %1180 = vmatpush1.xpose.msra.mxu0 0.0
        %1181 = vmatprep.subr.mxu0 0.0
        %1182 = vmatpush1.xpose.msra.mxu0 0.0
        %1183 = vmatprep.subr.mxu0 0.0
        %1184 = vmatpush1.xpose.msra.mxu0 0.0
        %1185 = vmatprep.subr.mxu0 0.0
        %1186 = vmatpush1.xpose.msra.mxu0 0.0
        %1187 = vmatprep.subr.mxu0 0.0
        %1188 = vmatpush1.xpose.msra.mxu0 0.0
        %1189 = vmatprep.subr.mxu0 0.0
        %1190 = vmatpush1.xpose.msra.mxu0 0.0
        %1191 = vmatprep.subr.mxu0 0.0
        %1192 = vmatpush1.xpose.msra.mxu0 0.0
        %1193 = vmatprep.mubr.f32.mxu0 0.0
        %1194 = vmatmul.mubr.f32.gmra.mrb[0].mxu0 %v1125
        %v1195 = vpop.f32.mrb[0].mxu0
        %v1196 = vadd.f32 0.0, %v1195
        %v1197 = vpop.f32.mrb[0].mxu0
        %1198 = vdwg.mxu0
        %1199 = vrot.lane.b32.xlu0 %v675, 120
        %v1200 = vpop.permute.xlu0 %1199
        %1201 = vrot.lane.b32.xlu0 %v735, 120
        %v1202 = vpop.permute.xlu0 %1201
        %v1203 = vsel %vm800, %v1200, 0
        %v1205 = vsel %vm800, %v1202, 0
        %1207 = vmatprep.subr.mxu0 0.0
        %1208 = vmatpush1.xpose.msra.mxu0 %v1205
        %1209 = vmatprep.subr.mxu0 0.0
        %1210 = vmatpush1.xpose.msra.mxu0 0.0
        %1211 = vmatprep.subr.mxu0 0.0
        %1212 = vmatpush1.xpose.msra.mxu0 0.0
        %1213 = vmatprep.subr.mxu0 0.0
        %1214 = vmatpush1.xpose.msra.mxu0 0.0
        %1215 = vmatprep.subr.mxu0 0.0
        %1216 = vmatpush1.xpose.msra.mxu0 0.0
        %1217 = vmatprep.subr.mxu0 0.0
        %1218 = vmatpush1.xpose.msra.mxu0 0.0
        %1219 = vmatprep.subr.mxu0 0.0
        %1220 = vmatpush1.xpose.msra.mxu0 0.0
        %1221 = vmatprep.subr.mxu0 0.0
        %1222 = vmatpush1.xpose.msra.mxu0 0.0
        %1223 = vmatprep.subr.mxu0 0.0
        %1224 = vmatpush1.xpose.msra.mxu0 0.0
        %1225 = vmatprep.subr.mxu0 0.0
        %1226 = vmatpush1.xpose.msra.mxu0 0.0
        %1227 = vmatprep.subr.mxu0 0.0
        %1228 = vmatpush1.xpose.msra.mxu0 0.0
        %1229 = vmatprep.subr.mxu0 0.0
        %1230 = vmatpush1.xpose.msra.mxu0 0.0
        %1231 = vmatprep.subr.mxu0 0.0
        %1232 = vmatpush1.xpose.msra.mxu0 0.0
        %1233 = vmatprep.subr.mxu0 0.0
        %1234 = vmatpush1.xpose.msra.mxu0 0.0
        %1235 = vmatprep.subr.mxu0 0.0
        %1236 = vmatpush1.xpose.msra.mxu0 0.0
        %1237 = vmatprep.subr.mxu0 0.0
        %1238 = vmatpush1.xpose.msra.mxu0 0.0
        %1239 = vmatprep.subr.mxu0 0.0
        %1240 = vmatpush1.xpose.msra.mxu0 0.0
        %1241 = vmatprep.subr.mxu0 0.0
        %1242 = vmatpush1.xpose.msra.mxu0 0.0
        %1243 = vmatprep.subr.mxu0 0.0
        %1244 = vmatpush1.xpose.msra.mxu0 0.0
        %1245 = vmatprep.subr.mxu0 0.0
        %1246 = vmatpush1.xpose.msra.mxu0 0.0
        %1247 = vmatprep.subr.mxu0 0.0
        %1248 = vmatpush1.xpose.msra.mxu0 0.0
        %1249 = vmatprep.subr.mxu0 0.0
        %1250 = vmatpush1.xpose.msra.mxu0 0.0
        %1251 = vmatprep.subr.mxu0 0.0
        %1252 = vmatpush1.xpose.msra.mxu0 0.0
        %1253 = vmatprep.subr.mxu0 0.0
        %1254 = vmatpush1.xpose.msra.mxu0 0.0
        %1255 = vmatprep.subr.mxu0 0.0
        %1256 = vmatpush1.xpose.msra.mxu0 0.0
        %1257 = vmatprep.subr.mxu0 0.0
        %1258 = vmatpush1.xpose.msra.mxu0 0.0
        %1259 = vmatprep.subr.mxu0 0.0
        %1260 = vmatpush1.xpose.msra.mxu0 0.0
        %1261 = vmatprep.subr.mxu0 0.0
        %1262 = vmatpush1.xpose.msra.mxu0 0.0
        %1263 = vmatprep.subr.mxu0 0.0
        %1264 = vmatpush1.xpose.msra.mxu0 0.0
        %1265 = vmatprep.subr.mxu0 0.0
        %1266 = vmatpush1.xpose.msra.mxu0 0.0
        %1267 = vmatprep.subr.mxu0 0.0
        %1268 = vmatpush1.xpose.msra.mxu0 0.0
        %1269 = vmatprep.subr.mxu0 0.0
        %1270 = vmatpush1.xpose.msra.mxu0 0.0
        %1271 = vmatprep.mubr.f32.mxu0 0.0
        %1272 = vmatmul.mubr.f32.gmra.mrb[0].mxu0 %v1203
        %v1273 = vpop.f32.mrb[0].mxu0
        %v1274 = vadd.f32 0.0, %v1273
        %v1275 = vpop.f32.mrb[0].mxu0
        %1276 = vdwg.mxu0
        %v1277 = vsel %vm800, %v1196, -inf
        %1278 = vmax.xlane.f32.xlu0 %v1277
        %v1279 = vpop.xlane.xlu0 %1278
        %v1280 = vsel %vm800, %v1274, -inf
        %1281 = vmax.xlane.f32.xlu0 %v1280
        %v1282 = vpop.xlane.xlu0 %1281
        %v1283 = vsub.f32 %v1196, %v1279
        %v1284 = vsub.f32 %v1274, %v1282
        %v1285 = vmul.f32 %v1283, 1.442695
        %v1286 = vpow.pop %v1285
        %v1287 = vmul.f32 %v1284, 1.442695
        %v1288 = vpow.pop %v1287
        %v1289 = vsel %vm800, %v1286, 0.0
        %1290 = vadd.xlane.f32.xlu0 %v1289
        %v1291 = vpop.xlane.xlu0 %1290
        %v1292 = vsel %vm800, %v1288, 0.0
        %1293 = vadd.xlane.f32.xlu0 %v1292
        %v1294 = vpop.xlane.xlu0 %1293
        %v1295 = vrcp.pop %v1291
        %v1296 = vrcp.pop %v1294
        %v1297 = vmul.f32 %v1286, %v1295
        %v1298 = vmul.f32 %v1288, %v1296
        %1300 = vrot.lane.b32.xlu0 %v794, 120
        %v1301 = vpop.permute.xlu0 %1300
        %v1304 = vsel %vm800, %v1297, 0
        %1306 = vmatprep.subr.mxu0 0.0
        %1307 = vmatpush1.msra.mxu0 %v1301
        %1308 = vmatprep.subr.mxu0 0.0
        %1309 = vmatpush1.msra.mxu0 0.0
        %1310 = vmatprep.subr.mxu0 0.0
        %1311 = vmatpush1.msra.mxu0 0.0
        %1312 = vmatprep.subr.mxu0 0.0
        %1313 = vmatpush1.msra.mxu0 0.0
        %1314 = vmatprep.subr.mxu0 0.0
        %1315 = vmatpush1.msra.mxu0 0.0
        %1316 = vmatprep.subr.mxu0 0.0
        %1317 = vmatpush1.msra.mxu0 0.0
        %1318 = vmatprep.subr.mxu0 0.0
        %1319 = vmatpush1.msra.mxu0 0.0
        %1320 = vmatprep.subr.mxu0 0.0
        %1321 = vmatpush1.msra.mxu0 0.0
        %1322 = vmatprep.subr.mxu0 0.0
        %1323 = vmatpush1.msra.mxu0 0.0
        %1324 = vmatprep.subr.mxu0 0.0
        %1325 = vmatpush1.msra.mxu0 0.0
        %1326 = vmatprep.subr.mxu0 0.0
        %1327 = vmatpush1.msra.mxu0 0.0
        %1328 = vmatprep.subr.mxu0 0.0
        %1329 = vmatpush1.msra.mxu0 0.0
        %1330 = vmatprep.subr.mxu0 0.0
        %1331 = vmatpush1.msra.mxu0 0.0
        %1332 = vmatprep.subr.mxu0 0.0
        %1333 = vmatpush1.msra.mxu0 0.0
        %1334 = vmatprep.subr.mxu0 0.0
        %1335 = vmatpush1.msra.mxu0 0.0
        %1336 = vmatprep.subr.mxu0 0.0
        %1337 = vmatpush1.msra.mxu0 0.0
        %1338 = vmatprep.subr.mxu0 0.0
        %1339 = vmatpush1.msra.mxu0 0.0
        %1340 = vmatprep.subr.mxu0 0.0
        %1341 = vmatpush1.msra.mxu0 0.0
        %1342 = vmatprep.subr.mxu0 0.0
        %1343 = vmatpush1.msra.mxu0 0.0
        %1344 = vmatprep.subr.mxu0 0.0
        %1345 = vmatpush1.msra.mxu0 0.0
        %1346 = vmatprep.subr.mxu0 0.0
        %1347 = vmatpush1.msra.mxu0 0.0
        %1348 = vmatprep.subr.mxu0 0.0
        %1349 = vmatpush1.msra.mxu0 0.0
        %1350 = vmatprep.subr.mxu0 0.0
        %1351 = vmatpush1.msra.mxu0 0.0
        %1352 = vmatprep.subr.mxu0 0.0
        %1353 = vmatpush1.msra.mxu0 0.0
        %1354 = vmatprep.subr.mxu0 0.0
        %1355 = vmatpush1.msra.mxu0 0.0
        %1356 = vmatprep.subr.mxu0 0.0
        %1357 = vmatpush1.msra.mxu0 0.0
        %1358 = vmatprep.subr.mxu0 0.0
        %1359 = vmatpush1.msra.mxu0 0.0
        %1360 = vmatprep.subr.mxu0 0.0
        %1361 = vmatpush1.msra.mxu0 0.0
        %1362 = vmatprep.subr.mxu0 0.0
        %1363 = vmatpush1.msra.mxu0 0.0
        %1364 = vmatprep.subr.mxu0 0.0
        %1365 = vmatpush1.msra.mxu0 0.0
        %1366 = vmatprep.subr.mxu0 0.0
        %1367 = vmatpush1.msra.mxu0 0.0
        %1368 = vmatprep.subr.mxu0 0.0
        %1369 = vmatpush1.msra.mxu0 0.0
        %1370 = vmatprep.mubr.f32.mxu0 0.0
        %1371 = vmatmul.mubr.f32.gmra.mrb[0].mxu0 %v1304
        %v1372 = vpop.f32.mrb[0].mxu0
        %v1373 = vadd.f32 0.0, %v1372
        %v1374 = vpop.f32.mrb[0].mxu0
        %1375 = vdwg.mxu0
        %1377 = vrot.lane.b32.xlu0 %v797, 120
        %v1378 = vpop.permute.xlu0 %1377
        %v1381 = vsel %vm800, %v1298, 0
        %1383 = vmatprep.subr.mxu0 0.0
        %1384 = vmatpush1.msra.mxu0 %v1378
        %1385 = vmatprep.subr.mxu0 0.0
        %1386 = vmatpush1.msra.mxu0 0.0
        %1387 = vmatprep.subr.mxu0 0.0
        %1388 = vmatpush1.msra.mxu0 0.0
        %1389 = vmatprep.subr.mxu0 0.0
        %1390 = vmatpush1.msra.mxu0 0.0
        %1391 = vmatprep.subr.mxu0 0.0
        %1392 = vmatpush1.msra.mxu0 0.0
        %1393 = vmatprep.subr.mxu0 0.0
        %1394 = vmatpush1.msra.mxu0 0.0
        %1395 = vmatprep.subr.mxu0 0.0
        %1396 = vmatpush1.msra.mxu0 0.0
        %1397 = vmatprep.subr.mxu0 0.0
        %1398 = vmatpush1.msra.mxu0 0.0
        %1399 = vmatprep.subr.mxu0 0.0
        %1400 = vmatpush1.msra.mxu0 0.0
        %1401 = vmatprep.subr.mxu0 0.0
        %1402 = vmatpush1.msra.mxu0 0.0
        %1403 = vmatprep.subr.mxu0 0.0
        %1404 = vmatpush1.msra.mxu0 0.0
        %1405 = vmatprep.subr.mxu0 0.0
        %1406 = vmatpush1.msra.mxu0 0.0
        %1407 = vmatprep.subr.mxu0 0.0
        %1408 = vmatpush1.msra.mxu0 0.0
        %1409 = vmatprep.subr.mxu0 0.0
        %1410 = vmatpush1.msra.mxu0 0.0
        %1411 = vmatprep.subr.mxu0 0.0
        %1412 = vmatpush1.msra.mxu0 0.0
        %1413 = vmatprep.subr.mxu0 0.0
        %1414 = vmatpush1.msra.mxu0 0.0
        %1415 = vmatprep.subr.mxu0 0.0
        %1416 = vmatpush1.msra.mxu0 0.0
        %1417 = vmatprep.subr.mxu0 0.0
        %1418 = vmatpush1.msra.mxu0 0.0
        %1419 = vmatprep.subr.mxu0 0.0
        %1420 = vmatpush1.msra.mxu0 0.0
        %1421 = vmatprep.subr.mxu0 0.0
        %1422 = vmatpush1.msra.mxu0 0.0
        %1423 = vmatprep.subr.mxu0 0.0
        %1424 = vmatpush1.msra.mxu0 0.0
        %1425 = vmatprep.subr.mxu0 0.0
        %1426 = vmatpush1.msra.mxu0 0.0
        %1427 = vmatprep.subr.mxu0 0.0
        %1428 = vmatpush1.msra.mxu0 0.0
        %1429 = vmatprep.subr.mxu0 0.0
        %1430 = vmatpush1.msra.mxu0 0.0
        %1431 = vmatprep.subr.mxu0 0.0
        %1432 = vmatpush1.msra.mxu0 0.0
        %1433 = vmatprep.subr.mxu0 0.0
        %1434 = vmatpush1.msra.mxu0 0.0
        %1435 = vmatprep.subr.mxu0 0.0
        %1436 = vmatpush1.msra.mxu0 0.0
        %1437 = vmatprep.subr.mxu0 0.0
        %1438 = vmatpush1.msra.mxu0 0.0
        %1439 = vmatprep.subr.mxu0 0.0
        %1440 = vmatpush1.msra.mxu0 0.0
        %1441 = vmatprep.subr.mxu0 0.0
        %1442 = vmatpush1.msra.mxu0 0.0
        %1443 = vmatprep.subr.mxu0 0.0
        %1444 = vmatpush1.msra.mxu0 0.0
        %1445 = vmatprep.subr.mxu0 0.0
        %1446 = vmatpush1.msra.mxu0 0.0
        %1447 = vmatprep.mubr.f32.mxu0 0.0
        %1448 = vmatmul.mubr.f32.gmra.mrb[0].mxu0 %v1381
        %v1449 = vpop.f32.mrb[0].mxu0
        %v1450 = vadd.f32 0.0, %v1449
        %v1451 = vpop.f32.mrb[0].mxu0
        %1452 = vdwg.mxu0
        %1453 = vrot.lane.b32.xlu0 %v674, 112
        %v1454 = vpop.permute.xlu0 %1453
        %1455 = vrot.lane.b32.xlu0 %v732, 112
        %v1456 = vpop.permute.xlu0 %1455
        %v1457 = vsel %vm800, %v1454, 0
        %v1459 = vsel %vm800, %v1456, 0
        %1461 = vmatprep.subr.mxu0 0.0
        %1462 = vmatpush1.xpose.msra.mxu0 %v1459
        %1463 = vmatprep.subr.mxu0 0.0
        %1464 = vmatpush1.xpose.msra.mxu0 0.0
        %1465 = vmatprep.subr.mxu0 0.0
        %1466 = vmatpush1.xpose.msra.mxu0 0.0
        %1467 = vmatprep.subr.mxu0 0.0
        %1468 = vmatpush1.xpose.msra.mxu0 0.0
        %1469 = vmatprep.subr.mxu0 0.0
        %1470 = vmatpush1.xpose.msra.mxu0 0.0
        %1471 = vmatprep.subr.mxu0 0.0
        %1472 = vmatpush1.xpose.msra.mxu0 0.0
        %1473 = vmatprep.subr.mxu0 0.0
        %1474 = vmatpush1.xpose.msra.mxu0 0.0
        %1475 = vmatprep.subr.mxu0 0.0
        %1476 = vmatpush1.xpose.msra.mxu0 0.0
        %1477 = vmatprep.subr.mxu0 0.0
        %1478 = vmatpush1.xpose.msra.mxu0 0.0
        %1479 = vmatprep.subr.mxu0 0.0
        %1480 = vmatpush1.xpose.msra.mxu0 0.0
        %1481 = vmatprep.subr.mxu0 0.0
        %1482 = vmatpush1.xpose.msra.mxu0 0.0
        %1483 = vmatprep.subr.mxu0 0.0
        %1484 = vmatpush1.xpose.msra.mxu0 0.0
        %1485 = vmatprep.subr.mxu0 0.0
        %1486 = vmatpush1.xpose.msra.mxu0 0.0
        %1487 = vmatprep.subr.mxu0 0.0
        %1488 = vmatpush1.xpose.msra.mxu0 0.0
        %1489 = vmatprep.subr.mxu0 0.0
        %1490 = vmatpush1.xpose.msra.mxu0 0.0
        %1491 = vmatprep.subr.mxu0 0.0
        %1492 = vmatpush1.xpose.msra.mxu0 0.0
        %1493 = vmatprep.subr.mxu0 0.0
        %1494 = vmatpush1.xpose.msra.mxu0 0.0
        %1495 = vmatprep.subr.mxu0 0.0
        %1496 = vmatpush1.xpose.msra.mxu0 0.0
        %1497 = vmatprep.subr.mxu0 0.0
        %1498 = vmatpush1.xpose.msra.mxu0 0.0
        %1499 = vmatprep.subr.mxu0 0.0
        %1500 = vmatpush1.xpose.msra.mxu0 0.0
        %1501 = vmatprep.subr.mxu0 0.0
        %1502 = vmatpush1.xpose.msra.mxu0 0.0
        %1503 = vmatprep.subr.mxu0 0.0
        %1504 = vmatpush1.xpose.msra.mxu0 0.0
        %1505 = vmatprep.subr.mxu0 0.0
        %1506 = vmatpush1.xpose.msra.mxu0 0.0
        %1507 = vmatprep.subr.mxu0 0.0
        %1508 = vmatpush1.xpose.msra.mxu0 0.0
        %1509 = vmatprep.subr.mxu0 0.0
        %1510 = vmatpush1.xpose.msra.mxu0 0.0
        %1511 = vmatprep.subr.mxu0 0.0
        %1512 = vmatpush1.xpose.msra.mxu0 0.0
        %1513 = vmatprep.subr.mxu0 0.0
        %1514 = vmatpush1.xpose.msra.mxu0 0.0
        %1515 = vmatprep.subr.mxu0 0.0
        %1516 = vmatpush1.xpose.msra.mxu0 0.0
        %1517 = vmatprep.subr.mxu0 0.0
        %1518 = vmatpush1.xpose.msra.mxu0 0.0
        %1519 = vmatprep.subr.mxu0 0.0
        %1520 = vmatpush1.xpose.msra.mxu0 0.0
        %1521 = vmatprep.subr.mxu0 0.0
        %1522 = vmatpush1.xpose.msra.mxu0 0.0
        %1523 = vmatprep.subr.mxu0 0.0
        %1524 = vmatpush1.xpose.msra.mxu0 0.0
        %1525 = vmatprep.mubr.f32.mxu0 0.0
        %1526 = vmatmul.mubr.f32.gmra.mrb[0].mxu0 %v1457
        %v1527 = vpop.f32.mrb[0].mxu0
        %v1528 = vadd.f32 0.0, %v1527
        %v1529 = vpop.f32.mrb[0].mxu0
        %1530 = vdwg.mxu0
        %1531 = vrot.lane.b32.xlu0 %v675, 112
        %v1532 = vpop.permute.xlu0 %1531
        %1533 = vrot.lane.b32.xlu0 %v735, 112
        %v1534 = vpop.permute.xlu0 %1533
        %v1535 = vsel %vm800, %v1532, 0
        %v1537 = vsel %vm800, %v1534, 0
        %1539 = vmatprep.subr.mxu0 0.0
        %1540 = vmatpush1.xpose.msra.mxu0 %v1537
        %1541 = vmatprep.subr.mxu0 0.0
        %1542 = vmatpush1.xpose.msra.mxu0 0.0
        %1543 = vmatprep.subr.mxu0 0.0
        %1544 = vmatpush1.xpose.msra.mxu0 0.0
        %1545 = vmatprep.subr.mxu0 0.0
        %1546 = vmatpush1.xpose.msra.mxu0 0.0
        %1547 = vmatprep.subr.mxu0 0.0
        %1548 = vmatpush1.xpose.msra.mxu0 0.0
        %1549 = vmatprep.subr.mxu0 0.0
        %1550 = vmatpush1.xpose.msra.mxu0 0.0
        %1551 = vmatprep.subr.mxu0 0.0
        %1552 = vmatpush1.xpose.msra.mxu0 0.0
        %1553 = vmatprep.subr.mxu0 0.0
        %1554 = vmatpush1.xpose.msra.mxu0 0.0
        %1555 = vmatprep.subr.mxu0 0.0
        %1556 = vmatpush1.xpose.msra.mxu0 0.0
        %1557 = vmatprep.subr.mxu0 0.0
        %1558 = vmatpush1.xpose.msra.mxu0 0.0
        %1559 = vmatprep.subr.mxu0 0.0
        %1560 = vmatpush1.xpose.msra.mxu0 0.0
        %1561 = vmatprep.subr.mxu0 0.0
        %1562 = vmatpush1.xpose.msra.mxu0 0.0
        %1563 = vmatprep.subr.mxu0 0.0
        %1564 = vmatpush1.xpose.msra.mxu0 0.0
        %1565 = vmatprep.subr.mxu0 0.0
        %1566 = vmatpush1.xpose.msra.mxu0 0.0
        %1567 = vmatprep.subr.mxu0 0.0
        %1568 = vmatpush1.xpose.msra.mxu0 0.0
        %1569 = vmatprep.subr.mxu0 0.0
        %1570 = vmatpush1.xpose.msra.mxu0 0.0
        %1571 = vmatprep.subr.mxu0 0.0
        %1572 = vmatpush1.xpose.msra.mxu0 0.0
        %1573 = vmatprep.subr.mxu0 0.0
        %1574 = vmatpush1.xpose.msra.mxu0 0.0
        %1575 = vmatprep.subr.mxu0 0.0
        %1576 = vmatpush1.xpose.msra.mxu0 0.0
        %1577 = vmatprep.subr.mxu0 0.0
        %1578 = vmatpush1.xpose.msra.mxu0 0.0
        %1579 = vmatprep.subr.mxu0 0.0
        %1580 = vmatpush1.xpose.msra.mxu0 0.0
        %1581 = vmatprep.subr.mxu0 0.0
        %1582 = vmatpush1.xpose.msra.mxu0 0.0
        %1583 = vmatprep.subr.mxu0 0.0
        %1584 = vmatpush1.xpose.msra.mxu0 0.0
        %1585 = vmatprep.subr.mxu0 0.0
        %1586 = vmatpush1.xpose.msra.mxu0 0.0
        %1587 = vmatprep.subr.mxu0 0.0
        %1588 = vmatpush1.xpose.msra.mxu0 0.0
        %1589 = vmatprep.subr.mxu0 0.0
        %1590 = vmatpush1.xpose.msra.mxu0 0.0
        %1591 = vmatprep.subr.mxu0 0.0
        %1592 = vmatpush1.xpose.msra.mxu0 0.0
        %1593 = vmatprep.subr.mxu0 0.0
        %1594 = vmatpush1.xpose.msra.mxu0 0.0
        %1595 = vmatprep.subr.mxu0 0.0
        %1596 = vmatpush1.xpose.msra.mxu0 0.0
        %1597 = vmatprep.subr.mxu0 0.0
        %1598 = vmatpush1.xpose.msra.mxu0 0.0
        %1599 = vmatprep.subr.mxu0 0.0
        %1600 = vmatpush1.xpose.msra.mxu0 0.0
        %1601 = vmatprep.subr.mxu0 0.0
        %1602 = vmatpush1.xpose.msra.mxu0 0.0
        %1603 = vmatprep.mubr.f32.mxu0 0.0
        %1604 = vmatmul.mubr.f32.gmra.mrb[0].mxu0 %v1535
        %v1605 = vpop.f32.mrb[0].mxu0
        %v1606 = vadd.f32 0.0, %v1605
        %v1607 = vpop.f32.mrb[0].mxu0
        %1608 = vdwg.mxu0
        %v1609 = vsel %vm800, %v1528, -inf
        %1610 = vmax.xlane.f32.xlu0 %v1609
        %v1611 = vpop.xlane.xlu0 %1610
        %v1612 = vsel %vm800, %v1606, -inf
        %1613 = vmax.xlane.f32.xlu0 %v1612
        %v1614 = vpop.xlane.xlu0 %1613
        %v1615 = vsub.f32 %v1528, %v1611
        %v1616 = vsub.f32 %v1606, %v1614
        %v1617 = vmul.f32 %v1615, 1.442695
        %v1618 = vpow.pop %v1617
        %v1619 = vmul.f32 %v1616, 1.442695
        %v1620 = vpow.pop %v1619
        %v1621 = vsel %vm800, %v1618, 0.0
        %1622 = vadd.xlane.f32.xlu0 %v1621
        %v1623 = vpop.xlane.xlu0 %1622
        %v1624 = vsel %vm800, %v1620, 0.0
        %1625 = vadd.xlane.f32.xlu0 %v1624
        %v1626 = vpop.xlane.xlu0 %1625
        %v1627 = vrcp.pop %v1623
        %v1628 = vrcp.pop %v1626
        %v1629 = vmul.f32 %v1618, %v1627
        %v1630 = vmul.f32 %v1620, %v1628
        %1631 = vrot.lane.b32.xlu0 %v794, 112
        %v1632 = vpop.permute.xlu0 %1631
        %v1635 = vsel %vm800, %v1629, 0
        %1637 = vmatprep.subr.mxu0 0.0
        %1638 = vmatpush1.msra.mxu0 %v1632
        %1639 = vmatprep.subr.mxu0 0.0
        %1640 = vmatpush1.msra.mxu0 0.0
        %1641 = vmatprep.subr.mxu0 0.0
        %1642 = vmatpush1.msra.mxu0 0.0
        %1643 = vmatprep.subr.mxu0 0.0
        %1644 = vmatpush1.msra.mxu0 0.0
        %1645 = vmatprep.subr.mxu0 0.0
        %1646 = vmatpush1.msra.mxu0 0.0
        %1647 = vmatprep.subr.mxu0 0.0
        %1648 = vmatpush1.msra.mxu0 0.0
        %1649 = vmatprep.subr.mxu0 0.0
        %1650 = vmatpush1.msra.mxu0 0.0
        %1651 = vmatprep.subr.mxu0 0.0
        %1652 = vmatpush1.msra.mxu0 0.0
        %1653 = vmatprep.subr.mxu0 0.0
        %1654 = vmatpush1.msra.mxu0 0.0
        %1655 = vmatprep.subr.mxu0 0.0
        %1656 = vmatpush1.msra.mxu0 0.0
        %1657 = vmatprep.subr.mxu0 0.0
        %1658 = vmatpush1.msra.mxu0 0.0
        %1659 = vmatprep.subr.mxu0 0.0
        %1660 = vmatpush1.msra.mxu0 0.0
        %1661 = vmatprep.subr.mxu0 0.0
        %1662 = vmatpush1.msra.mxu0 0.0
        %1663 = vmatprep.subr.mxu0 0.0
        %1664 = vmatpush1.msra.mxu0 0.0
        %1665 = vmatprep.subr.mxu0 0.0
        %1666 = vmatpush1.msra.mxu0 0.0
        %1667 = vmatprep.subr.mxu0 0.0
        %1668 = vmatpush1.msra.mxu0 0.0
        %1669 = vmatprep.subr.mxu0 0.0
        %1670 = vmatpush1.msra.mxu0 0.0
        %1671 = vmatprep.subr.mxu0 0.0
        %1672 = vmatpush1.msra.mxu0 0.0
        %1673 = vmatprep.subr.mxu0 0.0
        %1674 = vmatpush1.msra.mxu0 0.0
        %1675 = vmatprep.subr.mxu0 0.0
        %1676 = vmatpush1.msra.mxu0 0.0
        %1677 = vmatprep.subr.mxu0 0.0
        %1678 = vmatpush1.msra.mxu0 0.0
        %1679 = vmatprep.subr.mxu0 0.0
        %1680 = vmatpush1.msra.mxu0 0.0
        %1681 = vmatprep.subr.mxu0 0.0
        %1682 = vmatpush1.msra.mxu0 0.0
        %1683 = vmatprep.subr.mxu0 0.0
        %1684 = vmatpush1.msra.mxu0 0.0
        %1685 = vmatprep.subr.mxu0 0.0
        %1686 = vmatpush1.msra.mxu0 0.0
        %1687 = vmatprep.subr.mxu0 0.0
        %1688 = vmatpush1.msra.mxu0 0.0
        %1689 = vmatprep.subr.mxu0 0.0
        %1690 = vmatpush1.msra.mxu0 0.0
        %1691 = vmatprep.subr.mxu0 0.0
        %1692 = vmatpush1.msra.mxu0 0.0
        %1693 = vmatprep.subr.mxu0 0.0
        %1694 = vmatpush1.msra.mxu0 0.0
        %1695 = vmatprep.subr.mxu0 0.0
        %1696 = vmatpush1.msra.mxu0 0.0
        %1697 = vmatprep.subr.mxu0 0.0
        %1698 = vmatpush1.msra.mxu0 0.0
        %1699 = vmatprep.subr.mxu0 0.0
        %1700 = vmatpush1.msra.mxu0 0.0
        %1701 = vmatprep.mubr.f32.mxu0 0.0
        %1702 = vmatmul.mubr.f32.gmra.mrb[0].mxu0 %v1635
        %v1703 = vpop.f32.mrb[0].mxu0
        %v1704 = vadd.f32 0.0, %v1703
        %v1705 = vpop.f32.mrb[0].mxu0
        %1706 = vdwg.mxu0
        %1707 = vrot.lane.b32.xlu0 %v797, 112
        %v1708 = vpop.permute.xlu0 %1707
        %v1711 = vsel %vm800, %v1630, 0
        %1713 = vmatprep.subr.mxu0 0.0
        %1714 = vmatpush1.msra.mxu0 %v1708
        %1715 = vmatprep.subr.mxu0 0.0
        %1716 = vmatpush1.msra.mxu0 0.0
        %1717 = vmatprep.subr.mxu0 0.0
        %1718 = vmatpush1.msra.mxu0 0.0
        %1719 = vmatprep.subr.mxu0 0.0
        %1720 = vmatpush1.msra.mxu0 0.0
        %1721 = vmatprep.subr.mxu0 0.0
        %1722 = vmatpush1.msra.mxu0 0.0
        %1723 = vmatprep.subr.mxu0 0.0
        %1724 = vmatpush1.msra.mxu0 0.0
        %1725 = vmatprep.subr.mxu0 0.0
        %1726 = vmatpush1.msra.mxu0 0.0
        %1727 = vmatprep.subr.mxu0 0.0
        %1728 = vmatpush1.msra.mxu0 0.0
        %1729 = vmatprep.subr.mxu0 0.0
        %1730 = vmatpush1.msra.mxu0 0.0
        %1731 = vmatprep.subr.mxu0 0.0
        %1732 = vmatpush1.msra.mxu0 0.0
        %1733 = vmatprep.subr.mxu0 0.0
        %1734 = vmatpush1.msra.mxu0 0.0
        %1735 = vmatprep.subr.mxu0 0.0
        %1736 = vmatpush1.msra.mxu0 0.0
        %1737 = vmatprep.subr.mxu0 0.0
        %1738 = vmatpush1.msra.mxu0 0.0
        %1739 = vmatprep.subr.mxu0 0.0
        %1740 = vmatpush1.msra.mxu0 0.0
        %1741 = vmatprep.subr.mxu0 0.0
        %1742 = vmatpush1.msra.mxu0 0.0
        %1743 = vmatprep.subr.mxu0 0.0
        %1744 = vmatpush1.msra.mxu0 0.0
        %1745 = vmatprep.subr.mxu0 0.0
        %1746 = vmatpush1.msra.mxu0 0.0
        %1747 = vmatprep.subr.mxu0 0.0
        %1748 = vmatpush1.msra.mxu0 0.0
        %1749 = vmatprep.subr.mxu0 0.0
        %1750 = vmatpush1.msra.mxu0 0.0
        %1751 = vmatprep.subr.mxu0 0.0
        %1752 = vmatpush1.msra.mxu0 0.0
        %1753 = vmatprep.subr.mxu0 0.0
        %1754 = vmatpush1.msra.mxu0 0.0
        %1755 = vmatprep.subr.mxu0 0.0
        %1756 = vmatpush1.msra.mxu0 0.0
        %1757 = vmatprep.subr.mxu0 0.0
        %1758 = vmatpush1.msra.mxu0 0.0
        %1759 = vmatprep.subr.mxu0 0.0
        %1760 = vmatpush1.msra.mxu0 0.0
        %1761 = vmatprep.subr.mxu0 0.0
        %1762 = vmatpush1.msra.mxu0 0.0
        %1763 = vmatprep.subr.mxu0 0.0
        %1764 = vmatpush1.msra.mxu0 0.0
        %1765 = vmatprep.subr.mxu0 0.0
        %1766 = vmatpush1.msra.mxu0 0.0
        %1767 = vmatprep.subr.mxu0 0.0
        %1768 = vmatpush1.msra.mxu0 0.0
        %1769 = vmatprep.subr.mxu0 0.0
        %1770 = vmatpush1.msra.mxu0 0.0
        %1771 = vmatprep.subr.mxu0 0.0
        %1772 = vmatpush1.msra.mxu0 0.0
        %1773 = vmatprep.subr.mxu0 0.0
        %1774 = vmatpush1.msra.mxu0 0.0
        %1775 = vmatprep.subr.mxu0 0.0
        %1776 = vmatpush1.msra.mxu0 0.0
        %1777 = vmatprep.mubr.f32.mxu0 0.0
        %1778 = vmatmul.mubr.f32.gmra.mrb[0].mxu0 %v1711
        %v1779 = vpop.f32.mrb[0].mxu0
        %v1780 = vadd.f32 0.0, %v1779
        %v1781 = vpop.f32.mrb[0].mxu0
        %1782 = vdwg.mxu0
        %1783 = vrot.lane.b32.xlu0 %v674, 104
        %v1784 = vpop.permute.xlu0 %1783
        %1785 = vrot.lane.b32.xlu0 %v732, 104
        %v1786 = vpop.permute.xlu0 %1785
        %v1787 = vsel %vm800, %v1784, 0
        %v1789 = vsel %vm800, %v1786, 0
        %1791 = vmatprep.subr.mxu0 0.0
        %1792 = vmatpush1.xpose.msra.mxu0 %v1789
        %1793 = vmatprep.subr.mxu0 0.0
        %1794 = vmatpush1.xpose.msra.mxu0 0.0
        %1795 = vmatprep.subr.mxu0 0.0
        %1796 = vmatpush1.xpose.msra.mxu0 0.0
        %1797 = vmatprep.subr.mxu0 0.0
        %1798 = vmatpush1.xpose.msra.mxu0 0.0
        %1799 = vmatprep.subr.mxu0 0.0
        %1800 = vmatpush1.xpose.msra.mxu0 0.0
        %1801 = vmatprep.subr.mxu0 0.0
        %1802 = vmatpush1.xpose.msra.mxu0 0.0
        %1803 = vmatprep.subr.mxu0 0.0
        %1804 = vmatpush1.xpose.msra.mxu0 0.0
        %1805 = vmatprep.subr.mxu0 0.0
        %1806 = vmatpush1.xpose.msra.mxu0 0.0
        %1807 = vmatprep.subr.mxu0 0.0
        %1808 = vmatpush1.xpose.msra.mxu0 0.0
        %1809 = vmatprep.subr.mxu0 0.0
        %1810 = vmatpush1.xpose.msra.mxu0 0.0
        %1811 = vmatprep.subr.mxu0 0.0
        %1812 = vmatpush1.xpose.msra.mxu0 0.0
        %1813 = vmatprep.subr.mxu0 0.0
        %1814 = vmatpush1.xpose.msra.mxu0 0.0
        %1815 = vmatprep.subr.mxu0 0.0
        %1816 = vmatpush1.xpose.msra.mxu0 0.0
        %1817 = vmatprep.subr.mxu0 0.0
        %1818 = vmatpush1.xpose.msra.mxu0 0.0
        %1819 = vmatprep.subr.mxu0 0.0
        %1820 = vmatpush1.xpose.msra.mxu0 0.0
        %1821 = vmatprep.subr.mxu0 0.0
        %1822 = vmatpush1.xpose.msra.mxu0 0.0
        %1823 = vmatprep.subr.mxu0 0.0
        %1824 = vmatpush1.xpose.msra.mxu0 0.0
        %1825 = vmatprep.subr.mxu0 0.0
        %1826 = vmatpush1.xpose.msra.mxu0 0.0
        %1827 = vmatprep.subr.mxu0 0.0
        %1828 = vmatpush1.xpose.msra.mxu0 0.0
        %1829 = vmatprep.subr.mxu0 0.0
        %1830 = vmatpush1.xpose.msra.mxu0 0.0
        %1831 = vmatprep.subr.mxu0 0.0
        %1832 = vmatpush1.xpose.msra.mxu0 0.0
        %1833 = vmatprep.subr.mxu0 0.0
        %1834 = vmatpush1.xpose.msra.mxu0 0.0
        %1835 = vmatprep.subr.mxu0 0.0
        %1836 = vmatpush1.xpose.msra.mxu0 0.0
        %1837 = vmatprep.subr.mxu0 0.0
        %1838 = vmatpush1.xpose.msra.mxu0 0.0
        %1839 = vmatprep.subr.mxu0 0.0
        %1840 = vmatpush1.xpose.msra.mxu0 0.0
        %1841 = vmatprep.subr.mxu0 0.0
        %1842 = vmatpush1.xpose.msra.mxu0 0.0
        %1843 = vmatprep.subr.mxu0 0.0
        %1844 = vmatpush1.xpose.msra.mxu0 0.0
        %1845 = vmatprep.subr.mxu0 0.0
        %1846 = vmatpush1.xpose.msra.mxu0 0.0
        %1847 = vmatprep.subr.mxu0 0.0
        %1848 = vmatpush1.xpose.msra.mxu0 0.0
        %1849 = vmatprep.subr.mxu0 0.0
        %1850 = vmatpush1.xpose.msra.mxu0 0.0
        %1851 = vmatprep.subr.mxu0 0.0
        %1852 = vmatpush1.xpose.msra.mxu0 0.0
        %1853 = vmatprep.subr.mxu0 0.0
        %1854 = vmatpush1.xpose.msra.mxu0 0.0
        %1855 = vmatprep.mubr.f32.mxu0 0.0
        %1856 = vmatmul.mubr.f32.gmra.mrb[0].mxu0 %v1787
        %v1857 = vpop.f32.mrb[0].mxu0
        %v1858 = vadd.f32 0.0, %v1857
        %v1859 = vpop.f32.mrb[0].mxu0
        %1860 = vdwg.mxu0
        %1861 = vrot.lane.b32.xlu0 %v675, 104
        %v1862 = vpop.permute.xlu0 %1861
        %1863 = vrot.lane.b32.xlu0 %v735, 104
        %v1864 = vpop.permute.xlu0 %1863
        %v1865 = vsel %vm800, %v1862, 0
        %v1867 = vsel %vm800, %v1864, 0
        %1869 = vmatprep.subr.mxu0 0.0
        %1870 = vmatpush1.xpose.msra.mxu0 %v1867
        %1871 = vmatprep.subr.mxu0 0.0
        %1872 = vmatpush1.xpose.msra.mxu0 0.0
        %1873 = vmatprep.subr.mxu0 0.0
        %1874 = vmatpush1.xpose.msra.mxu0 0.0
        %1875 = vmatprep.subr.mxu0 0.0
        %1876 = vmatpush1.xpose.msra.mxu0 0.0
        %1877 = vmatprep.subr.mxu0 0.0
        %1878 = vmatpush1.xpose.msra.mxu0 0.0
        %1879 = vmatprep.subr.mxu0 0.0
        %1880 = vmatpush1.xpose.msra.mxu0 0.0
        %1881 = vmatprep.subr.mxu0 0.0
        %1882 = vmatpush1.xpose.msra.mxu0 0.0
        %1883 = vmatprep.subr.mxu0 0.0
        %1884 = vmatpush1.xpose.msra.mxu0 0.0
        %1885 = vmatprep.subr.mxu0 0.0
        %1886 = vmatpush1.xpose.msra.mxu0 0.0
        %1887 = vmatprep.subr.mxu0 0.0
        %1888 = vmatpush1.xpose.msra.mxu0 0.0
        %1889 = vmatprep.subr.mxu0 0.0
        %1890 = vmatpush1.xpose.msra.mxu0 0.0
        %1891 = vmatprep.subr.mxu0 0.0
        %1892 = vmatpush1.xpose.msra.mxu0 0.0
        %1893 = vmatprep.subr.mxu0 0.0
        %1894 = vmatpush1.xpose.msra.mxu0 0.0
        %1895 = vmatprep.subr.mxu0 0.0
        %1896 = vmatpush1.xpose.msra.mxu0 0.0
        %1897 = vmatprep.subr.mxu0 0.0
        %1898 = vmatpush1.xpose.msra.mxu0 0.0
        %1899 = vmatprep.subr.mxu0 0.0
        %1900 = vmatpush1.xpose.msra.mxu0 0.0
        %1901 = vmatprep.subr.mxu0 0.0
        %1902 = vmatpush1.xpose.msra.mxu0 0.0
        %1903 = vmatprep.subr.mxu0 0.0
        %1904 = vmatpush1.xpose.msra.mxu0 0.0
        %1905 = vmatprep.subr.mxu0 0.0
        %1906 = vmatpush1.xpose.msra.mxu0 0.0
        %1907 = vmatprep.subr.mxu0 0.0
        %1908 = vmatpush1.xpose.msra.mxu0 0.0
        %1909 = vmatprep.subr.mxu0 0.0
        %1910 = vmatpush1.xpose.msra.mxu0 0.0
        %1911 = vmatprep.subr.mxu0 0.0
        %1912 = vmatpush1.xpose.msra.mxu0 0.0
        %1913 = vmatprep.subr.mxu0 0.0
        %1914 = vmatpush1.xpose.msra.mxu0 0.0
        %1915 = vmatprep.subr.mxu0 0.0
        %1916 = vmatpush1.xpose.msra.mxu0 0.0
        %1917 = vmatprep.subr.mxu0 0.0
        %1918 = vmatpush1.xpose.msra.mxu0 0.0
        %1919 = vmatprep.subr.mxu0 0.0
        %1920 = vmatpush1.xpose.msra.mxu0 0.0
        %1921 = vmatprep.subr.mxu0 0.0
        %1922 = vmatpush1.xpose.msra.mxu0 0.0
        %1923 = vmatprep.subr.mxu0 0.0
        %1924 = vmatpush1.xpose.msra.mxu0 0.0
        %1925 = vmatprep.subr.mxu0 0.0
        %1926 = vmatpush1.xpose.msra.mxu0 0.0
        %1927 = vmatprep.subr.mxu0 0.0
        %1928 = vmatpush1.xpose.msra.mxu0 0.0
        %1929 = vmatprep.subr.mxu0 0.0
        %1930 = vmatpush1.xpose.msra.mxu0 0.0
        %1931 = vmatprep.subr.mxu0 0.0
        %1932 = vmatpush1.xpose.msra.mxu0 0.0
        %1933 = vmatprep.mubr.f32.mxu0 0.0
        %1934 = vmatmul.mubr.f32.gmra.mrb[0].mxu0 %v1865
        %v1935 = vpop.f32.mrb[0].mxu0
        %v1936 = vadd.f32 0.0, %v1935
        %v1937 = vpop.f32.mrb[0].mxu0
        %1938 = vdwg.mxu0
        %v1939 = vsel %vm800, %v1858, -inf
        %1940 = vmax.xlane.f32.xlu0 %v1939
        %v1941 = vpop.xlane.xlu0 %1940
        %v1942 = vsel %vm800, %v1936, -inf
        %1943 = vmax.xlane.f32.xlu0 %v1942
        %v1944 = vpop.xlane.xlu0 %1943
        %v1945 = vsub.f32 %v1858, %v1941
        %v1946 = vsub.f32 %v1936, %v1944
        %v1947 = vmul.f32 %v1945, 1.442695
        %v1948 = vpow.pop %v1947
        %v1949 = vmul.f32 %v1946, 1.442695
        %v1950 = vpow.pop %v1949
        %v1951 = vsel %vm800, %v1948, 0.0
        %1952 = vadd.xlane.f32.xlu0 %v1951
        %v1953 = vpop.xlane.xlu0 %1952
        %v1954 = vsel %vm800, %v1950, 0.0
        %1955 = vadd.xlane.f32.xlu0 %v1954
        %v1956 = vpop.xlane.xlu0 %1955
        %v1957 = vrcp.pop %v1953
        %v1958 = vrcp.pop %v1956
        %v1959 = vmul.f32 %v1948, %v1957
        %v1960 = vmul.f32 %v1950, %v1958
        %1961 = vrot.lane.b32.xlu0 %v794, 104
        %v1962 = vpop.permute.xlu0 %1961
        %v1965 = vsel %vm800, %v1959, 0
        %1967 = vmatprep.subr.mxu0 0.0
        %1968 = vmatpush1.msra.mxu0 %v1962
        %1969 = vmatprep.subr.mxu0 0.0
        %1970 = vmatpush1.msra.mxu0 0.0
        %1971 = vmatprep.subr.mxu0 0.0
        %1972 = vmatpush1.msra.mxu0 0.0
        %1973 = vmatprep.subr.mxu0 0.0
        %1974 = vmatpush1.msra.mxu0 0.0
        %1975 = vmatprep.subr.mxu0 0.0
        %1976 = vmatpush1.msra.mxu0 0.0
        %1977 = vmatprep.subr.mxu0 0.0
        %1978 = vmatpush1.msra.mxu0 0.0
        %1979 = vmatprep.subr.mxu0 0.0
        %1980 = vmatpush1.msra.mxu0 0.0
        %1981 = vmatprep.subr.mxu0 0.0
        %1982 = vmatpush1.msra.mxu0 0.0
        %1983 = vmatprep.subr.mxu0 0.0
        %1984 = vmatpush1.msra.mxu0 0.0
        %1985 = vmatprep.subr.mxu0 0.0
        %1986 = vmatpush1.msra.mxu0 0.0
        %1987 = vmatprep.subr.mxu0 0.0
        %1988 = vmatpush1.msra.mxu0 0.0
        %1989 = vmatprep.subr.mxu0 0.0
        %1990 = vmatpush1.msra.mxu0 0.0
        %1991 = vmatprep.subr.mxu0 0.0
        %1992 = vmatpush1.msra.mxu0 0.0
        %1993 = vmatprep.subr.mxu0 0.0
        %1994 = vmatpush1.msra.mxu0 0.0
        %1995 = vmatprep.subr.mxu0 0.0
        %1996 = vmatpush1.msra.mxu0 0.0
        %1997 = vmatprep.subr.mxu0 0.0
        %1998 = vmatpush1.msra.mxu0 0.0
        %1999 = vmatprep.subr.mxu0 0.0
        %2000 = vmatpush1.msra.mxu0 0.0
        %2001 = vmatprep.subr.mxu0 0.0
        %2002 = vmatpush1.msra.mxu0 0.0
        %2003 = vmatprep.subr.mxu0 0.0
        %2004 = vmatpush1.msra.mxu0 0.0
        %2005 = vmatprep.subr.mxu0 0.0
        %2006 = vmatpush1.msra.mxu0 0.0
        %2007 = vmatprep.subr.mxu0 0.0
        %2008 = vmatpush1.msra.mxu0 0.0
        %2009 = vmatprep.subr.mxu0 0.0
        %2010 = vmatpush1.msra.mxu0 0.0
        %2011 = vmatprep.subr.mxu0 0.0
        %2012 = vmatpush1.msra.mxu0 0.0
        %2013 = vmatprep.subr.mxu0 0.0
        %2014 = vmatpush1.msra.mxu0 0.0
        %2015 = vmatprep.subr.mxu0 0.0
        %2016 = vmatpush1.msra.mxu0 0.0
        %2017 = vmatprep.subr.mxu0 0.0
        %2018 = vmatpush1.msra.mxu0 0.0
        %2019 = vmatprep.subr.mxu0 0.0
        %2020 = vmatpush1.msra.mxu0 0.0
        %2021 = vmatprep.subr.mxu0 0.0
        %2022 = vmatpush1.msra.mxu0 0.0
        %2023 = vmatprep.subr.mxu0 0.0
        %2024 = vmatpush1.msra.mxu0 0.0
        %2025 = vmatprep.subr.mxu0 0.0
        %2026 = vmatpush1.msra.mxu0 0.0
        %2027 = vmatprep.subr.mxu0 0.0
        %2028 = vmatpush1.msra.mxu0 0.0
        %2029 = vmatprep.subr.mxu0 0.0
        %2030 = vmatpush1.msra.mxu0 0.0
        %2031 = vmatprep.mubr.f32.mxu0 0.0
        %2032 = vmatmul.mubr.f32.gmra.mrb[0].mxu0 %v1965
        %v2033 = vpop.f32.mrb[0].mxu0
        %v2034 = vadd.f32 0.0, %v2033
        %v2035 = vpop.f32.mrb[0].mxu0
        %2036 = vdwg.mxu0
        %2037 = vrot.lane.b32.xlu0 %v797, 104
        %v2038 = vpop.permute.xlu0 %2037
        %v2041 = vsel %vm800, %v1960, 0
        %2043 = vmatprep.subr.mxu0 0.0
        %2044 = vmatpush1.msra.mxu0 %v2038
        %2045 = vmatprep.subr.mxu0 0.0
        %2046 = vmatpush1.msra.mxu0 0.0
        %2047 = vmatprep.subr.mxu0 0.0
        %2048 = vmatpush1.msra.mxu0 0.0
        %2049 = vmatprep.subr.mxu0 0.0
        %2050 = vmatpush1.msra.mxu0 0.0
        %2051 = vmatprep.subr.mxu0 0.0
        %2052 = vmatpush1.msra.mxu0 0.0
        %2053 = vmatprep.subr.mxu0 0.0
        %2054 = vmatpush1.msra.mxu0 0.0
        %2055 = vmatprep.subr.mxu0 0.0
        %2056 = vmatpush1.msra.mxu0 0.0
        %2057 = vmatprep.subr.mxu0 0.0
        %2058 = vmatpush1.msra.mxu0 0.0
        %2059 = vmatprep.subr.mxu0 0.0
        %2060 = vmatpush1.msra.mxu0 0.0
        %2061 = vmatprep.subr.mxu0 0.0
        %2062 = vmatpush1.msra.mxu0 0.0
        %2063 = vmatprep.subr.mxu0 0.0
        %2064 = vmatpush1.msra.mxu0 0.0
        %2065 = vmatprep.subr.mxu0 0.0
        %2066 = vmatpush1.msra.mxu0 0.0
        %2067 = vmatprep.subr.mxu0 0.0
        %2068 = vmatpush1.msra.mxu0 0.0
        %2069 = vmatprep.subr.mxu0 0.0
        %2070 = vmatpush1.msra.mxu0 0.0
        %2071 = vmatprep.subr.mxu0 0.0
        %2072 = vmatpush1.msra.mxu0 0.0
        %2073 = vmatprep.subr.mxu0 0.0
        %2074 = vmatpush1.msra.mxu0 0.0
        %2075 = vmatprep.subr.mxu0 0.0
        %2076 = vmatpush1.msra.mxu0 0.0
        %2077 = vmatprep.subr.mxu0 0.0
        %2078 = vmatpush1.msra.mxu0 0.0
        %2079 = vmatprep.subr.mxu0 0.0
        %2080 = vmatpush1.msra.mxu0 0.0
        %2081 = vmatprep.subr.mxu0 0.0
        %2082 = vmatpush1.msra.mxu0 0.0
        %2083 = vmatprep.subr.mxu0 0.0
        %2084 = vmatpush1.msra.mxu0 0.0
        %2085 = vmatprep.subr.mxu0 0.0
        %2086 = vmatpush1.msra.mxu0 0.0
        %2087 = vmatprep.subr.mxu0 0.0
        %2088 = vmatpush1.msra.mxu0 0.0
        %2089 = vmatprep.subr.mxu0 0.0
        %2090 = vmatpush1.msra.mxu0 0.0
        %2091 = vmatprep.subr.mxu0 0.0
        %2092 = vmatpush1.msra.mxu0 0.0
        %2093 = vmatprep.subr.mxu0 0.0
        %2094 = vmatpush1.msra.mxu0 0.0
        %2095 = vmatprep.subr.mxu0 0.0
        %2096 = vmatpush1.msra.mxu0 0.0
        %2097 = vmatprep.subr.mxu0 0.0
        %2098 = vmatpush1.msra.mxu0 0.0
        %2099 = vmatprep.subr.mxu0 0.0
        %2100 = vmatpush1.msra.mxu0 0.0
        %2101 = vmatprep.subr.mxu0 0.0
        %2102 = vmatpush1.msra.mxu0 0.0
        %2103 = vmatprep.subr.mxu0 0.0
        %2104 = vmatpush1.msra.mxu0 0.0
        %2105 = vmatprep.subr.mxu0 0.0
        %2106 = vmatpush1.msra.mxu0 0.0
        %2107 = vmatprep.mubr.f32.mxu0 0.0
        %2108 = vmatmul.mubr.f32.gmra.mrb[0].mxu0 %v2041
        %v2109 = vpop.f32.mrb[0].mxu0
        %v2110 = vadd.f32 0.0, %v2109
        %v2111 = vpop.f32.mrb[0].mxu0
        %2112 = vdwg.mxu0
        %2115 = vrot.lane.b32.xlu0 %v1373, 8
        %v2116 = vpop.permute.xlu0 %2115
        %2117 = vrot.lane.b32.xlu0 %v1450, 8
        %v2118 = vpop.permute.xlu0 %2117
        %2123 = vrot.lane.b32.xlu0 %v1704, 16
        %v2124 = vpop.permute.xlu0 %2123
        %2125 = vrot.lane.b32.xlu0 %v1780, 16
        %v2126 = vpop.permute.xlu0 %2125
        %2131 = vrot.lane.b32.xlu0 %v2034, 24
        %v2132 = vpop.permute.xlu0 %2131
        %2133 = vrot.lane.b32.xlu0 %v2110, 24
        %v2134 = vpop.permute.xlu0 %2133
        %v2137 = vsel %vm800, %v1045, %v2116
        %v2138 = vsel %vm800, %v1118, %v2118
        %vm2139 = vcmask 130048
        %v2140 = vsel %vm2139, %v2137, %v2124
        %v2141 = vsel %vm2139, %v2138, %v2126
        %vm2142 = vcmask 195584
        %v2143 = vsel %vm2142, %v2140, %v2132
        %v2144 = vsel %vm2142, %v2141, %v2134
        %v2145 = vpack.c.bf16 %v2144, %v2143
        %v2146 = vld [vmem:[%s469] sm:$0xf]
        %v2147 = vld [vmem:[%s469 + $0x4] sm:$0xf]
        %v2148 = vld [vmem:[%s469 + $0x8] sm:$0xf]
        %v2149 = vld [vmem:[%s469 + $0xc] sm:$0xf]
        %v2150 = vlaneseq
        %v2151 = vshrl.u32 %v2150, 7
        %v2152 = vsub.s32 3, %v2151
        %v2153 = vrot.slane %v606, %v2152
        %v2158 = vunpack.c.l.b16 %v2146
        %v2159 = vunpack.c.l.b16 %v2147
        %v2160 = vunpack.c.l.b16 %v2148
        %v2161 = vunpack.c.l.b16 %v2149
        %v2162 = vpack.c.b16 %v2159, %v2158
        %v2163 = vpack.c.b16 %v2161, %v2160
        %v2167 = vsel %vm629, %v2145, 0
        %2169 = vmatprep.subr.bf16.mxu0 0
        %2170 = vmatpush1.bf16.msra.mxu0 %v2162
        %2171 = vmatprep.subr.bf16.mxu0 0
        %2172 = vmatpush1.bf16.msra.mxu0 %v2163
        %2173 = vmatprep.subr.bf16.mxu0 0
        %2174 = vmatpush1.bf16.msra.mxu0 0
        %2175 = vmatprep.subr.bf16.mxu0 0
        %2176 = vmatpush1.bf16.msra.mxu0 0
        %2177 = vmatprep.subr.bf16.mxu0 0
        %2178 = vmatpush1.bf16.msra.mxu0 0
        %2179 = vmatprep.subr.bf16.mxu0 0
        %2180 = vmatpush1.bf16.msra.mxu0 0
        %2181 = vmatprep.subr.bf16.mxu0 0
        %2182 = vmatpush1.bf16.msra.mxu0 0
        %2183 = vmatprep.subr.bf16.mxu0 0
        %2184 = vmatpush1.bf16.msra.mxu0 0
        %2185 = vmatprep.subr.bf16.mxu0 0
        %2186 = vmatpush1.bf16.msra.mxu0 0
        %2187 = vmatprep.subr.bf16.mxu0 0
        %2188 = vmatpush1.bf16.msra.mxu0 0
        %2189 = vmatprep.subr.bf16.mxu0 0
        %2190 = vmatpush1.bf16.msra.mxu0 0
        %2191 = vmatprep.subr.bf16.mxu0 0
        %2192 = vmatpush1.bf16.msra.mxu0 0
        %2193 = vmatprep.subr.bf16.mxu0 0
        %2194 = vmatpush1.bf16.msra.mxu0 0
        %2195 = vmatprep.subr.bf16.mxu0 0
        %2196 = vmatpush1.bf16.msra.mxu0 0
        %2197 = vmatprep.subr.bf16.mxu0 0
        %2198 = vmatpush1.bf16.msra.mxu0 0
        %2199 = vmatprep.subr.bf16.mxu0 0
        %2200 = vmatpush1.bf16.msra.mxu0 0
        %2201 = vmatprep.mubr.bf16.mxu0 0
        %2202 = vmatmul.mubr.bf16.gmra.mrb[0].mxu0 %v2167
        %v2203 = vpop.f32.mrb[0].mxu0
        %v2204 = vadd.f32 %v2153, %v2203
        %v2205 = vpop.f32.mrb[0].mxu0
        %v2206 = vpop.f32.mrb[0].mxu0
        %v2207 = vadd.f32 %v2153, %v2206
        %v2208 = vpop.f32.mrb[0].mxu0
        %2209 = vdwg.mxu0
        %v2210 = vadd.f32 %v604, %v2204
        %v2211 = vadd.f32 %v605, %v2207
        %v2212 = vsel %vm629, %v2210, 0.0
        %2213 = vadd.xlane.f32.xlu0 %v2212
        %v2214 = vpop.xlane.xlu0 %2213
        %v2215 = vsel %vm629, %v2211, 0.0
        %2216 = vadd.xlane.f32.xlu0 %v2215
        %v2217 = vpop.xlane.xlu0 %2216
        %v2218 = vmul.f32 %v2210, %v2210
        %v2219 = vmul.f32 %v2211, %v2211
        %v2220 = vsel %vm629, %v2218, 0.0
        %2221 = vadd.xlane.f32.xlu0 %v2220
        %v2222 = vpop.xlane.xlu0 %2221
        %v2223 = vsel %vm629, %v2219, 0.0
        %2224 = vadd.xlane.f32.xlu0 %v2223
        %v2225 = vpop.xlane.xlu0 %2224
        %v2226 = vmul.f32 %v2214, 0.03125
        %v2227 = vmul.f32 %v2217, 0.03125
        %v2228 = vmul.f32 %v2222, 0.03125
        %v2229 = vmul.f32 %v2225, 0.03125
        %v2230 = vmul.f32 %v2226, %v2226
        %v2231 = vmul.f32 %v2227, %v2227
        %v2232 = vsub.f32 %v2228, %v2230
        %v2233 = vsub.f32 %v2229, %v2231
        %v2234 = vsub.f32 %v2210, %v2226
        %v2235 = vsub.f32 %v2211, %v2227
        %v2236 = vadd.f32 %v2232, 1e-05
        %v2237 = vadd.f32 %v2233, 1e-05
        %v2238 = vrsqrt.pop %v2236
        %v2239 = vrsqrt.pop %v2237
        %v2240 = vmul.f32 %v2234, %v2238
        %v2241 = vmul.f32 %v2235, %v2239
        %v2242 = vlaneseq
        %v2243 = vshrl.u32 %v2242, 7
        %v2244 = vsub.s32 5, %v2243
        %v2245 = vrot.slane %v606, %v2244
        %v2246 = vmul.f32 %v2240, %v2245
        %v2247 = vmul.f32 %v2241, %v2245
        %v2248 = vlaneseq
        %v2249 = vshrl.u32 %v2248, 7
        %v2250 = vsub.s32 6, %v2249
        %v2251 = vrot.slane %v606, %v2250
        %v2252 = vadd.f32 %v2246, %v2251
        %v2253 = vadd.f32 %v2247, %v2251
        %v2254 = vpack.c.bf16 %v2253, %v2252
        %v2255 = vld [vmem:[%s474] sm:$0xff]
        %v2256 = vld [vmem:[%s474 + $0x8] sm:$0xff]
        %v2257 = vld [vmem:[%s474 + $0x10] sm:$0xff]
        %v2258 = vld [vmem:[%s474 + $0x18] sm:$0xff]
        %v2259 = vld [vmem:[%s474 + $0x20] sm:$0xff]
        %v2260 = vld [vmem:[%s474 + $0x28] sm:$0xff]
        %v2261 = vld [vmem:[%s474 + $0x30] sm:$0xff]
        %v2262 = vld [vmem:[%s474 + $0x38] sm:$0xff]
        %v2263 = vld [vmem:[%s474 + $0x40] sm:$0xff]
        %v2264 = vld [vmem:[%s474 + $0x48] sm:$0xff]
        %v2265 = vld [vmem:[%s474 + $0x50] sm:$0xff]
        %v2266 = vld [vmem:[%s474 + $0x58] sm:$0xff]
        %v2267 = vld [vmem:[%s474 + $0x60] sm:$0xff]
        %v2268 = vld [vmem:[%s474 + $0x68] sm:$0xff]
        %v2269 = vld [vmem:[%s474 + $0x70] sm:$0xff]
        %v2270 = vld [vmem:[%s474 + $0x78] sm:$0xff]
        %v2271 = vld [vmem:[%s474 + $0x80] sm:$0xff]
        %v2272 = vld [vmem:[%s474 + $0x88] sm:$0xff]
        %v2273 = vld [vmem:[%s474 + $0x90] sm:$0xff]
        %v2274 = vld [vmem:[%s474 + $0x98] sm:$0xff]
        %v2275 = vld [vmem:[%s474 + $0xa0] sm:$0xff]
        %v2276 = vld [vmem:[%s474 + $0xa8] sm:$0xff]
        %v2277 = vld [vmem:[%s474 + $0xb0] sm:$0xff]
        %v2278 = vld [vmem:[%s474 + $0xb8] sm:$0xff]
        %v2279 = vld [vmem:[%s474 + $0xc0] sm:$0xff]
        %v2280 = vld [vmem:[%s474 + $0xc8] sm:$0xff]
        %v2281 = vld [vmem:[%s474 + $0xd0] sm:$0xff]
        %v2282 = vld [vmem:[%s474 + $0xd8] sm:$0xff]
        %v2283 = vld [vmem:[%s474 + $0xe0] sm:$0xff]
        %v2284 = vld [vmem:[%s474 + $0xe8] sm:$0xff]
        %v2285 = vld [vmem:[%s474 + $0xf0] sm:$0xff]
        %v2286 = vld [vmem:[%s474 + $0xf8] sm:$0xff]
        %v2287 = vld [vmem:[%s478] sm:$0xff]
        %v2288 = vld [vmem:[%s478 + $0x8] sm:$0xff]
        %v2291 = vlaneseq
        %v2292 = vshrl.u32 %v2291, 7
        %v2293 = vsub.s32 0, %v2292
        %v2294 = vrot.slane %v2287, %v2293
        %v2295 = vlaneseq
        %v2296 = vshrl.u32 %v2295, 7
        %v2297 = vsub.s32 1, %v2296
        %v2298 = vrot.slane %v2287, %v2297
        %v2299 = vlaneseq
        %v2300 = vshrl.u32 %v2299, 7
        %v2301 = vsub.s32 2, %v2300
        %v2302 = vrot.slane %v2287, %v2301
        %v2303 = vlaneseq
        %v2304 = vshrl.u32 %v2303, 7
        %v2305 = vsub.s32 3, %v2304
        %v2306 = vrot.slane %v2287, %v2305
        %v2307 = vlaneseq
        %v2308 = vshrl.u32 %v2307, 7
        %v2309 = vsub.s32 4, %v2308
        %v2310 = vrot.slane %v2287, %v2309
        %v2311 = vlaneseq
        %v2312 = vshrl.u32 %v2311, 7
        %v2313 = vsub.s32 5, %v2312
        %v2314 = vrot.slane %v2287, %v2313
        %v2315 = vlaneseq
        %v2316 = vshrl.u32 %v2315, 7
        %v2317 = vsub.s32 6, %v2316
        %v2318 = vrot.slane %v2287, %v2317
        %v2319 = vlaneseq
        %v2320 = vshrl.u32 %v2319, 7
        %v2321 = vsub.s32 7, %v2320
        %v2322 = vrot.slane %v2287, %v2321
        %v2323 = vlaneseq
        %v2324 = vshrl.u32 %v2323, 7
        %v2325 = vsub.s32 0, %v2324
        %v2326 = vrot.slane %v2288, %v2325
        %v2327 = vlaneseq
        %v2328 = vshrl.u32 %v2327, 7
        %v2329 = vsub.s32 1, %v2328
        %v2330 = vrot.slane %v2288, %v2329
        %v2331 = vlaneseq
        %v2332 = vshrl.u32 %v2331, 7
        %v2333 = vsub.s32 2, %v2332
        %v2334 = vrot.slane %v2288, %v2333
        %v2335 = vlaneseq
        %v2336 = vshrl.u32 %v2335, 7
        %v2337 = vsub.s32 3, %v2336
        %v2338 = vrot.slane %v2288, %v2337
        %v2339 = vlaneseq
        %v2340 = vshrl.u32 %v2339, 7
        %v2341 = vsub.s32 4, %v2340
        %v2342 = vrot.slane %v2288, %v2341
        %v2343 = vlaneseq
        %v2344 = vshrl.u32 %v2343, 7
        %v2345 = vsub.s32 5, %v2344
        %v2346 = vrot.slane %v2288, %v2345
        %v2347 = vlaneseq
        %v2348 = vshrl.u32 %v2347, 7
        %v2349 = vsub.s32 6, %v2348
        %v2350 = vrot.slane %v2288, %v2349
        %v2351 = vlaneseq
        %v2352 = vshrl.u32 %v2351, 7
        %v2353 = vsub.s32 7, %v2352
        %v2354 = vrot.slane %v2288, %v2353
        %v2403 = vunpack.c.l.b16 %v2255
        %v2404 = vunpack.c.h.b16 %v2255
        %v2405 = vunpack.c.l.b16 %v2256
        %v2406 = vunpack.c.h.b16 %v2256
        %v2407 = vunpack.c.l.b16 %v2257
        %v2408 = vunpack.c.h.b16 %v2257
        %v2409 = vunpack.c.l.b16 %v2258
        %v2410 = vunpack.c.h.b16 %v2258
        %v2411 = vunpack.c.l.b16 %v2259
        %v2412 = vunpack.c.h.b16 %v2259
        %v2413 = vunpack.c.l.b16 %v2260
        %v2414 = vunpack.c.h.b16 %v2260
        %v2415 = vunpack.c.l.b16 %v2261
        %v2416 = vunpack.c.h.b16 %v2261
        %v2417 = vunpack.c.l.b16 %v2262
        %v2418 = vunpack.c.h.b16 %v2262
        %v2419 = vunpack.c.l.b16 %v2263
        %v2420 = vunpack.c.h.b16 %v2263
        %v2421 = vunpack.c.l.b16 %v2264
        %v2422 = vunpack.c.h.b16 %v2264
        %v2423 = vunpack.c.l.b16 %v2265
        %v2424 = vunpack.c.h.b16 %v2265
        %v2425 = vunpack.c.l.b16 %v2266
        %v2426 = vunpack.c.h.b16 %v2266
        %v2427 = vunpack.c.l.b16 %v2267
        %v2428 = vunpack.c.h.b16 %v2267
        %v2429 = vunpack.c.l.b16 %v2268
        %v2430 = vunpack.c.h.b16 %v2268
        %v2431 = vunpack.c.l.b16 %v2269
        %v2432 = vunpack.c.h.b16 %v2269
        %v2433 = vunpack.c.l.b16 %v2270
        %v2434 = vunpack.c.h.b16 %v2270
        %v2435 = vunpack.c.l.b16 %v2271
        %v2436 = vunpack.c.h.b16 %v2271
        %v2437 = vunpack.c.l.b16 %v2272
        %v2438 = vunpack.c.h.b16 %v2272
        %v2439 = vunpack.c.l.b16 %v2273
        %v2440 = vunpack.c.h.b16 %v2273
        %v2441 = vunpack.c.l.b16 %v2274
        %v2442 = vunpack.c.h.b16 %v2274
        %v2443 = vunpack.c.l.b16 %v2275
        %v2444 = vunpack.c.h.b16 %v2275
        %v2445 = vunpack.c.l.b16 %v2276
        %v2446 = vunpack.c.h.b16 %v2276
        %v2447 = vunpack.c.l.b16 %v2277
        %v2448 = vunpack.c.h.b16 %v2277
        %v2449 = vunpack.c.l.b16 %v2278
        %v2450 = vunpack.c.h.b16 %v2278
        %v2451 = vunpack.c.l.b16 %v2279
        %v2452 = vunpack.c.h.b16 %v2279
        %v2453 = vunpack.c.l.b16 %v2280
        %v2454 = vunpack.c.h.b16 %v2280
        %v2455 = vunpack.c.l.b16 %v2281
        %v2456 = vunpack.c.h.b16 %v2281
        %v2457 = vunpack.c.l.b16 %v2282
        %v2458 = vunpack.c.h.b16 %v2282
        %v2459 = vunpack.c.l.b16 %v2283
        %v2460 = vunpack.c.h.b16 %v2283
        %v2461 = vunpack.c.l.b16 %v2284
        %v2462 = vunpack.c.h.b16 %v2284
        %v2463 = vunpack.c.l.b16 %v2285
        %v2464 = vunpack.c.h.b16 %v2285
        %v2465 = vunpack.c.l.b16 %v2286
        %v2466 = vunpack.c.h.b16 %v2286
        %v2467 = vpack.c.b16 %v2419, %v2403
        %v2468 = vpack.c.b16 %v2420, %v2404
        %v2469 = vpack.c.b16 %v2421, %v2405
        %v2470 = vpack.c.b16 %v2422, %v2406
        %v2471 = vpack.c.b16 %v2423, %v2407
        %v2472 = vpack.c.b16 %v2424, %v2408
        %v2473 = vpack.c.b16 %v2425, %v2409
        %v2474 = vpack.c.b16 %v2426, %v2410
        %v2475 = vpack.c.b16 %v2427, %v2411
        %v2476 = vpack.c.b16 %v2428, %v2412
        %v2477 = vpack.c.b16 %v2429, %v2413
        %v2478 = vpack.c.b16 %v2430, %v2414
        %v2479 = vpack.c.b16 %v2431, %v2415
        %v2480 = vpack.c.b16 %v2432, %v2416
        %v2481 = vpack.c.b16 %v2433, %v2417
        %v2482 = vpack.c.b16 %v2434, %v2418
        %v2483 = vpack.c.b16 %v2451, %v2435
        %v2484 = vpack.c.b16 %v2452, %v2436
        %v2485 = vpack.c.b16 %v2453, %v2437
        %v2486 = vpack.c.b16 %v2454, %v2438
        %v2487 = vpack.c.b16 %v2455, %v2439
        %v2488 = vpack.c.b16 %v2456, %v2440
        %v2489 = vpack.c.b16 %v2457, %v2441
        %v2490 = vpack.c.b16 %v2458, %v2442
        %v2491 = vpack.c.b16 %v2459, %v2443
        %v2492 = vpack.c.b16 %v2460, %v2444
        %v2493 = vpack.c.b16 %v2461, %v2445
        %v2494 = vpack.c.b16 %v2462, %v2446
        %v2495 = vpack.c.b16 %v2463, %v2447
        %v2496 = vpack.c.b16 %v2464, %v2448
        %v2497 = vpack.c.b16 %v2465, %v2449
        %v2498 = vpack.c.b16 %v2466, %v2450
        %v2532 = vsel %vm629, %v2254, 0
        %2534 = vmatprep.subr.bf16.mxu0 %v2468
        %2535 = vmatpush1.bf16.msra.mxu0 %v2467
        %2536 = vmatprep.subr.bf16.mxu0 %v2484
        %2537 = vmatpush1.bf16.msra.mxu0 %v2483
        %2538 = vmatprep.subr.bf16.mxu0 0
        %2539 = vmatpush1.bf16.msra.mxu0 0
        %2540 = vmatprep.subr.bf16.mxu0 0
        %2541 = vmatpush1.bf16.msra.mxu0 0
        %2542 = vmatprep.subr.bf16.mxu0 0
        %2543 = vmatpush1.bf16.msra.mxu0 0
        %2544 = vmatprep.subr.bf16.mxu0 0
        %2545 = vmatpush1.bf16.msra.mxu0 0
        %2546 = vmatprep.subr.bf16.mxu0 0
        %2547 = vmatpush1.bf16.msra.mxu0 0
        %2548 = vmatprep.subr.bf16.mxu0 0
        %2549 = vmatpush1.bf16.msra.mxu0 0
        %2550 = vmatprep.subr.bf16.mxu0 0
        %2551 = vmatpush1.bf16.msra.mxu0 0
        %2552 = vmatprep.subr.bf16.mxu0 0
        %2553 = vmatpush1.bf16.msra.mxu0 0
        %2554 = vmatprep.subr.bf16.mxu0 0
        %2555 = vmatpush1.bf16.msra.mxu0 0
        %2556 = vmatprep.subr.bf16.mxu0 0
        %2557 = vmatpush1.bf16.msra.mxu0 0
        %2558 = vmatprep.subr.bf16.mxu0 0
        %2559 = vmatpush1.bf16.msra.mxu0 0
        %2560 = vmatprep.subr.bf16.mxu0 0
        %2561 = vmatpush1.bf16.msra.mxu0 0
        %2562 = vmatprep.subr.bf16.mxu0 0
        %2563 = vmatpush1.bf16.msra.mxu0 0
        %2564 = vmatprep.subr.bf16.mxu0 0
        %2565 = vmatpush1.bf16.msra.mxu0 0
        %2566 = vmatprep.mubr.bf16.mxu0 0
        %2567 = vmatmul.mubr.bf16.gmra.mrb[0].mxu0 %v2532
        %v2568 = vpop.f32.mrb[0].mxu0
        %v2569 = vadd.f32 %v2294, %v2568
        %v2570 = vpop.f32.mrb[0].mxu0
        %v2571 = vadd.f32 %v2298, %v2570
        %v2572 = vpop.f32.mrb[0].mxu0
        %v2573 = vadd.f32 %v2294, %v2572
        %v2574 = vpop.f32.mrb[0].mxu0
        %v2575 = vadd.f32 %v2298, %v2574
        %2576 = vdwg.mxu0
        %2577 = vmatprep.subr.bf16.mxu0 %v2470
        %2578 = vmatpush1.bf16.msra.mxu0 %v2469
        %2579 = vmatprep.subr.bf16.mxu0 %v2486
        %2580 = vmatpush1.bf16.msra.mxu0 %v2485
        %2581 = vmatprep.subr.bf16.mxu0 0
        %2582 = vmatpush1.bf16.msra.mxu0 0
        %2583 = vmatprep.subr.bf16.mxu0 0
        %2584 = vmatpush1.bf16.msra.mxu0 0
        %2585 = vmatprep.subr.bf16.mxu0 0
        %2586 = vmatpush1.bf16.msra.mxu0 0
        %2587 = vmatprep.subr.bf16.mxu0 0
        %2588 = vmatpush1.bf16.msra.mxu0 0
        %2589 = vmatprep.subr.bf16.mxu0 0
        %2590 = vmatpush1.bf16.msra.mxu0 0
        %2591 = vmatprep.subr.bf16.mxu0 0
        %2592 = vmatpush1.bf16.msra.mxu0 0
        %2593 = vmatprep.subr.bf16.mxu0 0
        %2594 = vmatpush1.bf16.msra.mxu0 0
        %2595 = vmatprep.subr.bf16.mxu0 0
        %2596 = vmatpush1.bf16.msra.mxu0 0
        %2597 = vmatprep.subr.bf16.mxu0 0
        %2598 = vmatpush1.bf16.msra.mxu0 0
        %2599 = vmatprep.subr.bf16.mxu0 0
        %2600 = vmatpush1.bf16.msra.mxu0 0
        %2601 = vmatprep.subr.bf16.mxu0 0
        %2602 = vmatpush1.bf16.msra.mxu0 0
        %2603 = vmatprep.subr.bf16.mxu0 0
        %2604 = vmatpush1.bf16.msra.mxu0 0
        %2605 = vmatprep.subr.bf16.mxu0 0
        %2606 = vmatpush1.bf16.msra.mxu0 0
        %2607 = vmatprep.subr.bf16.mxu0 0
        %2608 = vmatpush1.bf16.msra.mxu0 0
        %2609 = vmatprep.mubr.bf16.mxu0 0
        %2610 = vmatmul.mubr.bf16.gmra.mrb[0].mxu0 %v2532
        %v2611 = vpop.f32.mrb[0].mxu0
        %v2612 = vadd.f32 %v2302, %v2611
        %v2613 = vpop.f32.mrb[0].mxu0
        %v2614 = vadd.f32 %v2306, %v2613
        %v2615 = vpop.f32.mrb[0].mxu0
        %v2616 = vadd.f32 %v2302, %v2615
        %v2617 = vpop.f32.mrb[0].mxu0
        %v2618 = vadd.f32 %v2306, %v2617
        %2619 = vdwg.mxu0
        %2620 = vmatprep.subr.bf16.mxu0 %v2472
        %2621 = vmatpush1.bf16.msra.mxu0 %v2471
        %2622 = vmatprep.subr.bf16.mxu0 %v2488
        %2623 = vmatpush1.bf16.msra.mxu0 %v2487
        %2624 = vmatprep.subr.bf16.mxu0 0
        %2625 = vmatpush1.bf16.msra.mxu0 0
        %2626 = vmatprep.subr.bf16.mxu0 0
        %2627 = vmatpush1.bf16.msra.mxu0 0
        %2628 = vmatprep.subr.bf16.mxu0 0
        %2629 = vmatpush1.bf16.msra.mxu0 0
        %2630 = vmatprep.subr.bf16.mxu0 0
        %2631 = vmatpush1.bf16.msra.mxu0 0
        %2632 = vmatprep.subr.bf16.mxu0 0
        %2633 = vmatpush1.bf16.msra.mxu0 0
        %2634 = vmatprep.subr.bf16.mxu0 0
        %2635 = vmatpush1.bf16.msra.mxu0 0
        %2636 = vmatprep.subr.bf16.mxu0 0
        %2637 = vmatpush1.bf16.msra.mxu0 0
        %2638 = vmatprep.subr.bf16.mxu0 0
        %2639 = vmatpush1.bf16.msra.mxu0 0
        %2640 = vmatprep.subr.bf16.mxu0 0
        %2641 = vmatpush1.bf16.msra.mxu0 0
        %2642 = vmatprep.subr.bf16.mxu0 0
        %2643 = vmatpush1.bf16.msra.mxu0 0
        %2644 = vmatprep.subr.bf16.mxu0 0
        %2645 = vmatpush1.bf16.msra.mxu0 0
        %2646 = vmatprep.subr.bf16.mxu0 0
        %2647 = vmatpush1.bf16.msra.mxu0 0
        %2648 = vmatprep.subr.bf16.mxu0 0
        %2649 = vmatpush1.bf16.msra.mxu0 0
        %2650 = vmatprep.subr.bf16.mxu0 0
        %2651 = vmatpush1.bf16.msra.mxu0 0
        %2652 = vmatprep.mubr.bf16.mxu0 0
        %2653 = vmatmul.mubr.bf16.gmra.mrb[0].mxu0 %v2532
        %v2654 = vpop.f32.mrb[0].mxu0
        %v2655 = vadd.f32 %v2310, %v2654
        %v2656 = vpop.f32.mrb[0].mxu0
        %v2657 = vadd.f32 %v2314, %v2656
        %v2658 = vpop.f32.mrb[0].mxu0
        %v2659 = vadd.f32 %v2310, %v2658
        %v2660 = vpop.f32.mrb[0].mxu0
        %v2661 = vadd.f32 %v2314, %v2660
        %2662 = vdwg.mxu0
        %2663 = vmatprep.subr.bf16.mxu0 %v2474
        %2664 = vmatpush1.bf16.msra.mxu0 %v2473
        %2665 = vmatprep.subr.bf16.mxu0 %v2490
        %2666 = vmatpush1.bf16.msra.mxu0 %v2489
        %2667 = vmatprep.subr.bf16.mxu0 0
        %2668 = vmatpush1.bf16.msra.mxu0 0
        %2669 = vmatprep.subr.bf16.mxu0 0
        %2670 = vmatpush1.bf16.msra.mxu0 0
        %2671 = vmatprep.subr.bf16.mxu0 0
        %2672 = vmatpush1.bf16.msra.mxu0 0
        %2673 = vmatprep.subr.bf16.mxu0 0
        %2674 = vmatpush1.bf16.msra.mxu0 0
        %2675 = vmatprep.subr.bf16.mxu0 0
        %2676 = vmatpush1.bf16.msra.mxu0 0
        %2677 = vmatprep.subr.bf16.mxu0 0
        %2678 = vmatpush1.bf16.msra.mxu0 0
        %2679 = vmatprep.subr.bf16.mxu0 0
        %2680 = vmatpush1.bf16.msra.mxu0 0
        %2681 = vmatprep.subr.bf16.mxu0 0
        %2682 = vmatpush1.bf16.msra.mxu0 0
        %2683 = vmatprep.subr.bf16.mxu0 0
        %2684 = vmatpush1.bf16.msra.mxu0 0
        %2685 = vmatprep.subr.bf16.mxu0 0
        %2686 = vmatpush1.bf16.msra.mxu0 0
        %2687 = vmatprep.subr.bf16.mxu0 0
        %2688 = vmatpush1.bf16.msra.mxu0 0
        %2689 = vmatprep.subr.bf16.mxu0 0
        %2690 = vmatpush1.bf16.msra.mxu0 0
        %2691 = vmatprep.subr.bf16.mxu0 0
        %2692 = vmatpush1.bf16.msra.mxu0 0
        %2693 = vmatprep.subr.bf16.mxu0 0
        %2694 = vmatpush1.bf16.msra.mxu0 0
        %2695 = vmatprep.mubr.bf16.mxu0 0
        %2696 = vmatmul.mubr.bf16.gmra.mrb[0].mxu0 %v2532
        %v2697 = vpop.f32.mrb[0].mxu0
        %v2698 = vadd.f32 %v2318, %v2697
        %v2699 = vpop.f32.mrb[0].mxu0
        %v2700 = vadd.f32 %v2322, %v2699
        %v2701 = vpop.f32.mrb[0].mxu0
        %v2702 = vadd.f32 %v2318, %v2701
        %v2703 = vpop.f32.mrb[0].mxu0
        %v2704 = vadd.f32 %v2322, %v2703
        %2705 = vdwg.mxu0
        %2706 = vmatprep.subr.bf16.mxu0 %v2476
        %2707 = vmatpush1.bf16.msra.mxu0 %v2475
        %2708 = vmatprep.subr.bf16.mxu0 %v2492
        %2709 = vmatpush1.bf16.msra.mxu0 %v2491
        %2710 = vmatprep.subr.bf16.mxu0 0
        %2711 = vmatpush1.bf16.msra.mxu0 0
        %2712 = vmatprep.subr.bf16.mxu0 0
        %2713 = vmatpush1.bf16.msra.mxu0 0
        %2714 = vmatprep.subr.bf16.mxu0 0
        %2715 = vmatpush1.bf16.msra.mxu0 0
        %2716 = vmatprep.subr.bf16.mxu0 0
        %2717 = vmatpush1.bf16.msra.mxu0 0
        %2718 = vmatprep.subr.bf16.mxu0 0
        %2719 = vmatpush1.bf16.msra.mxu0 0
        %2720 = vmatprep.subr.bf16.mxu0 0
        %2721 = vmatpush1.bf16.msra.mxu0 0
        %2722 = vmatprep.subr.bf16.mxu0 0
        %2723 = vmatpush1.bf16.msra.mxu0 0
        %2724 = vmatprep.subr.bf16.mxu0 0
        %2725 = vmatpush1.bf16.msra.mxu0 0
        %2726 = vmatprep.subr.bf16.mxu0 0
        %2727 = vmatpush1.bf16.msra.mxu0 0
        %2728 = vmatprep.subr.bf16.mxu0 0
        %2729 = vmatpush1.bf16.msra.mxu0 0
        %2730 = vmatprep.subr.bf16.mxu0 0
        %2731 = vmatpush1.bf16.msra.mxu0 0
        %2732 = vmatprep.subr.bf16.mxu0 0
        %2733 = vmatpush1.bf16.msra.mxu0 0
        %2734 = vmatprep.subr.bf16.mxu0 0
        %2735 = vmatpush1.bf16.msra.mxu0 0
        %2736 = vmatprep.subr.bf16.mxu0 0
        %2737 = vmatpush1.bf16.msra.mxu0 0
        %2738 = vmatprep.mubr.bf16.mxu0 0
        %2739 = vmatmul.mubr.bf16.gmra.mrb[0].mxu0 %v2532
        %v2740 = vpop.f32.mrb[0].mxu0
        %v2741 = vadd.f32 %v2326, %v2740
        %v2742 = vpop.f32.mrb[0].mxu0
        %v2743 = vadd.f32 %v2330, %v2742
        %v2744 = vpop.f32.mrb[0].mxu0
        %v2745 = vadd.f32 %v2326, %v2744
        %v2746 = vpop.f32.mrb[0].mxu0
        %v2747 = vadd.f32 %v2330, %v2746
        %2748 = vdwg.mxu0
        %2749 = vmatprep.subr.bf16.mxu0 %v2478
        %2750 = vmatpush1.bf16.msra.mxu0 %v2477
        %2751 = vmatprep.subr.bf16.mxu0 %v2494
        %2752 = vmatpush1.bf16.msra.mxu0 %v2493
        %2753 = vmatprep.subr.bf16.mxu0 0
        %2754 = vmatpush1.bf16.msra.mxu0 0
        %2755 = vmatprep.subr.bf16.mxu0 0
        %2756 = vmatpush1.bf16.msra.mxu0 0
        %2757 = vmatprep.subr.bf16.mxu0 0
        %2758 = vmatpush1.bf16.msra.mxu0 0
        %2759 = vmatprep.subr.bf16.mxu0 0
        %2760 = vmatpush1.bf16.msra.mxu0 0
        %2761 = vmatprep.subr.bf16.mxu0 0
        %2762 = vmatpush1.bf16.msra.mxu0 0
        %2763 = vmatprep.subr.bf16.mxu0 0
        %2764 = vmatpush1.bf16.msra.mxu0 0
        %2765 = vmatprep.subr.bf16.mxu0 0
        %2766 = vmatpush1.bf16.msra.mxu0 0
        %2767 = vmatprep.subr.bf16.mxu0 0
        %2768 = vmatpush1.bf16.msra.mxu0 0
        %2769 = vmatprep.subr.bf16.mxu0 0
        %2770 = vmatpush1.bf16.msra.mxu0 0
        %2771 = vmatprep.subr.bf16.mxu0 0
        %2772 = vmatpush1.bf16.msra.mxu0 0
        %2773 = vmatprep.subr.bf16.mxu0 0
        %2774 = vmatpush1.bf16.msra.mxu0 0
        %2775 = vmatprep.subr.bf16.mxu0 0
        %2776 = vmatpush1.bf16.msra.mxu0 0
        %2777 = vmatprep.subr.bf16.mxu0 0
        %2778 = vmatpush1.bf16.msra.mxu0 0
        %2779 = vmatprep.subr.bf16.mxu0 0
        %2780 = vmatpush1.bf16.msra.mxu0 0
        %2781 = vmatprep.mubr.bf16.mxu0 0
        %2782 = vmatmul.mubr.bf16.gmra.mrb[0].mxu0 %v2532
        %v2783 = vpop.f32.mrb[0].mxu0
        %v2784 = vadd.f32 %v2334, %v2783
        %v2785 = vpop.f32.mrb[0].mxu0
        %v2786 = vadd.f32 %v2338, %v2785
        %v2787 = vpop.f32.mrb[0].mxu0
        %v2788 = vadd.f32 %v2334, %v2787
        %v2789 = vpop.f32.mrb[0].mxu0
        %v2790 = vadd.f32 %v2338, %v2789
        %2791 = vdwg.mxu0
        %2792 = vmatprep.subr.bf16.mxu0 %v2480
        %2793 = vmatpush1.bf16.msra.mxu0 %v2479
        %2794 = vmatprep.subr.bf16.mxu0 %v2496
        %2795 = vmatpush1.bf16.msra.mxu0 %v2495
        %2796 = vmatprep.subr.bf16.mxu0 0
        %2797 = vmatpush1.bf16.msra.mxu0 0
        %2798 = vmatprep.subr.bf16.mxu0 0
        %2799 = vmatpush1.bf16.msra.mxu0 0
        %2800 = vmatprep.subr.bf16.mxu0 0
        %2801 = vmatpush1.bf16.msra.mxu0 0
        %2802 = vmatprep.subr.bf16.mxu0 0
        %2803 = vmatpush1.bf16.msra.mxu0 0
        %2804 = vmatprep.subr.bf16.mxu0 0
        %2805 = vmatpush1.bf16.msra.mxu0 0
        %2806 = vmatprep.subr.bf16.mxu0 0
        %2807 = vmatpush1.bf16.msra.mxu0 0
        %2808 = vmatprep.subr.bf16.mxu0 0
        %2809 = vmatpush1.bf16.msra.mxu0 0
        %2810 = vmatprep.subr.bf16.mxu0 0
        %2811 = vmatpush1.bf16.msra.mxu0 0
        %2812 = vmatprep.subr.bf16.mxu0 0
        %2813 = vmatpush1.bf16.msra.mxu0 0
        %2814 = vmatprep.subr.bf16.mxu0 0
        %2815 = vmatpush1.bf16.msra.mxu0 0
        %2816 = vmatprep.subr.bf16.mxu0 0
        %2817 = vmatpush1.bf16.msra.mxu0 0
        %2818 = vmatprep.subr.bf16.mxu0 0
        %2819 = vmatpush1.bf16.msra.mxu0 0
        %2820 = vmatprep.subr.bf16.mxu0 0
        %2821 = vmatpush1.bf16.msra.mxu0 0
        %2822 = vmatprep.subr.bf16.mxu0 0
        %2823 = vmatpush1.bf16.msra.mxu0 0
        %2824 = vmatprep.mubr.bf16.mxu0 0
        %2825 = vmatmul.mubr.bf16.gmra.mrb[0].mxu0 %v2532
        %v2826 = vpop.f32.mrb[0].mxu0
        %v2827 = vadd.f32 %v2342, %v2826
        %v2828 = vpop.f32.mrb[0].mxu0
        %v2829 = vadd.f32 %v2346, %v2828
        %v2830 = vpop.f32.mrb[0].mxu0
        %v2831 = vadd.f32 %v2342, %v2830
        %v2832 = vpop.f32.mrb[0].mxu0
        %v2833 = vadd.f32 %v2346, %v2832
        %2834 = vdwg.mxu0
        %2835 = vmatprep.subr.bf16.mxu0 %v2482
        %2836 = vmatpush1.bf16.msra.mxu0 %v2481
        %2837 = vmatprep.subr.bf16.mxu0 %v2498
        %2838 = vmatpush1.bf16.msra.mxu0 %v2497
        %2839 = vmatprep.subr.bf16.mxu0 0
        %2840 = vmatpush1.bf16.msra.mxu0 0
        %2841 = vmatprep.subr.bf16.mxu0 0
        %2842 = vmatpush1.bf16.msra.mxu0 0
        %2843 = vmatprep.subr.bf16.mxu0 0
        %2844 = vmatpush1.bf16.msra.mxu0 0
        %2845 = vmatprep.subr.bf16.mxu0 0
        %2846 = vmatpush1.bf16.msra.mxu0 0
        %2847 = vmatprep.subr.bf16.mxu0 0
        %2848 = vmatpush1.bf16.msra.mxu0 0
        %2849 = vmatprep.subr.bf16.mxu0 0
        %2850 = vmatpush1.bf16.msra.mxu0 0
        %2851 = vmatprep.subr.bf16.mxu0 0
        %2852 = vmatpush1.bf16.msra.mxu0 0
        %2853 = vmatprep.subr.bf16.mxu0 0
        %2854 = vmatpush1.bf16.msra.mxu0 0
        %2855 = vmatprep.subr.bf16.mxu0 0
        %2856 = vmatpush1.bf16.msra.mxu0 0
        %2857 = vmatprep.subr.bf16.mxu0 0
        %2858 = vmatpush1.bf16.msra.mxu0 0
        %2859 = vmatprep.subr.bf16.mxu0 0
        %2860 = vmatpush1.bf16.msra.mxu0 0
        %2861 = vmatprep.subr.bf16.mxu0 0
        %2862 = vmatpush1.bf16.msra.mxu0 0
        %2863 = vmatprep.subr.bf16.mxu0 0
        %2864 = vmatpush1.bf16.msra.mxu0 0
        %2865 = vmatprep.subr.bf16.mxu0 0
        %2866 = vmatpush1.bf16.msra.mxu0 0
        %2867 = vmatprep.mubr.bf16.mxu0 0
        %2868 = vmatmul.mubr.bf16.gmra.mrb[0].mxu0 %v2532
        %v2869 = vpop.f32.mrb[0].mxu0
        %v2870 = vadd.f32 %v2350, %v2869
        %v2871 = vpop.f32.mrb[0].mxu0
        %v2872 = vadd.f32 %v2354, %v2871
        %v2873 = vpop.f32.mrb[0].mxu0
        %v2874 = vadd.f32 %v2350, %v2873
        %v2875 = vpop.f32.mrb[0].mxu0
        %v2876 = vadd.f32 %v2354, %v2875
        %2877 = vdwg.mxu0
        %v2878 = vmax.f32 %v2569, 0.0
        %v2879 = vmax.f32 %v2571, 0.0
        %v2880 = vmax.f32 %v2612, 0.0
        %v2881 = vmax.f32 %v2614, 0.0
        %v2882 = vmax.f32 %v2655, 0.0
        %v2883 = vmax.f32 %v2657, 0.0
        %v2884 = vmax.f32 %v2698, 0.0
        %v2885 = vmax.f32 %v2700, 0.0
        %v2886 = vmax.f32 %v2741, 0.0
        %v2887 = vmax.f32 %v2743, 0.0
        %v2888 = vmax.f32 %v2784, 0.0
        %v2889 = vmax.f32 %v2786, 0.0
        %v2890 = vmax.f32 %v2827, 0.0
        %v2891 = vmax.f32 %v2829, 0.0
        %v2892 = vmax.f32 %v2870, 0.0
        %v2893 = vmax.f32 %v2872, 0.0
        %v2894 = vmax.f32 %v2573, 0.0
        %v2895 = vmax.f32 %v2575, 0.0
        %v2896 = vmax.f32 %v2616, 0.0
        %v2897 = vmax.f32 %v2618, 0.0
        %v2898 = vmax.f32 %v2659, 0.0
        %v2899 = vmax.f32 %v2661, 0.0
        %v2900 = vmax.f32 %v2702, 0.0
        %v2901 = vmax.f32 %v2704, 0.0
        %v2902 = vmax.f32 %v2745, 0.0
        %v2903 = vmax.f32 %v2747, 0.0
        %v2904 = vmax.f32 %v2788, 0.0
        %v2905 = vmax.f32 %v2790, 0.0
        %v2906 = vmax.f32 %v2831, 0.0
        %v2907 = vmax.f32 %v2833, 0.0
        %v2908 = vmax.f32 %v2874, 0.0
        %v2909 = vmax.f32 %v2876, 0.0
        %v2910 = vpack.c.bf16 %v2894, %v2878
        %v2911 = vpack.c.bf16 %v2895, %v2879
        %v2912 = vpack.c.bf16 %v2896, %v2880
        %v2913 = vpack.c.bf16 %v2897, %v2881
        %v2914 = vpack.c.bf16 %v2898, %v2882
        %v2915 = vpack.c.bf16 %v2899, %v2883
        %v2916 = vpack.c.bf16 %v2900, %v2884
        %v2917 = vpack.c.bf16 %v2901, %v2885
        %v2918 = vpack.c.bf16 %v2902, %v2886
        %v2919 = vpack.c.bf16 %v2903, %v2887
        %v2920 = vpack.c.bf16 %v2904, %v2888
        %v2921 = vpack.c.bf16 %v2905, %v2889
        %v2922 = vpack.c.bf16 %v2906, %v2890
        %v2923 = vpack.c.bf16 %v2907, %v2891
        %v2924 = vpack.c.bf16 %v2908, %v2892
        %v2925 = vpack.c.bf16 %v2909, %v2893
        %v2926 = vld [vmem:[%s483] sm:$0xf]
        %v2927 = vld [vmem:[%s483 + $0x4] sm:$0xf]
        %v2928 = vld [vmem:[%s483 + $0x8] sm:$0xf]
        %v2929 = vld [vmem:[%s483 + $0xc] sm:$0xf]
        %v2930 = vld [vmem:[%s483 + $0x10] sm:$0xf]
        %v2931 = vld [vmem:[%s483 + $0x14] sm:$0xf]
        %v2932 = vld [vmem:[%s483 + $0x18] sm:$0xf]
        %v2933 = vld [vmem:[%s483 + $0x1c] sm:$0xf]
        %v2934 = vld [vmem:[%s483 + $0x20] sm:$0xf]
        %v2935 = vld [vmem:[%s483 + $0x24] sm:$0xf]
        %v2936 = vld [vmem:[%s483 + $0x28] sm:$0xf]
        %v2937 = vld [vmem:[%s483 + $0x2c] sm:$0xf]
        %v2938 = vld [vmem:[%s483 + $0x30] sm:$0xf]
        %v2939 = vld [vmem:[%s483 + $0x34] sm:$0xf]
        %v2940 = vld [vmem:[%s483 + $0x38] sm:$0xf]
        %v2941 = vld [vmem:[%s483 + $0x3c] sm:$0xf]
        %v2942 = vld [vmem:[%s483 + $0x40] sm:$0xf]
        %v2943 = vld [vmem:[%s483 + $0x44] sm:$0xf]
        %v2944 = vld [vmem:[%s483 + $0x48] sm:$0xf]
        %v2945 = vld [vmem:[%s483 + $0x4c] sm:$0xf]
        %v2946 = vld [vmem:[%s483 + $0x50] sm:$0xf]
        %v2947 = vld [vmem:[%s483 + $0x54] sm:$0xf]
        %v2948 = vld [vmem:[%s483 + $0x58] sm:$0xf]
        %v2949 = vld [vmem:[%s483 + $0x5c] sm:$0xf]
        %v2950 = vld [vmem:[%s483 + $0x60] sm:$0xf]
        %v2951 = vld [vmem:[%s483 + $0x64] sm:$0xf]
        %v2952 = vld [vmem:[%s483 + $0x68] sm:$0xf]
        %v2953 = vld [vmem:[%s483 + $0x6c] sm:$0xf]
        %v2954 = vld [vmem:[%s483 + $0x70] sm:$0xf]
        %v2955 = vld [vmem:[%s483 + $0x74] sm:$0xf]
        %v2956 = vld [vmem:[%s483 + $0x78] sm:$0xf]
        %v2957 = vld [vmem:[%s483 + $0x7c] sm:$0xf]
        %v2958 = vld [vmem:[%s483 + $0x80] sm:$0xf]
        %v2959 = vld [vmem:[%s483 + $0x84] sm:$0xf]
        %v2960 = vld [vmem:[%s483 + $0x88] sm:$0xf]
        %v2961 = vld [vmem:[%s483 + $0x8c] sm:$0xf]
        %v2962 = vld [vmem:[%s483 + $0x90] sm:$0xf]
        %v2963 = vld [vmem:[%s483 + $0x94] sm:$0xf]
        %v2964 = vld [vmem:[%s483 + $0x98] sm:$0xf]
        %v2965 = vld [vmem:[%s483 + $0x9c] sm:$0xf]
        %v2966 = vld [vmem:[%s483 + $0xa0] sm:$0xf]
        %v2967 = vld [vmem:[%s483 + $0xa4] sm:$0xf]
        %v2968 = vld [vmem:[%s483 + $0xa8] sm:$0xf]
        %v2969 = vld [vmem:[%s483 + $0xac] sm:$0xf]
        %v2970 = vld [vmem:[%s483 + $0xb0] sm:$0xf]
        %v2971 = vld [vmem:[%s483 + $0xb4] sm:$0xf]
        %v2972 = vld [vmem:[%s483 + $0xb8] sm:$0xf]
        %v2973 = vld [vmem:[%s483 + $0xbc] sm:$0xf]
        %v2974 = vld [vmem:[%s483 + $0xc0] sm:$0xf]
        %v2975 = vld [vmem:[%s483 + $0xc4] sm:$0xf]
        %v2976 = vld [vmem:[%s483 + $0xc8] sm:$0xf]
        %v2977 = vld [vmem:[%s483 + $0xcc] sm:$0xf]
        %v2978 = vld [vmem:[%s483 + $0xd0] sm:$0xf]
        %v2979 = vld [vmem:[%s483 + $0xd4] sm:$0xf]
        %v2980 = vld [vmem:[%s483 + $0xd8] sm:$0xf]
        %v2981 = vld [vmem:[%s483 + $0xdc] sm:$0xf]
        %v2982 = vld [vmem:[%s483 + $0xe0] sm:$0xf]
        %v2983 = vld [vmem:[%s483 + $0xe4] sm:$0xf]
        %v2984 = vld [vmem:[%s483 + $0xe8] sm:$0xf]
        %v2985 = vld [vmem:[%s483 + $0xec] sm:$0xf]
        %v2986 = vld [vmem:[%s483 + $0xf0] sm:$0xf]
        %v2987 = vld [vmem:[%s483 + $0xf4] sm:$0xf]
        %v2988 = vld [vmem:[%s483 + $0xf8] sm:$0xf]
        %v2989 = vld [vmem:[%s483 + $0xfc] sm:$0xf]
        %v2990 = vld [vmem:[%s483 + $0x100] sm:$0xf]
        %v2991 = vld [vmem:[%s483 + $0x104] sm:$0xf]
        %v2992 = vld [vmem:[%s483 + $0x108] sm:$0xf]
        %v2993 = vld [vmem:[%s483 + $0x10c] sm:$0xf]
        %v2994 = vld [vmem:[%s483 + $0x110] sm:$0xf]
        %v2995 = vld [vmem:[%s483 + $0x114] sm:$0xf]
        %v2996 = vld [vmem:[%s483 + $0x118] sm:$0xf]
        %v2997 = vld [vmem:[%s483 + $0x11c] sm:$0xf]
        %v2998 = vld [vmem:[%s483 + $0x120] sm:$0xf]
        %v2999 = vld [vmem:[%s483 + $0x124] sm:$0xf]
        %v3000 = vld [vmem:[%s483 + $0x128] sm:$0xf]
        %v3001 = vld [vmem:[%s483 + $0x12c] sm:$0xf]
        %v3002 = vld [vmem:[%s483 + $0x130] sm:$0xf]
        %v3003 = vld [vmem:[%s483 + $0x134] sm:$0xf]
        %v3004 = vld [vmem:[%s483 + $0x138] sm:$0xf]
        %v3005 = vld [vmem:[%s483 + $0x13c] sm:$0xf]
        %v3006 = vld [vmem:[%s483 + $0x140] sm:$0xf]
        %v3007 = vld [vmem:[%s483 + $0x144] sm:$0xf]
        %v3008 = vld [vmem:[%s483 + $0x148] sm:$0xf]
        %v3009 = vld [vmem:[%s483 + $0x14c] sm:$0xf]
        %v3010 = vld [vmem:[%s483 + $0x150] sm:$0xf]
        %v3011 = vld [vmem:[%s483 + $0x154] sm:$0xf]
        %v3012 = vld [vmem:[%s483 + $0x158] sm:$0xf]
        %v3013 = vld [vmem:[%s483 + $0x15c] sm:$0xf]
        %v3014 = vld [vmem:[%s483 + $0x160] sm:$0xf]
        %v3015 = vld [vmem:[%s483 + $0x164] sm:$0xf]
        %v3016 = vld [vmem:[%s483 + $0x168] sm:$0xf]
        %v3017 = vld [vmem:[%s483 + $0x16c] sm:$0xf]
        %v3018 = vld [vmem:[%s483 + $0x170] sm:$0xf]
        %v3019 = vld [vmem:[%s483 + $0x174] sm:$0xf]
        %v3020 = vld [vmem:[%s483 + $0x178] sm:$0xf]
        %v3021 = vld [vmem:[%s483 + $0x17c] sm:$0xf]
        %v3022 = vld [vmem:[%s483 + $0x180] sm:$0xf]
        %v3023 = vld [vmem:[%s483 + $0x184] sm:$0xf]
        %v3024 = vld [vmem:[%s483 + $0x188] sm:$0xf]
        %v3025 = vld [vmem:[%s483 + $0x18c] sm:$0xf]
        %v3026 = vld [vmem:[%s483 + $0x190] sm:$0xf]
        %v3027 = vld [vmem:[%s483 + $0x194] sm:$0xf]
        %v3028 = vld [vmem:[%s483 + $0x198] sm:$0xf]
        %v3029 = vld [vmem:[%s483 + $0x19c] sm:$0xf]
        %v3030 = vld [vmem:[%s483 + $0x1a0] sm:$0xf]
        %v3031 = vld [vmem:[%s483 + $0x1a4] sm:$0xf]
        %v3032 = vld [vmem:[%s483 + $0x1a8] sm:$0xf]
        %v3033 = vld [vmem:[%s483 + $0x1ac] sm:$0xf]
        %v3034 = vld [vmem:[%s483 + $0x1b0] sm:$0xf]
        %v3035 = vld [vmem:[%s483 + $0x1b4] sm:$0xf]
        %v3036 = vld [vmem:[%s483 + $0x1b8] sm:$0xf]
        %v3037 = vld [vmem:[%s483 + $0x1bc] sm:$0xf]
        %v3038 = vld [vmem:[%s483 + $0x1c0] sm:$0xf]
        %v3039 = vld [vmem:[%s483 + $0x1c4] sm:$0xf]
        %v3040 = vld [vmem:[%s483 + $0x1c8] sm:$0xf]
        %v3041 = vld [vmem:[%s483 + $0x1cc] sm:$0xf]
        %v3042 = vld [vmem:[%s483 + $0x1d0] sm:$0xf]
        %v3043 = vld [vmem:[%s483 + $0x1d4] sm:$0xf]
        %v3044 = vld [vmem:[%s483 + $0x1d8] sm:$0xf]
        %v3045 = vld [vmem:[%s483 + $0x1dc] sm:$0xf]
        %v3046 = vld [vmem:[%s483 + $0x1e0] sm:$0xf]
        %v3047 = vld [vmem:[%s483 + $0x1e4] sm:$0xf]
        %v3048 = vld [vmem:[%s483 + $0x1e8] sm:$0xf]
        %v3049 = vld [vmem:[%s483 + $0x1ec] sm:$0xf]
        %v3050 = vld [vmem:[%s483 + $0x1f0] sm:$0xf]
        %v3051 = vld [vmem:[%s483 + $0x1f4] sm:$0xf]
        %v3052 = vld [vmem:[%s483 + $0x1f8] sm:$0xf]
        %v3053 = vld [vmem:[%s483 + $0x1fc] sm:$0xf]
        %v3054 = vld [vmem:[%s483 + $0x200] sm:$0xf]
        %v3055 = vld [vmem:[%s483 + $0x204] sm:$0xf]
        %v3056 = vld [vmem:[%s483 + $0x208] sm:$0xf]
        %v3057 = vld [vmem:[%s483 + $0x20c] sm:$0xf]
        %v3058 = vld [vmem:[%s483 + $0x210] sm:$0xf]
        %v3059 = vld [vmem:[%s483 + $0x214] sm:$0xf]
        %v3060 = vld [vmem:[%s483 + $0x218] sm:$0xf]
        %v3061 = vld [vmem:[%s483 + $0x21c] sm:$0xf]
        %v3062 = vld [vmem:[%s483 + $0x220] sm:$0xf]
        %v3063 = vld [vmem:[%s483 + $0x224] sm:$0xf]
        %v3064 = vld [vmem:[%s483 + $0x228] sm:$0xf]
        %v3065 = vld [vmem:[%s483 + $0x22c] sm:$0xf]
        %v3066 = vld [vmem:[%s483 + $0x230] sm:$0xf]
        %v3067 = vld [vmem:[%s483 + $0x234] sm:$0xf]
        %v3068 = vld [vmem:[%s483 + $0x238] sm:$0xf]
        %v3069 = vld [vmem:[%s483 + $0x23c] sm:$0xf]
        %v3070 = vld [vmem:[%s483 + $0x240] sm:$0xf]
        %v3071 = vld [vmem:[%s483 + $0x244] sm:$0xf]
        %v3072 = vld [vmem:[%s483 + $0x248] sm:$0xf]
        %v3073 = vld [vmem:[%s483 + $0x24c] sm:$0xf]
        %v3074 = vld [vmem:[%s483 + $0x250] sm:$0xf]
        %v3075 = vld [vmem:[%s483 + $0x254] sm:$0xf]
        %v3076 = vld [vmem:[%s483 + $0x258] sm:$0xf]
        %v3077 = vld [vmem:[%s483 + $0x25c] sm:$0xf]
        %v3078 = vld [vmem:[%s483 + $0x260] sm:$0xf]
        %v3079 = vld [vmem:[%s483 + $0x264] sm:$0xf]
        %v3080 = vld [vmem:[%s483 + $0x268] sm:$0xf]
        %v3081 = vld [vmem:[%s483 + $0x26c] sm:$0xf]
        %v3082 = vld [vmem:[%s483 + $0x270] sm:$0xf]
        %v3083 = vld [vmem:[%s483 + $0x274] sm:$0xf]
        %v3084 = vld [vmem:[%s483 + $0x278] sm:$0xf]
        %v3085 = vld [vmem:[%s483 + $0x27c] sm:$0xf]
        %v3086 = vld [vmem:[%s483 + $0x280] sm:$0xf]
        %v3087 = vld [vmem:[%s483 + $0x284] sm:$0xf]
        %v3088 = vld [vmem:[%s483 + $0x288] sm:$0xf]
        %v3089 = vld [vmem:[%s483 + $0x28c] sm:$0xf]
        %v3090 = vld [vmem:[%s483 + $0x290] sm:$0xf]
        %v3091 = vld [vmem:[%s483 + $0x294] sm:$0xf]
        %v3092 = vld [vmem:[%s483 + $0x298] sm:$0xf]
        %v3093 = vld [vmem:[%s483 + $0x29c] sm:$0xf]
        %v3094 = vld [vmem:[%s483 + $0x2a0] sm:$0xf]
        %v3095 = vld [vmem:[%s483 + $0x2a4] sm:$0xf]
        %v3096 = vld [vmem:[%s483 + $0x2a8] sm:$0xf]
        %v3097 = vld [vmem:[%s483 + $0x2ac] sm:$0xf]
        %v3098 = vld [vmem:[%s483 + $0x2b0] sm:$0xf]
        %v3099 = vld [vmem:[%s483 + $0x2b4] sm:$0xf]
        %v3100 = vld [vmem:[%s483 + $0x2b8] sm:$0xf]
        %v3101 = vld [vmem:[%s483 + $0x2bc] sm:$0xf]
        %v3102 = vld [vmem:[%s483 + $0x2c0] sm:$0xf]
        %v3103 = vld [vmem:[%s483 + $0x2c4] sm:$0xf]
        %v3104 = vld [vmem:[%s483 + $0x2c8] sm:$0xf]
        %v3105 = vld [vmem:[%s483 + $0x2cc] sm:$0xf]
        %v3106 = vld [vmem:[%s483 + $0x2d0] sm:$0xf]
        %v3107 = vld [vmem:[%s483 + $0x2d4] sm:$0xf]
        %v3108 = vld [vmem:[%s483 + $0x2d8] sm:$0xf]
        %v3109 = vld [vmem:[%s483 + $0x2dc] sm:$0xf]
        %v3110 = vld [vmem:[%s483 + $0x2e0] sm:$0xf]
        %v3111 = vld [vmem:[%s483 + $0x2e4] sm:$0xf]
        %v3112 = vld [vmem:[%s483 + $0x2e8] sm:$0xf]
        %v3113 = vld [vmem:[%s483 + $0x2ec] sm:$0xf]
        %v3114 = vld [vmem:[%s483 + $0x2f0] sm:$0xf]
        %v3115 = vld [vmem:[%s483 + $0x2f4] sm:$0xf]
        %v3116 = vld [vmem:[%s483 + $0x2f8] sm:$0xf]
        %v3117 = vld [vmem:[%s483 + $0x2fc] sm:$0xf]
        %v3118 = vld [vmem:[%s483 + $0x300] sm:$0xf]
        %v3119 = vld [vmem:[%s483 + $0x304] sm:$0xf]
        %v3120 = vld [vmem:[%s483 + $0x308] sm:$0xf]
        %v3121 = vld [vmem:[%s483 + $0x30c] sm:$0xf]
        %v3122 = vld [vmem:[%s483 + $0x310] sm:$0xf]
        %v3123 = vld [vmem:[%s483 + $0x314] sm:$0xf]
        %v3124 = vld [vmem:[%s483 + $0x318] sm:$0xf]
        %v3125 = vld [vmem:[%s483 + $0x31c] sm:$0xf]
        %v3126 = vld [vmem:[%s483 + $0x320] sm:$0xf]
        %v3127 = vld [vmem:[%s483 + $0x324] sm:$0xf]
        %v3128 = vld [vmem:[%s483 + $0x328] sm:$0xf]
        %v3129 = vld [vmem:[%s483 + $0x32c] sm:$0xf]
        %v3130 = vld [vmem:[%s483 + $0x330] sm:$0xf]
        %v3131 = vld [vmem:[%s483 + $0x334] sm:$0xf]
        %v3132 = vld [vmem:[%s483 + $0x338] sm:$0xf]
        %v3133 = vld [vmem:[%s483 + $0x33c] sm:$0xf]
        %v3134 = vld [vmem:[%s483 + $0x340] sm:$0xf]
        %v3135 = vld [vmem:[%s483 + $0x344] sm:$0xf]
        %v3136 = vld [vmem:[%s483 + $0x348] sm:$0xf]
        %v3137 = vld [vmem:[%s483 + $0x34c] sm:$0xf]
        %v3138 = vld [vmem:[%s483 + $0x350] sm:$0xf]
        %v3139 = vld [vmem:[%s483 + $0x354] sm:$0xf]
        %v3140 = vld [vmem:[%s483 + $0x358] sm:$0xf]
        %v3141 = vld [vmem:[%s483 + $0x35c] sm:$0xf]
        %v3142 = vld [vmem:[%s483 + $0x360] sm:$0xf]
        %v3143 = vld [vmem:[%s483 + $0x364] sm:$0xf]
        %v3144 = vld [vmem:[%s483 + $0x368] sm:$0xf]
        %v3145 = vld [vmem:[%s483 + $0x36c] sm:$0xf]
        %v3146 = vld [vmem:[%s483 + $0x370] sm:$0xf]
        %v3147 = vld [vmem:[%s483 + $0x374] sm:$0xf]
        %v3148 = vld [vmem:[%s483 + $0x378] sm:$0xf]
        %v3149 = vld [vmem:[%s483 + $0x37c] sm:$0xf]
        %v3150 = vld [vmem:[%s483 + $0x380] sm:$0xf]
        %v3151 = vld [vmem:[%s483 + $0x384] sm:$0xf]
        %v3152 = vld [vmem:[%s483 + $0x388] sm:$0xf]
        %v3153 = vld [vmem:[%s483 + $0x38c] sm:$0xf]
        %v3154 = vld [vmem:[%s483 + $0x390] sm:$0xf]
        %v3155 = vld [vmem:[%s483 + $0x394] sm:$0xf]
        %v3156 = vld [vmem:[%s483 + $0x398] sm:$0xf]
        %v3157 = vld [vmem:[%s483 + $0x39c] sm:$0xf]
        %v3158 = vld [vmem:[%s483 + $0x3a0] sm:$0xf]
        %v3159 = vld [vmem:[%s483 + $0x3a4] sm:$0xf]
        %v3160 = vld [vmem:[%s483 + $0x3a8] sm:$0xf]
        %v3161 = vld [vmem:[%s483 + $0x3ac] sm:$0xf]
        %v3162 = vld [vmem:[%s483 + $0x3b0] sm:$0xf]
        %v3163 = vld [vmem:[%s483 + $0x3b4] sm:$0xf]
        %v3164 = vld [vmem:[%s483 + $0x3b8] sm:$0xf]
        %v3165 = vld [vmem:[%s483 + $0x3bc] sm:$0xf]
        %v3166 = vld [vmem:[%s483 + $0x3c0] sm:$0xf]
        %v3167 = vld [vmem:[%s483 + $0x3c4] sm:$0xf]
        %v3168 = vld [vmem:[%s483 + $0x3c8] sm:$0xf]
        %v3169 = vld [vmem:[%s483 + $0x3cc] sm:$0xf]
        %v3170 = vld [vmem:[%s483 + $0x3d0] sm:$0xf]
        %v3171 = vld [vmem:[%s483 + $0x3d4] sm:$0xf]
        %v3172 = vld [vmem:[%s483 + $0x3d8] sm:$0xf]
        %v3173 = vld [vmem:[%s483 + $0x3dc] sm:$0xf]
        %v3174 = vld [vmem:[%s483 + $0x3e0] sm:$0xf]
        %v3175 = vld [vmem:[%s483 + $0x3e4] sm:$0xf]
        %v3176 = vld [vmem:[%s483 + $0x3e8] sm:$0xf]
        %v3177 = vld [vmem:[%s483 + $0x3ec] sm:$0xf]
        %v3178 = vld [vmem:[%s483 + $0x3f0] sm:$0xf]
        %v3179 = vld [vmem:[%s483 + $0x3f4] sm:$0xf]
        %v3180 = vld [vmem:[%s483 + $0x3f8] sm:$0xf]
        %v3181 = vld [vmem:[%s483 + $0x3fc] sm:$0xf]
        %v3182 = vlaneseq
        %v3183 = vshrl.u32 %v3182, 7
        %v3184 = vsub.s32 4, %v3183
        %v3185 = vrot.slane %v606, %v3184
        %v3442 = vunpack.c.l.b16 %v2926
        %v3443 = vunpack.c.l.b16 %v2927
        %v3444 = vunpack.c.l.b16 %v2928
        %v3445 = vunpack.c.l.b16 %v2929
        %v3446 = vunpack.c.l.b16 %v2930
        %v3447 = vunpack.c.l.b16 %v2931
        %v3448 = vunpack.c.l.b16 %v2932
        %v3449 = vunpack.c.l.b16 %v2933
        %v3450 = vunpack.c.l.b16 %v2934
        %v3451 = vunpack.c.l.b16 %v2935
        %v3452 = vunpack.c.l.b16 %v2936
        %v3453 = vunpack.c.l.b16 %v2937
        %v3454 = vunpack.c.l.b16 %v2938
        %v3455 = vunpack.c.l.b16 %v2939
        %v3456 = vunpack.c.l.b16 %v2940
        %v3457 = vunpack.c.l.b16 %v2941
        %v3458 = vunpack.c.l.b16 %v2942
        %v3459 = vunpack.c.l.b16 %v2943
        %v3460 = vunpack.c.l.b16 %v2944
        %v3461 = vunpack.c.l.b16 %v2945
        %v3462 = vunpack.c.l.b16 %v2946
        %v3463 = vunpack.c.l.b16 %v2947
        %v3464 = vunpack.c.l.b16 %v2948
        %v3465 = vunpack.c.l.b16 %v2949
        %v3466 = vunpack.c.l.b16 %v2950
        %v3467 = vunpack.c.l.b16 %v2951
        %v3468 = vunpack.c.l.b16 %v2952
        %v3469 = vunpack.c.l.b16 %v2953
        %v3470 = vunpack.c.l.b16 %v2954
        %v3471 = vunpack.c.l.b16 %v2955
        %v3472 = vunpack.c.l.b16 %v2956
        %v3473 = vunpack.c.l.b16 %v2957
        %v3474 = vunpack.c.l.b16 %v2958
        %v3475 = vunpack.c.l.b16 %v2959
        %v3476 = vunpack.c.l.b16 %v2960
        %v3477 = vunpack.c.l.b16 %v2961
        %v3478 = vunpack.c.l.b16 %v2962
        %v3479 = vunpack.c.l.b16 %v2963
        %v3480 = vunpack.c.l.b16 %v2964
        %v3481 = vunpack.c.l.b16 %v2965
        %v3482 = vunpack.c.l.b16 %v2966
        %v3483 = vunpack.c.l.b16 %v2967
        %v3484 = vunpack.c.l.b16 %v2968
        %v3485 = vunpack.c.l.b16 %v2969
        %v3486 = vunpack.c.l.b16 %v2970
        %v3487 = vunpack.c.l.b16 %v2971
        %v3488 = vunpack.c.l.b16 %v2972
        %v3489 = vunpack.c.l.b16 %v2973
        %v3490 = vunpack.c.l.b16 %v2974
        %v3491 = vunpack.c.l.b16 %v2975
        %v3492 = vunpack.c.l.b16 %v2976
        %v3493 = vunpack.c.l.b16 %v2977
        %v3494 = vunpack.c.l.b16 %v2978
        %v3495 = vunpack.c.l.b16 %v2979
        %v3496 = vunpack.c.l.b16 %v2980
        %v3497 = vunpack.c.l.b16 %v2981
        %v3498 = vunpack.c.l.b16 %v2982
        %v3499 = vunpack.c.l.b16 %v2983
        %v3500 = vunpack.c.l.b16 %v2984
        %v3501 = vunpack.c.l.b16 %v2985
        %v3502 = vunpack.c.l.b16 %v2986
        %v3503 = vunpack.c.l.b16 %v2987
        %v3504 = vunpack.c.l.b16 %v2988
        %v3505 = vunpack.c.l.b16 %v2989
        %v3506 = vunpack.c.l.b16 %v2990
        %v3507 = vunpack.c.l.b16 %v2991
        %v3508 = vunpack.c.l.b16 %v2992
        %v3509 = vunpack.c.l.b16 %v2993
        %v3510 = vunpack.c.l.b16 %v2994
        %v3511 = vunpack.c.l.b16 %v2995
        %v3512 = vunpack.c.l.b16 %v2996
        %v3513 = vunpack.c.l.b16 %v2997
        %v3514 = vunpack.c.l.b16 %v2998
        %v3515 = vunpack.c.l.b16 %v2999
        %v3516 = vunpack.c.l.b16 %v3000
        %v3517 = vunpack.c.l.b16 %v3001
        %v3518 = vunpack.c.l.b16 %v3002
        %v3519 = vunpack.c.l.b16 %v3003
        %v3520 = vunpack.c.l.b16 %v3004
        %v3521 = vunpack.c.l.b16 %v3005
        %v3522 = vunpack.c.l.b16 %v3006
        %v3523 = vunpack.c.l.b16 %v3007
        %v3524 = vunpack.c.l.b16 %v3008
        %v3525 = vunpack.c.l.b16 %v3009
        %v3526 = vunpack.c.l.b16 %v3010
        %v3527 = vunpack.c.l.b16 %v3011
        %v3528 = vunpack.c.l.b16 %v3012
        %v3529 = vunpack.c.l.b16 %v3013
        %v3530 = vunpack.c.l.b16 %v3014
        %v3531 = vunpack.c.l.b16 %v3015
        %v3532 = vunpack.c.l.b16 %v3016
        %v3533 = vunpack.c.l.b16 %v3017
        %v3534 = vunpack.c.l.b16 %v3018
        %v3535 = vunpack.c.l.b16 %v3019
        %v3536 = vunpack.c.l.b16 %v3020
        %v3537 = vunpack.c.l.b16 %v3021
        %v3538 = vunpack.c.l.b16 %v3022
        %v3539 = vunpack.c.l.b16 %v3023
        %v3540 = vunpack.c.l.b16 %v3024
        %v3541 = vunpack.c.l.b16 %v3025
        %v3542 = vunpack.c.l.b16 %v3026
        %v3543 = vunpack.c.l.b16 %v3027
        %v3544 = vunpack.c.l.b16 %v3028
        %v3545 = vunpack.c.l.b16 %v3029
        %v3546 = vunpack.c.l.b16 %v3030
        %v3547 = vunpack.c.l.b16 %v3031
        %v3548 = vunpack.c.l.b16 %v3032
        %v3549 = vunpack.c.l.b16 %v3033
        %v3550 = vunpack.c.l.b16 %v3034
        %v3551 = vunpack.c.l.b16 %v3035
        %v3552 = vunpack.c.l.b16 %v3036
        %v3553 = vunpack.c.l.b16 %v3037
        %v3554 = vunpack.c.l.b16 %v3038
        %v3555 = vunpack.c.l.b16 %v3039
        %v3556 = vunpack.c.l.b16 %v3040
        %v3557 = vunpack.c.l.b16 %v3041
        %v3558 = vunpack.c.l.b16 %v3042
        %v3559 = vunpack.c.l.b16 %v3043
        %v3560 = vunpack.c.l.b16 %v3044
        %v3561 = vunpack.c.l.b16 %v3045
        %v3562 = vunpack.c.l.b16 %v3046
        %v3563 = vunpack.c.l.b16 %v3047
        %v3564 = vunpack.c.l.b16 %v3048
        %v3565 = vunpack.c.l.b16 %v3049
        %v3566 = vunpack.c.l.b16 %v3050
        %v3567 = vunpack.c.l.b16 %v3051
        %v3568 = vunpack.c.l.b16 %v3052
        %v3569 = vunpack.c.l.b16 %v3053
        %v3570 = vunpack.c.l.b16 %v3054
        %v3571 = vunpack.c.l.b16 %v3055
        %v3572 = vunpack.c.l.b16 %v3056
        %v3573 = vunpack.c.l.b16 %v3057
        %v3574 = vunpack.c.l.b16 %v3058
        %v3575 = vunpack.c.l.b16 %v3059
        %v3576 = vunpack.c.l.b16 %v3060
        %v3577 = vunpack.c.l.b16 %v3061
        %v3578 = vunpack.c.l.b16 %v3062
        %v3579 = vunpack.c.l.b16 %v3063
        %v3580 = vunpack.c.l.b16 %v3064
        %v3581 = vunpack.c.l.b16 %v3065
        %v3582 = vunpack.c.l.b16 %v3066
        %v3583 = vunpack.c.l.b16 %v3067
        %v3584 = vunpack.c.l.b16 %v3068
        %v3585 = vunpack.c.l.b16 %v3069
        %v3586 = vunpack.c.l.b16 %v3070
        %v3587 = vunpack.c.l.b16 %v3071
        %v3588 = vunpack.c.l.b16 %v3072
        %v3589 = vunpack.c.l.b16 %v3073
        %v3590 = vunpack.c.l.b16 %v3074
        %v3591 = vunpack.c.l.b16 %v3075
        %v3592 = vunpack.c.l.b16 %v3076
        %v3593 = vunpack.c.l.b16 %v3077
        %v3594 = vunpack.c.l.b16 %v3078
        %v3595 = vunpack.c.l.b16 %v3079
        %v3596 = vunpack.c.l.b16 %v3080
        %v3597 = vunpack.c.l.b16 %v3081
        %v3598 = vunpack.c.l.b16 %v3082
        %v3599 = vunpack.c.l.b16 %v3083
        %v3600 = vunpack.c.l.b16 %v3084
        %v3601 = vunpack.c.l.b16 %v3085
        %v3602 = vunpack.c.l.b16 %v3086
        %v3603 = vunpack.c.l.b16 %v3087
        %v3604 = vunpack.c.l.b16 %v3088
        %v3605 = vunpack.c.l.b16 %v3089
        %v3606 = vunpack.c.l.b16 %v3090
        %v3607 = vunpack.c.l.b16 %v3091
        %v3608 = vunpack.c.l.b16 %v3092
        %v3609 = vunpack.c.l.b16 %v3093
        %v3610 = vunpack.c.l.b16 %v3094
        %v3611 = vunpack.c.l.b16 %v3095
        %v3612 = vunpack.c.l.b16 %v3096
        %v3613 = vunpack.c.l.b16 %v3097
        %v3614 = vunpack.c.l.b16 %v3098
        %v3615 = vunpack.c.l.b16 %v3099
        %v3616 = vunpack.c.l.b16 %v3100
        %v3617 = vunpack.c.l.b16 %v3101
        %v3618 = vunpack.c.l.b16 %v3102
        %v3619 = vunpack.c.l.b16 %v3103
        %v3620 = vunpack.c.l.b16 %v3104
        %v3621 = vunpack.c.l.b16 %v3105
        %v3622 = vunpack.c.l.b16 %v3106
        %v3623 = vunpack.c.l.b16 %v3107
        %v3624 = vunpack.c.l.b16 %v3108
        %v3625 = vunpack.c.l.b16 %v3109
        %v3626 = vunpack.c.l.b16 %v3110
        %v3627 = vunpack.c.l.b16 %v3111
        %v3628 = vunpack.c.l.b16 %v3112
        %v3629 = vunpack.c.l.b16 %v3113
        %v3630 = vunpack.c.l.b16 %v3114
        %v3631 = vunpack.c.l.b16 %v3115
        %v3632 = vunpack.c.l.b16 %v3116
        %v3633 = vunpack.c.l.b16 %v3117
        %v3634 = vunpack.c.l.b16 %v3118
        %v3635 = vunpack.c.l.b16 %v3119
        %v3636 = vunpack.c.l.b16 %v3120
        %v3637 = vunpack.c.l.b16 %v3121
        %v3638 = vunpack.c.l.b16 %v3122
        %v3639 = vunpack.c.l.b16 %v3123
        %v3640 = vunpack.c.l.b16 %v3124
        %v3641 = vunpack.c.l.b16 %v3125
        %v3642 = vunpack.c.l.b16 %v3126
        %v3643 = vunpack.c.l.b16 %v3127
        %v3644 = vunpack.c.l.b16 %v3128
        %v3645 = vunpack.c.l.b16 %v3129
        %v3646 = vunpack.c.l.b16 %v3130
        %v3647 = vunpack.c.l.b16 %v3131
        %v3648 = vunpack.c.l.b16 %v3132
        %v3649 = vunpack.c.l.b16 %v3133
        %v3650 = vunpack.c.l.b16 %v3134
        %v3651 = vunpack.c.l.b16 %v3135
        %v3652 = vunpack.c.l.b16 %v3136
        %v3653 = vunpack.c.l.b16 %v3137
        %v3654 = vunpack.c.l.b16 %v3138
        %v3655 = vunpack.c.l.b16 %v3139
        %v3656 = vunpack.c.l.b16 %v3140
        %v3657 = vunpack.c.l.b16 %v3141
        %v3658 = vunpack.c.l.b16 %v3142
        %v3659 = vunpack.c.l.b16 %v3143
        %v3660 = vunpack.c.l.b16 %v3144
        %v3661 = vunpack.c.l.b16 %v3145
        %v3662 = vunpack.c.l.b16 %v3146
        %v3663 = vunpack.c.l.b16 %v3147
        %v3664 = vunpack.c.l.b16 %v3148
        %v3665 = vunpack.c.l.b16 %v3149
        %v3666 = vunpack.c.l.b16 %v3150
        %v3667 = vunpack.c.l.b16 %v3151
        %v3668 = vunpack.c.l.b16 %v3152
        %v3669 = vunpack.c.l.b16 %v3153
        %v3670 = vunpack.c.l.b16 %v3154
        %v3671 = vunpack.c.l.b16 %v3155
        %v3672 = vunpack.c.l.b16 %v3156
        %v3673 = vunpack.c.l.b16 %v3157
        %v3674 = vunpack.c.l.b16 %v3158
        %v3675 = vunpack.c.l.b16 %v3159
        %v3676 = vunpack.c.l.b16 %v3160
        %v3677 = vunpack.c.l.b16 %v3161
        %v3678 = vunpack.c.l.b16 %v3162
        %v3679 = vunpack.c.l.b16 %v3163
        %v3680 = vunpack.c.l.b16 %v3164
        %v3681 = vunpack.c.l.b16 %v3165
        %v3682 = vunpack.c.l.b16 %v3166
        %v3683 = vunpack.c.l.b16 %v3167
        %v3684 = vunpack.c.l.b16 %v3168
        %v3685 = vunpack.c.l.b16 %v3169
        %v3686 = vunpack.c.l.b16 %v3170
        %v3687 = vunpack.c.l.b16 %v3171
        %v3688 = vunpack.c.l.b16 %v3172
        %v3689 = vunpack.c.l.b16 %v3173
        %v3690 = vunpack.c.l.b16 %v3174
        %v3691 = vunpack.c.l.b16 %v3175
        %v3692 = vunpack.c.l.b16 %v3176
        %v3693 = vunpack.c.l.b16 %v3177
        %v3694 = vunpack.c.l.b16 %v3178
        %v3695 = vunpack.c.l.b16 %v3179
        %v3696 = vunpack.c.l.b16 %v3180
        %v3697 = vunpack.c.l.b16 %v3181
        %v3698 = vpack.c.b16 %v3443, %v3442
        %v3699 = vpack.c.b16 %v3445, %v3444
        %v3700 = vpack.c.b16 %v3447, %v3446
        %v3701 = vpack.c.b16 %v3449, %v3448
        %v3702 = vpack.c.b16 %v3451, %v3450
        %v3703 = vpack.c.b16 %v3453, %v3452
        %v3704 = vpack.c.b16 %v3455, %v3454
        %v3705 = vpack.c.b16 %v3457, %v3456
        %v3706 = vpack.c.b16 %v3459, %v3458
        %v3707 = vpack.c.b16 %v3461, %v3460
        %v3708 = vpack.c.b16 %v3463, %v3462
        %v3709 = vpack.c.b16 %v3465, %v3464
        %v3710 = vpack.c.b16 %v3467, %v3466
        %v3711 = vpack.c.b16 %v3469, %v3468
        %v3712 = vpack.c.b16 %v3471, %v3470
        %v3713 = vpack.c.b16 %v3473, %v3472
        %v3714 = vpack.c.b16 %v3475, %v3474
        %v3715 = vpack.c.b16 %v3477, %v3476
        %v3716 = vpack.c.b16 %v3479, %v3478
        %v3717 = vpack.c.b16 %v3481, %v3480
        %v3718 = vpack.c.b16 %v3483, %v3482
        %v3719 = vpack.c.b16 %v3485, %v3484
        %v3720 = vpack.c.b16 %v3487, %v3486
        %v3721 = vpack.c.b16 %v3489, %v3488
        %v3722 = vpack.c.b16 %v3491, %v3490
        %v3723 = vpack.c.b16 %v3493, %v3492
        %v3724 = vpack.c.b16 %v3495, %v3494
        %v3725 = vpack.c.b16 %v3497, %v3496
        %v3726 = vpack.c.b16 %v3499, %v3498
        %v3727 = vpack.c.b16 %v3501, %v3500
        %v3728 = vpack.c.b16 %v3503, %v3502
        %v3729 = vpack.c.b16 %v3505, %v3504
        %v3730 = vpack.c.b16 %v3507, %v3506
        %v3731 = vpack.c.b16 %v3509, %v3508
        %v3732 = vpack.c.b16 %v3511, %v3510
        %v3733 = vpack.c.b16 %v3513, %v3512
        %v3734 = vpack.c.b16 %v3515, %v3514
        %v3735 = vpack.c.b16 %v3517, %v3516
        %v3736 = vpack.c.b16 %v3519, %v3518
        %v3737 = vpack.c.b16 %v3521, %v3520
        %v3738 = vpack.c.b16 %v3523, %v3522
        %v3739 = vpack.c.b16 %v3525, %v3524
        %v3740 = vpack.c.b16 %v3527, %v3526
        %v3741 = vpack.c.b16 %v3529, %v3528
        %v3742 = vpack.c.b16 %v3531, %v3530
        %v3743 = vpack.c.b16 %v3533, %v3532
        %v3744 = vpack.c.b16 %v3535, %v3534
        %v3745 = vpack.c.b16 %v3537, %v3536
        %v3746 = vpack.c.b16 %v3539, %v3538
        %v3747 = vpack.c.b16 %v3541, %v3540
        %v3748 = vpack.c.b16 %v3543, %v3542
        %v3749 = vpack.c.b16 %v3545, %v3544
        %v3750 = vpack.c.b16 %v3547, %v3546
        %v3751 = vpack.c.b16 %v3549, %v3548
        %v3752 = vpack.c.b16 %v3551, %v3550
        %v3753 = vpack.c.b16 %v3553, %v3552
        %v3754 = vpack.c.b16 %v3555, %v3554
        %v3755 = vpack.c.b16 %v3557, %v3556
        %v3756 = vpack.c.b16 %v3559, %v3558
        %v3757 = vpack.c.b16 %v3561, %v3560
        %v3758 = vpack.c.b16 %v3563, %v3562
        %v3759 = vpack.c.b16 %v3565, %v3564
        %v3760 = vpack.c.b16 %v3567, %v3566
        %v3761 = vpack.c.b16 %v3569, %v3568
        %v3762 = vpack.c.b16 %v3571, %v3570
        %v3763 = vpack.c.b16 %v3573, %v3572
        %v3764 = vpack.c.b16 %v3575, %v3574
        %v3765 = vpack.c.b16 %v3577, %v3576
        %v3766 = vpack.c.b16 %v3579, %v3578
        %v3767 = vpack.c.b16 %v3581, %v3580
        %v3768 = vpack.c.b16 %v3583, %v3582
        %v3769 = vpack.c.b16 %v3585, %v3584
        %v3770 = vpack.c.b16 %v3587, %v3586
        %v3771 = vpack.c.b16 %v3589, %v3588
        %v3772 = vpack.c.b16 %v3591, %v3590
        %v3773 = vpack.c.b16 %v3593, %v3592
        %v3774 = vpack.c.b16 %v3595, %v3594
        %v3775 = vpack.c.b16 %v3597, %v3596
        %v3776 = vpack.c.b16 %v3599, %v3598
        %v3777 = vpack.c.b16 %v3601, %v3600
        %v3778 = vpack.c.b16 %v3603, %v3602
        %v3779 = vpack.c.b16 %v3605, %v3604
        %v3780 = vpack.c.b16 %v3607, %v3606
        %v3781 = vpack.c.b16 %v3609, %v3608
        %v3782 = vpack.c.b16 %v3611, %v3610
        %v3783 = vpack.c.b16 %v3613, %v3612
        %v3784 = vpack.c.b16 %v3615, %v3614
        %v3785 = vpack.c.b16 %v3617, %v3616
        %v3786 = vpack.c.b16 %v3619, %v3618
        %v3787 = vpack.c.b16 %v3621, %v3620
        %v3788 = vpack.c.b16 %v3623, %v3622
        %v3789 = vpack.c.b16 %v3625, %v3624
        %v3790 = vpack.c.b16 %v3627, %v3626
        %v3791 = vpack.c.b16 %v3629, %v3628
        %v3792 = vpack.c.b16 %v3631, %v3630
        %v3793 = vpack.c.b16 %v3633, %v3632
        %v3794 = vpack.c.b16 %v3635, %v3634
        %v3795 = vpack.c.b16 %v3637, %v3636
        %v3796 = vpack.c.b16 %v3639, %v3638
        %v3797 = vpack.c.b16 %v3641, %v3640
        %v3798 = vpack.c.b16 %v3643, %v3642
        %v3799 = vpack.c.b16 %v3645, %v3644
        %v3800 = vpack.c.b16 %v3647, %v3646
        %v3801 = vpack.c.b16 %v3649, %v3648
        %v3802 = vpack.c.b16 %v3651, %v3650
        %v3803 = vpack.c.b16 %v3653, %v3652
        %v3804 = vpack.c.b16 %v3655, %v3654
        %v3805 = vpack.c.b16 %v3657, %v3656
        %v3806 = vpack.c.b16 %v3659, %v3658
        %v3807 = vpack.c.b16 %v3661, %v3660
        %v3808 = vpack.c.b16 %v3663, %v3662
        %v3809 = vpack.c.b16 %v3665, %v3664
        %v3810 = vpack.c.b16 %v3667, %v3666
        %v3811 = vpack.c.b16 %v3669, %v3668
        %v3812 = vpack.c.b16 %v3671, %v3670
        %v3813 = vpack.c.b16 %v3673, %v3672
        %v3814 = vpack.c.b16 %v3675, %v3674
        %v3815 = vpack.c.b16 %v3677, %v3676
        %v3816 = vpack.c.b16 %v3679, %v3678
        %v3817 = vpack.c.b16 %v3681, %v3680
        %v3818 = vpack.c.b16 %v3683, %v3682
        %v3819 = vpack.c.b16 %v3685, %v3684
        %v3820 = vpack.c.b16 %v3687, %v3686
        %v3821 = vpack.c.b16 %v3689, %v3688
        %v3822 = vpack.c.b16 %v3691, %v3690
        %v3823 = vpack.c.b16 %v3693, %v3692
        %v3824 = vpack.c.b16 %v3695, %v3694
        %v3825 = vpack.c.b16 %v3697, %v3696
        %3954 = vmatprep.subr.bf16.mxu0 0
        %3955 = vmatpush1.bf16.msra.mxu0 %v3698
        %3956 = vmatprep.subr.bf16.mxu0 0
        %3957 = vmatpush1.bf16.msra.mxu0 %v3699
        %3958 = vmatprep.subr.bf16.mxu0 0
        %3959 = vmatpush1.bf16.msra.mxu0 %v3700
        %3960 = vmatprep.subr.bf16.mxu0 0
        %3961 = vmatpush1.bf16.msra.mxu0 %v3701
        %3962 = vmatprep.subr.bf16.mxu0 0
        %3963 = vmatpush1.bf16.msra.mxu0 %v3702
        %3964 = vmatprep.subr.bf16.mxu0 0
        %3965 = vmatpush1.bf16.msra.mxu0 %v3703
        %3966 = vmatprep.subr.bf16.mxu0 0
        %3967 = vmatpush1.bf16.msra.mxu0 %v3704
        %3968 = vmatprep.subr.bf16.mxu0 0
        %3969 = vmatpush1.bf16.msra.mxu0 %v3705
        %3970 = vmatprep.subr.bf16.mxu0 0
        %3971 = vmatpush1.bf16.msra.mxu0 %v3706
        %3972 = vmatprep.subr.bf16.mxu0 0
        %3973 = vmatpush1.bf16.msra.mxu0 %v3707
        %3974 = vmatprep.subr.bf16.mxu0 0
        %3975 = vmatpush1.bf16.msra.mxu0 %v3708
        %3976 = vmatprep.subr.bf16.mxu0 0
        %3977 = vmatpush1.bf16.msra.mxu0 %v3709
        %3978 = vmatprep.subr.bf16.mxu0 0
        %3979 = vmatpush1.bf16.msra.mxu0 %v3710
        %3980 = vmatprep.subr.bf16.mxu0 0
        %3981 = vmatpush1.bf16.msra.mxu0 %v3711
        %3982 = vmatprep.subr.bf16.mxu0 0
        %3983 = vmatpush1.bf16.msra.mxu0 %v3712
        %3984 = vmatprep.subr.bf16.mxu0 0
        %3985 = vmatpush1.bf16.msra.mxu0 %v3713
        %3986 = vmatprep.mubr.bf16.mxu0 %v2911
        %3987 = vmatmul.mubr.bf16.gmra.mrb[0].mxu0 %v2910
        %v3988 = vpop.f32.mrb[0].mxu0
        %v3989 = vadd.f32 %v3185, %v3988
        %v3990 = vpop.f32.mrb[0].mxu0
        %v3991 = vpop.f32.mrb[0].mxu0
        %v3992 = vadd.f32 %v3185, %v3991
        %v3993 = vpop.f32.mrb[0].mxu0
        %3994 = vdwg.mxu0
        %3995 = vmatprep.subr.bf16.mxu0 0
        %3996 = vmatpush1.bf16.msra.mxu0 %v3714
        %3997 = vmatprep.subr.bf16.mxu0 0
        %3998 = vmatpush1.bf16.msra.mxu0 %v3715
        %3999 = vmatprep.subr.bf16.mxu0 0
        %4000 = vmatpush1.bf16.msra.mxu0 %v3716
        %4001 = vmatprep.subr.bf16.mxu0 0
        %4002 = vmatpush1.bf16.msra.mxu0 %v3717
        %4003 = vmatprep.subr.bf16.mxu0 0
        %4004 = vmatpush1.bf16.msra.mxu0 %v3718
        %4005 = vmatprep.subr.bf16.mxu0 0
        %4006 = vmatpush1.bf16.msra.mxu0 %v3719
        %4007 = vmatprep.subr.bf16.mxu0 0
        %4008 = vmatpush1.bf16.msra.mxu0 %v3720
        %4009 = vmatprep.subr.bf16.mxu0 0
        %4010 = vmatpush1.bf16.msra.mxu0 %v3721
        %4011 = vmatprep.subr.bf16.mxu0 0
        %4012 = vmatpush1.bf16.msra.mxu0 %v3722
        %4013 = vmatprep.subr.bf16.mxu0 0
        %4014 = vmatpush1.bf16.msra.mxu0 %v3723
        %4015 = vmatprep.subr.bf16.mxu0 0
        %4016 = vmatpush1.bf16.msra.mxu0 %v3724
        %4017 = vmatprep.subr.bf16.mxu0 0
        %4018 = vmatpush1.bf16.msra.mxu0 %v3725
        %4019 = vmatprep.subr.bf16.mxu0 0
        %4020 = vmatpush1.bf16.msra.mxu0 %v3726
        %4021 = vmatprep.subr.bf16.mxu0 0
        %4022 = vmatpush1.bf16.msra.mxu0 %v3727
        %4023 = vmatprep.subr.bf16.mxu0 0
        %4024 = vmatpush1.bf16.msra.mxu0 %v3728
        %4025 = vmatprep.subr.bf16.mxu0 0
        %4026 = vmatpush1.bf16.msra.mxu0 %v3729
        %4027 = vmatprep.mubr.bf16.mxu0 %v2913
        %4028 = vmatmul.mubr.bf16.gmra.mrb[0].mxu0 %v2912
        %v4029 = vpop.f32.mrb[0].mxu0
        %v4030 = vadd.f32 %v3989, %v4029
        %v4031 = vpop.f32.mrb[0].mxu0
        %v4032 = vpop.f32.mrb[0].mxu0
        %v4033 = vadd.f32 %v3992, %v4032
        %v4034 = vpop.f32.mrb[0].mxu0
        %4035 = vdwg.mxu0
        %4036 = vmatprep.subr.bf16.mxu0 0
        %4037 = vmatpush1.bf16.msra.mxu0 %v3730
        %4038 = vmatprep.subr.bf16.mxu0 0
        %4039 = vmatpush1.bf16.msra.mxu0 %v3731
        %4040 = vmatprep.subr.bf16.mxu0 0
        %4041 = vmatpush1.bf16.msra.mxu0 %v3732
        %4042 = vmatprep.subr.bf16.mxu0 0
        %4043 = vmatpush1.bf16.msra.mxu0 %v3733
        %4044 = vmatprep.subr.bf16.mxu0 0
        %4045 = vmatpush1.bf16.msra.mxu0 %v3734
        %4046 = vmatprep.subr.bf16.mxu0 0
        %4047 = vmatpush1.bf16.msra.mxu0 %v3735
        %4048 = vmatprep.subr.bf16.mxu0 0
        %4049 = vmatpush1.bf16.msra.mxu0 %v3736
        %4050 = vmatprep.subr.bf16.mxu0 0
        %4051 = vmatpush1.bf16.msra.mxu0 %v3737
        %4052 = vmatprep.subr.bf16.mxu0 0
        %4053 = vmatpush1.bf16.msra.mxu0 %v3738
        %4054 = vmatprep.subr.bf16.mxu0 0
        %4055 = vmatpush1.bf16.msra.mxu0 %v3739
        %4056 = vmatprep.subr.bf16.mxu0 0
        %4057 = vmatpush1.bf16.msra.mxu0 %v3740
        %4058 = vmatprep.subr.bf16.mxu0 0
        %4059 = vmatpush1.bf16.msra.mxu0 %v3741
        %4060 = vmatprep.subr.bf16.mxu0 0
        %4061 = vmatpush1.bf16.msra.mxu0 %v3742
        %4062 = vmatprep.subr.bf16.mxu0 0
        %4063 = vmatpush1.bf16.msra.mxu0 %v3743
        %4064 = vmatprep.subr.bf16.mxu0 0
        %4065 = vmatpush1.bf16.msra.mxu0 %v3744
        %4066 = vmatprep.subr.bf16.mxu0 0
        %4067 = vmatpush1.bf16.msra.mxu0 %v3745
        %4068 = vmatprep.mubr.bf16.mxu0 %v2915
        %4069 = vmatmul.mubr.bf16.gmra.mrb[0].mxu0 %v2914
        %v4070 = vpop.f32.mrb[0].mxu0
        %v4071 = vadd.f32 %v4030, %v4070
        %v4072 = vpop.f32.mrb[0].mxu0
        %v4073 = vpop.f32.mrb[0].mxu0
        %v4074 = vadd.f32 %v4033, %v4073
        %v4075 = vpop.f32.mrb[0].mxu0
        %4076 = vdwg.mxu0
        %4077 = vmatprep.subr.bf16.mxu0 0
        %4078 = vmatpush1.bf16.msra.mxu0 %v3746
        %4079 = vmatprep.subr.bf16.mxu0 0
        %4080 = vmatpush1.bf16.msra.mxu0 %v3747
        %4081 = vmatprep.subr.bf16.mxu0 0
        %4082 = vmatpush1.bf16.msra.mxu0 %v3748
        %4083 = vmatprep.subr.bf16.mxu0 0
        %4084 = vmatpush1.bf16.msra.mxu0 %v3749
        %4085 = vmatprep.subr.bf16.mxu0 0
        %4086 = vmatpush1.bf16.msra.mxu0 %v3750
        %4087 = vmatprep.subr.bf16.mxu0 0
        %4088 = vmatpush1.bf16.msra.mxu0 %v3751
        %4089 = vmatprep.subr.bf16.mxu0 0
        %4090 = vmatpush1.bf16.msra.mxu0 %v3752
        %4091 = vmatprep.subr.bf16.mxu0 0
        %4092 = vmatpush1.bf16.msra.mxu0 %v3753
        %4093 = vmatprep.subr.bf16.mxu0 0
        %4094 = vmatpush1.bf16.msra.mxu0 %v3754
        %4095 = vmatprep.subr.bf16.mxu0 0
        %4096 = vmatpush1.bf16.msra.mxu0 %v3755
        %4097 = vmatprep.subr.bf16.mxu0 0
        %4098 = vmatpush1.bf16.msra.mxu0 %v3756
        %4099 = vmatprep.subr.bf16.mxu0 0
        %4100 = vmatpush1.bf16.msra.mxu0 %v3757
        %4101 = vmatprep.subr.bf16.mxu0 0
        %4102 = vmatpush1.bf16.msra.mxu0 %v3758
        %4103 = vmatprep.subr.bf16.mxu0 0
        %4104 = vmatpush1.bf16.msra.mxu0 %v3759
        %4105 = vmatprep.subr.bf16.mxu0 0
        %4106 = vmatpush1.bf16.msra.mxu0 %v3760
        %4107 = vmatprep.subr.bf16.mxu0 0
        %4108 = vmatpush1.bf16.msra.mxu0 %v3761
        %4109 = vmatprep.mubr.bf16.mxu0 %v2917
        %4110 = vmatmul.mubr.bf16.gmra.mrb[0].mxu0 %v2916
        %v4111 = vpop.f32.mrb[0].mxu0
        %v4112 = vadd.f32 %v4071, %v4111
        %v4113 = vpop.f32.mrb[0].mxu0
        %v4114 = vpop.f32.mrb[0].mxu0
        %v4115 = vadd.f32 %v4074, %v4114
        %v4116 = vpop.f32.mrb[0].mxu0
        %4117 = vdwg.mxu0
        %4118 = vmatprep.subr.bf16.mxu0 0
        %4119 = vmatpush1.bf16.msra.mxu0 %v3762
        %4120 = vmatprep.subr.bf16.mxu0 0
        %4121 = vmatpush1.bf16.msra.mxu0 %v3763
        %4122 = vmatprep.subr.bf16.mxu0 0
        %4123 = vmatpush1.bf16.msra.mxu0 %v3764
        %4124 = vmatprep.subr.bf16.mxu0 0
        %4125 = vmatpush1.bf16.msra.mxu0 %v3765
        %4126 = vmatprep.subr.bf16.mxu0 0
        %4127 = vmatpush1.bf16.msra.mxu0 %v3766
        %4128 = vmatprep.subr.bf16.mxu0 0
        %4129 = vmatpush1.bf16.msra.mxu0 %v3767
        %4130 = vmatprep.subr.bf16.mxu0 0
        %4131 = vmatpush1.bf16.msra.mxu0 %v3768
        %4132 = vmatprep.subr.bf16.mxu0 0
        %4133 = vmatpush1.bf16.msra.mxu0 %v3769
        %4134 = vmatprep.subr.bf16.mxu0 0
        %4135 = vmatpush1.bf16.msra.mxu0 %v3770
        %4136 = vmatprep.subr.bf16.mxu0 0
        %4137 = vmatpush1.bf16.msra.mxu0 %v3771
        %4138 = vmatprep.subr.bf16.mxu0 0
        %4139 = vmatpush1.bf16.msra.mxu0 %v3772
        %4140 = vmatprep.subr.bf16.mxu0 0
        %4141 = vmatpush1.bf16.msra.mxu0 %v3773
        %4142 = vmatprep.subr.bf16.mxu0 0
        %4143 = vmatpush1.bf16.msra.mxu0 %v3774
        %4144 = vmatprep.subr.bf16.mxu0 0
        %4145 = vmatpush1.bf16.msra.mxu0 %v3775
        %4146 = vmatprep.subr.bf16.mxu0 0
        %4147 = vmatpush1.bf16.msra.mxu0 %v3776
        %4148 = vmatprep.subr.bf16.mxu0 0
        %4149 = vmatpush1.bf16.msra.mxu0 %v3777
        %4150 = vmatprep.mubr.bf16.mxu0 %v2919
        %4151 = vmatmul.mubr.bf16.gmra.mrb[0].mxu0 %v2918
        %v4152 = vpop.f32.mrb[0].mxu0
        %v4153 = vadd.f32 %v4112, %v4152
        %v4154 = vpop.f32.mrb[0].mxu0
        %v4155 = vpop.f32.mrb[0].mxu0
        %v4156 = vadd.f32 %v4115, %v4155
        %v4157 = vpop.f32.mrb[0].mxu0
        %4158 = vdwg.mxu0
        %4159 = vmatprep.subr.bf16.mxu0 0
        %4160 = vmatpush1.bf16.msra.mxu0 %v3778
        %4161 = vmatprep.subr.bf16.mxu0 0
        %4162 = vmatpush1.bf16.msra.mxu0 %v3779
        %4163 = vmatprep.subr.bf16.mxu0 0
        %4164 = vmatpush1.bf16.msra.mxu0 %v3780
        %4165 = vmatprep.subr.bf16.mxu0 0
        %4166 = vmatpush1.bf16.msra.mxu0 %v3781
        %4167 = vmatprep.subr.bf16.mxu0 0
        %4168 = vmatpush1.bf16.msra.mxu0 %v3782
        %4169 = vmatprep.subr.bf16.mxu0 0
        %4170 = vmatpush1.bf16.msra.mxu0 %v3783
        %4171 = vmatprep.subr.bf16.mxu0 0
        %4172 = vmatpush1.bf16.msra.mxu0 %v3784
        %4173 = vmatprep.subr.bf16.mxu0 0
        %4174 = vmatpush1.bf16.msra.mxu0 %v3785
        %4175 = vmatprep.subr.bf16.mxu0 0
        %4176 = vmatpush1.bf16.msra.mxu0 %v3786
        %4177 = vmatprep.subr.bf16.mxu0 0
        %4178 = vmatpush1.bf16.msra.mxu0 %v3787
        %4179 = vmatprep.subr.bf16.mxu0 0
        %4180 = vmatpush1.bf16.msra.mxu0 %v3788
        %4181 = vmatprep.subr.bf16.mxu0 0
        %4182 = vmatpush1.bf16.msra.mxu0 %v3789
        %4183 = vmatprep.subr.bf16.mxu0 0
        %4184 = vmatpush1.bf16.msra.mxu0 %v3790
        %4185 = vmatprep.subr.bf16.mxu0 0
        %4186 = vmatpush1.bf16.msra.mxu0 %v3791
        %4187 = vmatprep.subr.bf16.mxu0 0
        %4188 = vmatpush1.bf16.msra.mxu0 %v3792
        %4189 = vmatprep.subr.bf16.mxu0 0
        %4190 = vmatpush1.bf16.msra.mxu0 %v3793
        %4191 = vmatprep.mubr.bf16.mxu0 %v2921
        %4192 = vmatmul.mubr.bf16.gmra.mrb[0].mxu0 %v2920
        %v4193 = vpop.f32.mrb[0].mxu0
        %v4194 = vadd.f32 %v4153, %v4193
        %v4195 = vpop.f32.mrb[0].mxu0
        %v4196 = vpop.f32.mrb[0].mxu0
        %v4197 = vadd.f32 %v4156, %v4196
        %v4198 = vpop.f32.mrb[0].mxu0
        %4199 = vdwg.mxu0
        %4200 = vmatprep.subr.bf16.mxu0 0
        %4201 = vmatpush1.bf16.msra.mxu0 %v3794
        %4202 = vmatprep.subr.bf16.mxu0 0
        %4203 = vmatpush1.bf16.msra.mxu0 %v3795
        %4204 = vmatprep.subr.bf16.mxu0 0
        %4205 = vmatpush1.bf16.msra.mxu0 %v3796
        %4206 = vmatprep.subr.bf16.mxu0 0
        %4207 = vmatpush1.bf16.msra.mxu0 %v3797
        %4208 = vmatprep.subr.bf16.mxu0 0
        %4209 = vmatpush1.bf16.msra.mxu0 %v3798
        %4210 = vmatprep.subr.bf16.mxu0 0
        %4211 = vmatpush1.bf16.msra.mxu0 %v3799
        %4212 = vmatprep.subr.bf16.mxu0 0
        %4213 = vmatpush1.bf16.msra.mxu0 %v3800
        %4214 = vmatprep.subr.bf16.mxu0 0
        %4215 = vmatpush1.bf16.msra.mxu0 %v3801
        %4216 = vmatprep.subr.bf16.mxu0 0
        %4217 = vmatpush1.bf16.msra.mxu0 %v3802
        %4218 = vmatprep.subr.bf16.mxu0 0
        %4219 = vmatpush1.bf16.msra.mxu0 %v3803
        %4220 = vmatprep.subr.bf16.mxu0 0
        %4221 = vmatpush1.bf16.msra.mxu0 %v3804
        %4222 = vmatprep.subr.bf16.mxu0 0
        %4223 = vmatpush1.bf16.msra.mxu0 %v3805
        %4224 = vmatprep.subr.bf16.mxu0 0
        %4225 = vmatpush1.bf16.msra.mxu0 %v3806
        %4226 = vmatprep.subr.bf16.mxu0 0
        %4227 = vmatpush1.bf16.msra.mxu0 %v3807
        %4228 = vmatprep.subr.bf16.mxu0 0
        %4229 = vmatpush1.bf16.msra.mxu0 %v3808
        %4230 = vmatprep.subr.bf16.mxu0 0
        %4231 = vmatpush1.bf16.msra.mxu0 %v3809
        %4232 = vmatprep.mubr.bf16.mxu0 %v2923
        %4233 = vmatmul.mubr.bf16.gmra.mrb[0].mxu0 %v2922
        %v4234 = vpop.f32.mrb[0].mxu0
        %v4235 = vadd.f32 %v4194, %v4234
        %v4236 = vpop.f32.mrb[0].mxu0
        %v4237 = vpop.f32.mrb[0].mxu0
        %v4238 = vadd.f32 %v4197, %v4237
        %v4239 = vpop.f32.mrb[0].mxu0
        %4240 = vdwg.mxu0
        %4241 = vmatprep.subr.bf16.mxu0 0
        %4242 = vmatpush1.bf16.msra.mxu0 %v3810
        %4243 = vmatprep.subr.bf16.mxu0 0
        %4244 = vmatpush1.bf16.msra.mxu0 %v3811
        %4245 = vmatprep.subr.bf16.mxu0 0
        %4246 = vmatpush1.bf16.msra.mxu0 %v3812
        %4247 = vmatprep.subr.bf16.mxu0 0
        %4248 = vmatpush1.bf16.msra.mxu0 %v3813
        %4249 = vmatprep.subr.bf16.mxu0 0
        %4250 = vmatpush1.bf16.msra.mxu0 %v3814
        %4251 = vmatprep.subr.bf16.mxu0 0
        %4252 = vmatpush1.bf16.msra.mxu0 %v3815
        %4253 = vmatprep.subr.bf16.mxu0 0
        %4254 = vmatpush1.bf16.msra.mxu0 %v3816
        %4255 = vmatprep.subr.bf16.mxu0 0
        %4256 = vmatpush1.bf16.msra.mxu0 %v3817
        %4257 = vmatprep.subr.bf16.mxu0 0
        %4258 = vmatpush1.bf16.msra.mxu0 %v3818
        %4259 = vmatprep.subr.bf16.mxu0 0
        %4260 = vmatpush1.bf16.msra.mxu0 %v3819
        %4261 = vmatprep.subr.bf16.mxu0 0
        %4262 = vmatpush1.bf16.msra.mxu0 %v3820
        %4263 = vmatprep.subr.bf16.mxu0 0
        %4264 = vmatpush1.bf16.msra.mxu0 %v3821
        %4265 = vmatprep.subr.bf16.mxu0 0
        %4266 = vmatpush1.bf16.msra.mxu0 %v3822
        %4267 = vmatprep.subr.bf16.mxu0 0
        %4268 = vmatpush1.bf16.msra.mxu0 %v3823
        %4269 = vmatprep.subr.bf16.mxu0 0
        %4270 = vmatpush1.bf16.msra.mxu0 %v3824
        %4271 = vmatprep.subr.bf16.mxu0 0
        %4272 = vmatpush1.bf16.msra.mxu0 %v3825
        %4273 = vmatprep.mubr.bf16.mxu0 %v2925
        %4274 = vmatmul.mubr.bf16.gmra.mrb[0].mxu0 %v2924
        %v4275 = vpop.f32.mrb[0].mxu0
        %v4276 = vadd.f32 %v4235, %v4275
        %v4277 = vpop.f32.mrb[0].mxu0
        %v4278 = vpop.f32.mrb[0].mxu0
        %v4279 = vadd.f32 %v4238, %v4278
        %v4280 = vpop.f32.mrb[0].mxu0
        %4281 = vdwg.mxu0
        %v4282 = vadd.f32 %v2252, %v4276
        %v4283 = vadd.f32 %v2253, %v4279
        %v4284 = vsel %vm629, %v4282, 0.0
        %4285 = vadd.xlane.f32.xlu0 %v4284
        %v4286 = vpop.xlane.xlu0 %4285
        %v4287 = vsel %vm629, %v4283, 0.0
        %4288 = vadd.xlane.f32.xlu0 %v4287
        %v4289 = vpop.xlane.xlu0 %4288
        %v4290 = vmul.f32 %v4282, %v4282
        %v4291 = vmul.f32 %v4283, %v4283
        %v4292 = vsel %vm629, %v4290, 0.0
        %4293 = vadd.xlane.f32.xlu0 %v4292
        %v4294 = vpop.xlane.xlu0 %4293
        %v4295 = vsel %vm629, %v4291, 0.0
        %4296 = vadd.xlane.f32.xlu0 %v4295
        %v4297 = vpop.xlane.xlu0 %4296
        %v4298 = vmul.f32 %v4286, 0.03125
        %v4299 = vmul.f32 %v4289, 0.03125
        %v4300 = vmul.f32 %v4294, 0.03125
        %v4301 = vmul.f32 %v4297, 0.03125
        %v4302 = vmul.f32 %v4298, %v4298
        %v4303 = vmul.f32 %v4299, %v4299
        %v4304 = vsub.f32 %v4300, %v4302
        %v4305 = vsub.f32 %v4301, %v4303
        %v4306 = vsub.f32 %v4282, %v4298
        %v4307 = vsub.f32 %v4283, %v4299
        %v4308 = vadd.f32 %v4304, 1e-05
        %v4309 = vadd.f32 %v4305, 1e-05
        %v4310 = vrsqrt.pop %v4308
        %v4311 = vrsqrt.pop %v4309
        %v4312 = vmul.f32 %v4306, %v4310
        %v4313 = vmul.f32 %v4307, %v4311
        %v4314 = vlaneseq
        %v4315 = vshrl.u32 %v4314, 7
        %v4316 = vsub.s32 7, %v4315
        %v4317 = vrot.slane %v606, %v4316
        %v4318 = vmul.f32 %v4312, %v4317
        %v4319 = vmul.f32 %v4313, %v4317
        %v4320 = vlaneseq
        %v4321 = vshrl.u32 %v4320, 7
        %v4322 = vsub.s32 0, %v4321
        %v4323 = vrot.slane %v607, %v4322
        %v4324 = vadd.f32 %v4318, %v4323
        %v4325 = vadd.f32 %v4319, %v4323
        %4326 = vst.msk [vmem:[#allocation2] sm:$0xff] %vm629, %v4324
        %4327 = vst.msk [vmem:[#allocation2 + $0x8] sm:$0xff] %vm629, %v4325
        %p4328 = scmp.eq.s32.totalorder %s29, 1
        // Predicated region
        $region65: #{tpu_custom_call.1} parent=59 // pred_check
          %p4329 = pneg %p4328
        $region66: #{tpu_custom_call.1} parent=59 // pred_check_branch
          %4331 = sbr.rel (%p4329) target = $region68
        $region67: #{tpu_custom_call.1} parent=59 // pred_region
          %v4332 = vpack.c.bf16 %v4325, %v4324
          %v4333 = vld [vmem:[%s8] sm:$0xf]
          %v4334 = vld [vmem:[%s8 + $0x4] sm:$0xf]
          %v4335 = vld [vmem:[%s8 + $0x8] sm:$0xf]
          %v4336 = vld [vmem:[%s8 + $0xc] sm:$0xf]
          %v4337 = vld [vmem:[%s9] sm:$0x1]
          %v4339 = vlaneseq
          %v4340 = vshrl.u32 %v4339, 7
          %v4341 = vsub.s32 0, %v4340
          %v4342 = vrot.slane %v4337, %v4341
          %v4348 = vunpack.c.l.b16 %v4333
          %v4349 = vunpack.c.l.b16 %v4334
          %v4350 = vunpack.c.l.b16 %v4335
          %v4351 = vunpack.c.l.b16 %v4336
          %v4352 = vpack.c.b16 %v4349, %v4348
          %v4353 = vpack.c.b16 %v4351, %v4350
          %v4357 = vsel %vm629, %v4332, 0
          %4359 = vmatprep.subr.bf16.mxu0 0
          %4360 = vmatpush1.bf16.msra.mxu0 %v4352
          %4361 = vmatprep.subr.bf16.mxu0 0
          %4362 = vmatpush1.bf16.msra.mxu0 %v4353
          %4363 = vmatprep.subr.bf16.mxu0 0
          %4364 = vmatpush1.bf16.msra.mxu0 0
          %4365 = vmatprep.subr.bf16.mxu0 0
          %4366 = vmatpush1.bf16.msra.mxu0 0
          %4367 = vmatprep.subr.bf16.mxu0 0
          %4368 = vmatpush1.bf16.msra.mxu0 0
          %4369 = vmatprep.subr.bf16.mxu0 0
          %4370 = vmatpush1.bf16.msra.mxu0 0
          %4371 = vmatprep.subr.bf16.mxu0 0
          %4372 = vmatpush1.bf16.msra.mxu0 0
          %4373 = vmatprep.subr.bf16.mxu0 0
          %4374 = vmatpush1.bf16.msra.mxu0 0
          %4375 = vmatprep.subr.bf16.mxu0 0
          %4376 = vmatpush1.bf16.msra.mxu0 0
          %4377 = vmatprep.subr.bf16.mxu0 0
          %4378 = vmatpush1.bf16.msra.mxu0 0
          %4379 = vmatprep.subr.bf16.mxu0 0
          %4380 = vmatpush1.bf16.msra.mxu0 0
          %4381 = vmatprep.subr.bf16.mxu0 0
          %4382 = vmatpush1.bf16.msra.mxu0 0
          %4383 = vmatprep.subr.bf16.mxu0 0
          %4384 = vmatpush1.bf16.msra.mxu0 0
          %4385 = vmatprep.subr.bf16.mxu0 0
          %4386 = vmatpush1.bf16.msra.mxu0 0
          %4387 = vmatprep.subr.bf16.mxu0 0
          %4388 = vmatpush1.bf16.msra.mxu0 0
          %4389 = vmatprep.subr.bf16.mxu0 0
          %4390 = vmatpush1.bf16.msra.mxu0 0
          %4391 = vmatprep.mubr.bf16.mxu0 0
          %4392 = vmatmul.mubr.bf16.gmra.mrb[0].mxu0 %v4357
          %v4393 = vpop.f32.mrb[0].mxu0
          %v4394 = vadd.f32 %v4342, %v4393
          %v4395 = vpop.f32.mrb[0].mxu0
          %v4396 = vpop.f32.mrb[0].mxu0
          %v4397 = vadd.f32 %v4342, %v4396
          %v4398 = vpop.f32.mrb[0].mxu0
          %4399 = vdwg.mxu0
          %4400 = vst.msk [vmem:[%s453] sm:$0xff] %vm629, %v4394
          %4401 = vst.msk [vmem:[%s453 + $0x8] sm:$0xff] %vm629, %v4397
        $region68: #{tpu_custom_call.1} parent=59 // pred_fallthru
          _
        %s4402 = sand.u32 %s289, 1
        %s4403 = scalar_lea.sflag [#allocation4], %s4402
        %s4404 = sand.u32 %s289, 1
        %s4405 = smul.addr %s4404, 16
        %s4406 = scalar_lea.vmem [#allocation3], %s4405
        // Predicated region
        $region69: #{tpu_custom_call.1} parent=59 // pred_check
          %p4407 = pneg %p299
        $region70: #{tpu_custom_call.1} parent=59 // pred_check_branch
          %4409 = sbr.rel (%p4407) target = $region72
        $region71: #{tpu_custom_call.1} parent=59 // pred_region
          %s4410 = smul.u32 2, %s28
          %s4412 = ssub.s32 256, 256
          %4413 = vsyncadd %s4403, %s4412
          %s4414 = smul.addr %s4410, 128
          %s4415 = scalar_lea.hbm %s10, %s4414
          %s4416 = sshll.u32 %s4406, 4
          %s4417 = int_to_ptr.vmem [resolvable:$true] %s4416
          %4422 = dma.vmem_to_hbm [thread:$0]  %s4417, 256, %s4415, %s4403, 128, 128, 8
        $region72: #{tpu_custom_call.1} parent=59 // pred_fallthru
          _
      $region60: #{tpu_custom_call.1} parent=5 // pred_fallthru
        _
      %p4423 = scmp.le.s32.totalorder 2, %s19
      // Predicated region
      $region73: #{tpu_custom_call.1} parent=5 // pred_check
        %p4424 = pneg %p4423
      $region74: #{tpu_custom_call.1} parent=5 // pred_check_branch
        %4426 = sbr.rel (%p4424) target = $region76
      $region75: #{tpu_custom_call.1} parent=5 // pred_region
        %s4427 = ssub.s32 %s19, 2
        // Predicated region
        $region77: #{tpu_custom_call.1} parent=75 // pred_check
          %p4428 = pneg %p305
        $region78: #{tpu_custom_call.1} parent=75 // pred_check_branch
          %4430 = sbr.rel (%p4428) target = $region80
        $region79: #{tpu_custom_call.1} parent=75 // pred_region
          %s4431 = sand.u32 %s290, 1
          %s4432 = scalar_lea.sflag [#allocation4], %s4431
          %s4433 = sand.u32 %s290, 1
          %s4434 = smul.addr %s4433, 16
          %s4435 = scalar_lea.vmem [#allocation3], %s4434
          %4436 = dma.done %s4432, 256
        $region80: #{tpu_custom_call.1} parent=75 // pred_fallthru
          _
      $region76: #{tpu_custom_call.1} parent=5 // pred_fallthru
        _
    $region6: #{tpu_custom_call.1} parent=1 // loop_footer
      %s23 = sadd.s32 1, %s19
    $region7: #{tpu_custom_call.1} parent=1 // loop_footer_branch
      %18 = sbr.rel target = $region3
    $region8: #{tpu_custom_call.1} parent=1 // loop_exit
      _
    %4437 = vsyncpa [#allocation4], 1
    %s4438 = scalar_lea.sflag [#allocation4], 1
    %4439 = vsyncpa %s4438, 1

</llo_original>
